<compile_context>
chip_gen: v6e
topology: v6e:2x2x1
jax: 0.10.0
libtpu: 0.0.40
codegen_flags: <defaults>
</compile_context>

<pallas_src>
import jax
import jax.numpy as jnp
from jax import lax
from jax.experimental import pallas as pl
from jax.experimental.pallas import tpu as pltpu


# ----------------------------------------------------------------------------
# In-kernel building block: Conv1d(k=3,p=1) + folded-BN bias + ReLU + MaxPool(2,2)
# ----------------------------------------------------------------------------
def _conv_block(src_ref, w_ref, b_ref, dst_ref=None):
    """src_ref : (Lc+2, TN, Cin) bf16, zero halo rows at 0 and Lc+1 (length-major)
    w_ref   : (Cin, 3*Cout)    bf16, [W0|W1|W2] with BN scale folded in
    b_ref   : (1, Cout)        f32,  folded conv-bias + BN bias
    dst_ref : (Lc//2+2, TN, Cout) bf16 scratch of the NEXT layer, or None.

    Writes the pooled output into dst_ref rows [1:Lc//2+1] (and zeroes its halo
    rows), or returns the pooled f32 value when dst_ref is None (last layer).
    """
    Lp, TN, Cin = src_ref.shape
    Lc = Lp - 2
    C3 = w_ref.shape[1]
    C = C3 // 3

    # One wide MXU matmul over the whole padded buffer (free view: TN == 16).
    z = jnp.dot(src_ref[...].reshape(Lp * TN, Cin), w_ref[...],
                preferred_element_type=jnp.float32).reshape(Lp, TN, C3)

    # Combine the 3 taps: leading-dim slices are free, lane slices are cheap
    # XLU/VPU selects.  acc[l] = z[l,0:C] + z[l+1,C:2C] + z[l+2,2C:3C].
    acc = (z[0:Lc, :, 0:C]
           + z[1:Lc + 1, :, C:2 * C]
           + z[2:Lp, :, 2 * C:C3])                       # (Lc, TN, C) f32

    # Folded conv-bias + BatchNorm(eval) bias, then ReLU.
    y = jnp.maximum(acc + b_ref[...], 0.0)

    # MaxPool1d(2,2): leading-dim split is a free view, max is pure VPU.
    y = y.reshape(Lc // 2, 2, TN, C)
    pooled = jnp.maximum(y[:, 0], y[:, 1])               # (Lc//2, TN, C) f32

    if dst_ref is None:
        return pooled

    Lh = Lc // 2
    dst_ref[1:Lh + 1, :, :] = pooled.astype(dst_ref.dtype)
    # Halo rows rewritten every step: trivially cheap and safe under megacore
    # grid sharding (no reliance on program_id==0 running on every core).
    dst_ref[0:1, :, :] = jnp.zeros((1, TN, C), dst_ref.dtype)
    dst_ref[Lh + 1:Lh + 2, :, :] = jnp.zeros((1, TN, C), dst_ref.dtype)
    return None


def _flatten_lane_dense(h):
    """(L4, TN, C) -> (TN, L4*C) via a pure lane concatenation (no sublane
    movement): column l*C + c holds h[l, n, c]."""
    L4 = h.shape[0]
    return jnp.concatenate([h[l] for l in range(L4)], axis=-1)


def _make_kernel(with_fc):
    if with_fc:
        def kernel(x_ref,
                   w1, b1, w2, b2, w3, b3, w4, b4,
                   fcw_ref, fcb_ref,
                   o_ref,
                   pad2, pad3, pad4):
            _conv_block(x_ref, w1, b1, pad2)     # layer 1 (input already haloed)
            _conv_block(pad2, w2, b2, pad3)      # layer 2
            _conv_block(pad3, w3, b3, pad4)      # layer 3
            h = _conv_block(pad4, w4, b4)        # layer 4 -> (L4, TN, C) f32
            ht = _flatten_lane_dense(h)          # (TN, L4*C)
            out = jnp.dot(ht.astype(fcw_ref.dtype), fcw_ref[...],
                          preferred_element_type=jnp.float32)
            o_ref[...] = (out + fcb_ref[...]).astype(o_ref.dtype)
        return kernel

    def kernel(x_ref,
               w1, b1, w2, b2, w3, b3, w4, b4,
               o_ref,
               pad2, pad3, pad4):
        _conv_block(x_ref, w1, b1, pad2)
        _conv_block(pad2, w2, b2, pad3)
        _conv_block(pad3, w3, b3, pad4)
        h = _conv_block(pad4, w4, b4)
        # Lane-dense full-width stores; torch flatten order fixed in the wrapper.
        o_ref[...] = _flatten_lane_dense(h).astype(o_ref.dtype)
    return kernel


# ----------------------------------------------------------------------------
# Wrapper: layout, BN folding, weight packing, batch tiling
# ----------------------------------------------------------------------------
def classifier_forward(x_ncl, params, eps=1e-5):
    """x_ncl: (N, C_in, L) exactly like the PyTorch module."""
    N, C0, L = x_ncl.shape
    assert L % 16 == 0, "signal_length must be divisible by 16 (4x MaxPool(2,2))"
    C = params["layers"][0]["w"].shape[0]                 # layer_size
    L4 = L // 16

    TN = 16                                               # bf16 sublane tile
    Np = ((N + TN - 1) // TN) * TN
    G = Np // TN

    # NCL -> length-major, add the SAME-padding halo once here, pre-tile the
    # batch so every grid step's input block is ONE contiguous linear DMA.
    x = jnp.transpose(x_ncl, (2, 0, 1)).astype(jnp.bfloat16)     # (L, N, C0)
    x = jnp.pad(x, ((1, 1), (0, Np - N), (0, 0)))                # (L+2, Np, C0)
    x = x.reshape(L + 2, G, TN, C0).transpose(1, 0, 2, 3)        # (G, L+2, TN, C0)

    layer_args = []
    in_specs = [pl.BlockSpec((None, L + 2, TN, C0), lambda i: (i, 0, 0, 0))]
    for p in params["layers"]:
        w = p["w"].astype(jnp.float32)                   # torch (Cout, Cin, 3)
        cout, cin, _ = w.shape
        s = p["gamma"] / jnp.sqrt(p["run_var"] + eps)    # BN scale
        b = ((p["conv_b"] - p["run_mean"]) * s + p["beta"]).astype(jnp.float32)
        # W_k[c, j] = w[j, c, k] * s[j]; concat taps on the output dim.
        wk = jnp.transpose(w, (2, 1, 0)) * s[None, None, :]      # (3, Cin, Cout)
        wcat = jnp.concatenate([wk[0], wk[1], wk[2]], axis=1).astype(jnp.bfloat16)
        layer_args += [wcat, b.reshape(1, cout)]
        in_specs += [pl.BlockSpec((cin, 3 * cout), lambda i: (0, 0)),
                     pl.BlockSpec((1, cout), lambda i: (0, 0))]

    scratch = [pltpu.VMEM((L // 2 + 2, TN, C), jnp.bfloat16),
               pltpu.VMEM((L // 4 + 2, TN, C), jnp.bfloat16),
               pltpu.VMEM((L // 8 + 2, TN, C), jnp.bfloat16)]
    cparams = pltpu.CompilerParams(
        dimension_semantics=("parallel",),
        vmem_limit_bytes=48 * 1024 * 1024,
    )
    grid = (G,)

    if params["fc"] is not None:
        fc_w, fc_b = params["fc"]                        # torch: (nc, C*L4)
        nc = fc_w.shape[0]
        # Row l*C + c of fcw matches column l*C + c of the in-kernel lane-dense
        # flatten, i.e. fcw[l*C + c, j] = fc_w[j, c*L4 + l]  (torch view order).
        fcw = (fc_w.reshape(nc, C, L4).transpose(2, 1, 0)
               .reshape(L4 * C, nc).astype(jnp.bfloat16))
        fcb = fc_b.reshape(1, nc).astype(jnp.float32)
        in_specs += [pl.BlockSpec((L4 * C, nc), lambda i: (0, 0)),
                     pl.BlockSpec((1, nc), lambda i: (0, 0))]
        out = pl.pallas_call(
            _make_kernel(with_fc=True),
            out_shape=jax.ShapeDtypeStruct((Np, nc), jnp.float32),
            grid=grid,
            in_specs=in_specs,
            out_specs=pl.BlockSpec((TN, nc), lambda i: (i, 0)),
            scratch_shapes=scratch,
            compiler_params=cparams,
        )(x, *layer_args, fcw, fcb)
        return out[:N]

    # Embedding-only path: kernel emits lane-dense (TN, L4*C) rows in (l, c)
    # order; a tiny wrapper reshuffle restores torch's (c, l) flatten order.
    out = pl.pallas_call(
        _make_kernel(with_fc=False),
        out_shape=jax.ShapeDtypeStruct((Np, L4 * C), jnp.float32),
        grid=grid,
        in_specs=in_specs,
        out_specs=pl.BlockSpec((TN, L4 * C), lambda i: (i, 0)),
        scratch_shapes=scratch,
        compiler_params=cparams,
    )(x, *layer_args)
    return out.reshape(Np, L4, C).transpose(0, 2, 1).reshape(Np, C * L4)[:N]


# ----------------------------------------------------------------------------
# Pure-JAX f32 reference (mirrors the PyTorch module) for a correctness check.
# ----------------------------------------------------------------------------
def reference_forward(x_ncl, params, eps=1e-5):
    h = x_ncl.astype(jnp.float32)
    for p in params["layers"]:
        y = lax.conv_general_dilated(h, p["w"], (1,), [(1, 1)],
                                     dimension_numbers=("NCH", "OIH", "NCH"))
        y = y + p["conv_b"][None, :, None]
        s = p["gamma"] / jnp.sqrt(p["run_var"] + eps)
        y = (y - p["run_mean"][None, :, None]) * s[None, :, None] + p["beta"][None, :, None]
        y = jnp.maximum(y, 0.0)
        n_, c_, l_ = y.shape
        h = y.reshape(n_, c_, l_ // 2, 2).max(-1)
    feat = h.reshape(h.shape[0], -1)
    if params["fc"] is not None:
        fw, fb = params["fc"]
        feat = feat @ fw.T + fb
    return feat


# ----------------------------------------------------------------------------
# Deterministic parameter init (mirrors module __init__ shapes)
# ----------------------------------------------------------------------------
def init_params(key, layer_size, num_channels, n_classes, signal_length):
    # TODO(synk): BatchNorm1d is implemented in eval mode (running stats folded
    # into the conv); training-mode batch statistics and Dropout(p=0.1)
    # (use_dropout defaults to False) are not implemented in-kernel.
    params = {"layers": []}
    cin = num_channels
    for _ in range(4):
        key, k1, k2 = jax.random.split(key, 3)
        fan_in = cin * 3
        bound = 1.0 / (fan_in ** 0.5)
        w = jax.random.uniform(k1, (layer_size, cin, 3), jnp.float32, -bound, bound)
        conv_b = jax.random.uniform(k2, (layer_size,), jnp.float32, -bound, bound)
        params["layers"].append(dict(
            w=w, conv_b=conv_b,
            gamma=jnp.ones((layer_size,), jnp.float32),
            beta=jnp.zeros((layer_size,), jnp.float32),
            run_mean=jnp.zeros((layer_size,), jnp.float32),
            run_var=jnp.ones((layer_size,), jnp.float32),
        ))
        cin = layer_size

    final_length = signal_length // 16
    out_size = final_length * layer_size
    if n_classes > 0:
        key, k1, k2 = jax.random.split(key, 3)
        bound = 1.0 / (out_size ** 0.5)
        fc_w = jax.random.uniform(k1, (n_classes, out_size), jnp.float32, -bound, bound)
        fc_b = jax.random.uniform(k2, (n_classes,), jnp.float32, -bound, bound)
        params["fc"] = (fc_w, fc_b)
    else:
        params["fc"] = None
    return params


# ----------------------------------------------------------------------------
if __name__ == "__main__":
    batch = 32             # 2 batch tiles of 16 -> exercises the pipelined grid
    num_channels = 2
    layer_size = 32
    signal_length = 64     # small stand-in for the default 2048
    n_classes = 8

    key = jax.random.PRNGKey(0)
    kx, kp = jax.random.split(key)
    x = jax.random.normal(kx, (batch, num_channels, signal_length), jnp.float32)
    params = init_params(kp, layer_size, num_channels, n_classes, signal_length)

    out = classifier_forward(x, params)
    out = jax.block_until_ready(out)
    assert out.shape == (batch, n_classes), out.shape
    assert bool(jnp.all(jnp.isfinite(out)))

    # Correctness vs. the f32 reference (bf16 activations/weights => loose tol).
    ref = reference_forward(x, params)
    err = float(jnp.max(jnp.abs(out - ref)))
    scale = float(jnp.max(jnp.abs(ref))) + 1e-6
    assert err <= 5e-2 * scale + 1e-2, (err, scale)

    print("KERNEL_OK")
</pallas_src>

<mosaic_0001>
module attributes {stable_mosaic.version = 11 : i64} {
  func.func @kernel(%arg0: i32, %arg1: memref<1x66x16x2xbf16, #tpu.memory_space<vmem>>, %arg2: memref<2x96xbf16, #tpu.memory_space<vmem>>, %arg3: memref<1x32xf32, #tpu.memory_space<vmem>>, %arg4: memref<32x96xbf16, #tpu.memory_space<vmem>>, %arg5: memref<1x32xf32, #tpu.memory_space<vmem>>, %arg6: memref<32x96xbf16, #tpu.memory_space<vmem>>, %arg7: memref<1x32xf32, #tpu.memory_space<vmem>>, %arg8: memref<32x96xbf16, #tpu.memory_space<vmem>>, %arg9: memref<1x32xf32, #tpu.memory_space<vmem>>, %arg10: memref<128x8xbf16, #tpu.memory_space<vmem>>, %arg11: memref<1x8xf32, #tpu.memory_space<vmem>>, %arg12: memref<16x8xf32, #tpu.memory_space<vmem>>, %arg13: memref<34x16x32xbf16, #tpu.memory_space<vmem>>, %arg14: memref<18x16x32xbf16, #tpu.memory_space<vmem>>, %arg15: memref<10x16x32xbf16, #tpu.memory_space<vmem>>) attributes {dimension_semantics = [#tpu.dimension_semantics<parallel>], iteration_bounds = array<i64: 2>, scalar_prefetch = 0 : i64, scratch_operands = 3 : i64, tpu.core_type = #tpu.core_type<tc>, window_params = [{transform_indices = @transform_0, window_bounds = array<i64: 1, 66, 16, 2>}, {pipeline_mode = #tpu.pipeline_mode<synchronous>, transform_indices = @transform_1, window_bounds = array<i64: 2, 96>}, {pipeline_mode = #tpu.pipeline_mode<synchronous>, transform_indices = @transform_2, window_bounds = array<i64: 1, 32>}, {pipeline_mode = #tpu.pipeline_mode<synchronous>, transform_indices = @transform_3, window_bounds = array<i64: 32, 96>}, {pipeline_mode = #tpu.pipeline_mode<synchronous>, transform_indices = @transform_4, window_bounds = array<i64: 1, 32>}, {pipeline_mode = #tpu.pipeline_mode<synchronous>, transform_indices = @transform_5, window_bounds = array<i64: 32, 96>}, {pipeline_mode = #tpu.pipeline_mode<synchronous>, transform_indices = @transform_6, window_bounds = array<i64: 1, 32>}, {pipeline_mode = #tpu.pipeline_mode<synchronous>, transform_indices = @transform_7, window_bounds = array<i64: 32, 96>}, {pipeline_mode = #tpu.pipeline_mode<synchronous>, transform_indices = @transform_8, window_bounds = array<i64: 1, 32>}, {pipeline_mode = #tpu.pipeline_mode<synchronous>, transform_indices = @transform_9, window_bounds = array<i64: 128, 8>}, {pipeline_mode = #tpu.pipeline_mode<synchronous>, transform_indices = @transform_10, window_bounds = array<i64: 1, 8>}, {transform_indices = @transform_11, window_bounds = array<i64: 16, 8>}]} {
    %c0 = arith.constant 0 : index
    %c0_0 = arith.constant 0 : index
    %c0_1 = arith.constant 0 : index
    %c0_2 = arith.constant 0 : index
    %0 = vector.load %arg1[%c0, %c0_0, %c0_1, %c0_2] : memref<1x66x16x2xbf16, #tpu.memory_space<vmem>>, vector<1x66x16x2xbf16>
    %1 = vector.shape_cast %0 : vector<1x66x16x2xbf16> to vector<66x16x2xbf16>
    %2 = vector.shape_cast %1 : vector<66x16x2xbf16> to vector<1056x2xbf16>
    %c0_3 = arith.constant 0 : index
    %c0_4 = arith.constant 0 : index
    %3 = vector.load %arg2[%c0_3, %c0_4] : memref<2x96xbf16, #tpu.memory_space<vmem>>, vector<2x96xbf16>
    %cst = arith.constant dense<0.000000e+00> : vector<1056x96xf32>
    %4 = tpu.matmul %2, %3, %cst {dimension_numbers = #tpu.dot_dimension_numbers<[1], [0], [0], [1], [0, 0, 1, 1], [], []>} : vector<1056x2xbf16>, vector<2x96xbf16>, vector<1056x96xf32> -> vector<1056x96xf32>
    %5 = vector.shape_cast %4 : vector<1056x96xf32> to vector<66x16x96xf32>
    %6 = vector.extract_strided_slice %5 {offsets = [0, 0, 0], sizes = [64, 16, 32], strides = [1, 1, 1]} : vector<66x16x96xf32> to vector<64x16x32xf32>
    %7 = vector.extract_strided_slice %5 {offsets = [1, 0, 32], sizes = [64, 16, 32], strides = [1, 1, 1]} : vector<66x16x96xf32> to vector<64x16x32xf32>
    %8 = arith.addf %6, %7 : vector<64x16x32xf32>
    %9 = vector.extract_strided_slice %5 {offsets = [2, 0, 64], sizes = [64, 16, 32], strides = [1, 1, 1]} : vector<66x16x96xf32> to vector<64x16x32xf32>
    %10 = arith.addf %8, %9 : vector<64x16x32xf32>
    %c0_5 = arith.constant 0 : index
    %c0_6 = arith.constant 0 : index
    %11 = vector.load %arg3[%c0_5, %c0_6] : memref<1x32xf32, #tpu.memory_space<vmem>>, vector<1x32xf32>
    %12 = vector.shape_cast %11 : vector<1x32xf32> to vector<1x1x32xf32>
    %13 = vector.broadcast %12 : vector<1x1x32xf32> to vector<64x16x32xf32>
    %14 = arith.addf %10, %13 : vector<64x16x32xf32>
    %cst_7 = arith.constant 0.000000e+00 : f32
    %15 = vector.broadcast %cst_7 : f32 to vector<64x16x32xf32>
    %16 = arith.maximumf %14, %15 : vector<64x16x32xf32>
    %17 = vector.shape_cast %16 : vector<64x16x32xf32> to vector<32x2x16x32xf32>
    %18 = vector.extract_strided_slice %17 {offsets = [0, 0, 0, 0], sizes = [32, 1, 16, 32], strides = [1, 1, 1, 1]} : vector<32x2x16x32xf32> to vector<32x1x16x32xf32>
    %19 = vector.shape_cast %18 : vector<32x1x16x32xf32> to vector<32x16x32xf32>
    %20 = vector.extract_strided_slice %17 {offsets = [0, 1, 0, 0], sizes = [32, 1, 16, 32], strides = [1, 1, 1, 1]} : vector<32x2x16x32xf32> to vector<32x1x16x32xf32>
    %21 = vector.shape_cast %20 : vector<32x1x16x32xf32> to vector<32x16x32xf32>
    %22 = arith.maximumf %19, %21 : vector<32x16x32xf32>
    %23 = arith.truncf %22 : vector<32x16x32xf32> to vector<32x16x32xbf16>
    %c1 = arith.constant 1 : index
    %c0_8 = arith.constant 0 : index
    %c0_9 = arith.constant 0 : index
    %24 = vector.load %arg13[%c1, %c0_8, %c0_9] : memref<34x16x32xbf16, #tpu.memory_space<vmem>>, vector<32x16x32xbf16>
    tpu.vector_store %arg13[%c1, %c0_8, %c0_9], %23 {strides = array<i32>} : memref<34x16x32xbf16, #tpu.memory_space<vmem>>, vector<32x16x32xbf16>,
    %cst_10 = arith.constant 0.000000e+00 : bf16
    %25 = vector.broadcast %cst_10 : bf16 to vector<1x16x32xbf16>
    %c0_11 = arith.constant 0 : index
    %c0_12 = arith.constant 0 : index
    %c0_13 = arith.constant 0 : index
    %26 = vector.load %arg13[%c0_11, %c0_12, %c0_13] : memref<34x16x32xbf16, #tpu.memory_space<vmem>>, vector<1x16x32xbf16>
    tpu.vector_store %arg13[%c0_11, %c0_12, %c0_13], %25 {strides = array<i32>} : memref<34x16x32xbf16, #tpu.memory_space<vmem>>, vector<1x16x32xbf16>,
    %cst_14 = arith.constant 0.000000e+00 : bf16
    %27 = vector.broadcast %cst_14 : bf16 to vector<1x16x32xbf16>
    %c33 = arith.constant 33 : index
    %c0_15 = arith.constant 0 : index
    %c0_16 = arith.constant 0 : index
    %28 = vector.load %arg13[%c33, %c0_15, %c0_16] : memref<34x16x32xbf16, #tpu.memory_space<vmem>>, vector<1x16x32xbf16>
    tpu.vector_store %arg13[%c33, %c0_15, %c0_16], %27 {strides = array<i32>} : memref<34x16x32xbf16, #tpu.memory_space<vmem>>, vector<1x16x32xbf16>,
    %c0_17 = arith.constant 0 : index
    %c0_18 = arith.constant 0 : index
    %c0_19 = arith.constant 0 : index
    %29 = vector.load %arg13[%c0_17, %c0_18, %c0_19] : memref<34x16x32xbf16, #tpu.memory_space<vmem>>, vector<34x16x32xbf16>
    %30 = vector.shape_cast %29 : vector<34x16x32xbf16> to vector<544x32xbf16>
    %c0_20 = arith.constant 0 : index
    %c0_21 = arith.constant 0 : index
    %31 = vector.load %arg4[%c0_20, %c0_21] : memref<32x96xbf16, #tpu.memory_space<vmem>>, vector<32x96xbf16>
    %cst_22 = arith.constant dense<0.000000e+00> : vector<544x96xf32>
    %32 = tpu.matmul %30, %31, %cst_22 {dimension_numbers = #tpu.dot_dimension_numbers<[1], [0], [0], [1], [0, 0, 1, 1], [], []>} : vector<544x32xbf16>, vector<32x96xbf16>, vector<544x96xf32> -> vector<544x96xf32>
    %33 = vector.shape_cast %32 : vector<544x96xf32> to vector<34x16x96xf32>
    %34 = vector.extract_strided_slice %33 {offsets = [0, 0, 0], sizes = [32, 16, 32], strides = [1, 1, 1]} : vector<34x16x96xf32> to vector<32x16x32xf32>
    %35 = vector.extract_strided_slice %33 {offsets = [1, 0, 32], sizes = [32, 16, 32], strides = [1, 1, 1]} : vector<34x16x96xf32> to vector<32x16x32xf32>
    %36 = arith.addf %34, %35 : vector<32x16x32xf32>
    %37 = vector.extract_strided_slice %33 {offsets = [2, 0, 64], sizes = [32, 16, 32], strides = [1, 1, 1]} : vector<34x16x96xf32> to vector<32x16x32xf32>
    %38 = arith.addf %36, %37 : vector<32x16x32xf32>
    %c0_23 = arith.constant 0 : index
    %c0_24 = arith.constant 0 : index
    %39 = vector.load %arg5[%c0_23, %c0_24] : memref<1x32xf32, #tpu.memory_space<vmem>>, vector<1x32xf32>
    %40 = vector.shape_cast %39 : vector<1x32xf32> to vector<1x1x32xf32>
    %41 = vector.broadcast %40 : vector<1x1x32xf32> to vector<32x16x32xf32>
    %42 = arith.addf %38, %41 : vector<32x16x32xf32>
    %cst_25 = arith.constant 0.000000e+00 : f32
    %43 = vector.broadcast %cst_25 : f32 to vector<32x16x32xf32>
    %44 = arith.maximumf %42, %43 : vector<32x16x32xf32>
    %45 = vector.shape_cast %44 : vector<32x16x32xf32> to vector<16x2x16x32xf32>
    %46 = vector.extract_strided_slice %45 {offsets = [0, 0, 0, 0], sizes = [16, 1, 16, 32], strides = [1, 1, 1, 1]} : vector<16x2x16x32xf32> to vector<16x1x16x32xf32>
    %47 = vector.shape_cast %46 : vector<16x1x16x32xf32> to vector<16x16x32xf32>
    %48 = vector.extract_strided_slice %45 {offsets = [0, 1, 0, 0], sizes = [16, 1, 16, 32], strides = [1, 1, 1, 1]} : vector<16x2x16x32xf32> to vector<16x1x16x32xf32>
    %49 = vector.shape_cast %48 : vector<16x1x16x32xf32> to vector<16x16x32xf32>
    %50 = arith.maximumf %47, %49 : vector<16x16x32xf32>
    %51 = arith.truncf %50 : vector<16x16x32xf32> to vector<16x16x32xbf16>
    %c1_26 = arith.constant 1 : index
    %c0_27 = arith.constant 0 : index
    %c0_28 = arith.constant 0 : index
    %52 = vector.load %arg14[%c1_26, %c0_27, %c0_28] : memref<18x16x32xbf16, #tpu.memory_space<vmem>>, vector<16x16x32xbf16>
    tpu.vector_store %arg14[%c1_26, %c0_27, %c0_28], %51 {strides = array<i32>} : memref<18x16x32xbf16, #tpu.memory_space<vmem>>, vector<16x16x32xbf16>,
    %cst_29 = arith.constant 0.000000e+00 : bf16
    %53 = vector.broadcast %cst_29 : bf16 to vector<1x16x32xbf16>
    %c0_30 = arith.constant 0 : index
    %c0_31 = arith.constant 0 : index
    %c0_32 = arith.constant 0 : index
    %54 = vector.load %arg14[%c0_30, %c0_31, %c0_32] : memref<18x16x32xbf16, #tpu.memory_space<vmem>>, vector<1x16x32xbf16>
    tpu.vector_store %arg14[%c0_30, %c0_31, %c0_32], %53 {strides = array<i32>} : memref<18x16x32xbf16, #tpu.memory_space<vmem>>, vector<1x16x32xbf16>,
    %cst_33 = arith.constant 0.000000e+00 : bf16
    %55 = vector.broadcast %cst_33 : bf16 to vector<1x16x32xbf16>
    %c17 = arith.constant 17 : index
    %c0_34 = arith.constant 0 : index
    %c0_35 = arith.constant 0 : index
    %56 = vector.load %arg14[%c17, %c0_34, %c0_35] : memref<18x16x32xbf16, #tpu.memory_space<vmem>>, vector<1x16x32xbf16>
    tpu.vector_store %arg14[%c17, %c0_34, %c0_35], %55 {strides = array<i32>} : memref<18x16x32xbf16, #tpu.memory_space<vmem>>, vector<1x16x32xbf16>,
    %c0_36 = arith.constant 0 : index
    %c0_37 = arith.constant 0 : index
    %c0_38 = arith.constant 0 : index
    %57 = vector.load %arg14[%c0_36, %c0_37, %c0_38] : memref<18x16x32xbf16, #tpu.memory_space<vmem>>, vector<18x16x32xbf16>
    %58 = vector.shape_cast %57 : vector<18x16x32xbf16> to vector<288x32xbf16>
    %c0_39 = arith.constant 0 : index
    %c0_40 = arith.constant 0 : index
    %59 = vector.load %arg6[%c0_39, %c0_40] : memref<32x96xbf16, #tpu.memory_space<vmem>>, vector<32x96xbf16>
    %cst_41 = arith.constant dense<0.000000e+00> : vector<288x96xf32>
    %60 = tpu.matmul %58, %59, %cst_41 {dimension_numbers = #tpu.dot_dimension_numbers<[1], [0], [0], [1], [0, 0, 1, 1], [], []>} : vector<288x32xbf16>, vector<32x96xbf16>, vector<288x96xf32> -> vector<288x96xf32>
    %61 = vector.shape_cast %60 : vector<288x96xf32> to vector<18x16x96xf32>
    %62 = vector.extract_strided_slice %61 {offsets = [0, 0, 0], sizes = [16, 16, 32], strides = [1, 1, 1]} : vector<18x16x96xf32> to vector<16x16x32xf32>
    %63 = vector.extract_strided_slice %61 {offsets = [1, 0, 32], sizes = [16, 16, 32], strides = [1, 1, 1]} : vector<18x16x96xf32> to vector<16x16x32xf32>
    %64 = arith.addf %62, %63 : vector<16x16x32xf32>
    %65 = vector.extract_strided_slice %61 {offsets = [2, 0, 64], sizes = [16, 16, 32], strides = [1, 1, 1]} : vector<18x16x96xf32> to vector<16x16x32xf32>
    %66 = arith.addf %64, %65 : vector<16x16x32xf32>
    %c0_42 = arith.constant 0 : index
    %c0_43 = arith.constant 0 : index
    %67 = vector.load %arg7[%c0_42, %c0_43] : memref<1x32xf32, #tpu.memory_space<vmem>>, vector<1x32xf32>
    %68 = vector.shape_cast %67 : vector<1x32xf32> to vector<1x1x32xf32>
    %69 = vector.broadcast %68 : vector<1x1x32xf32> to vector<16x16x32xf32>
    %70 = arith.addf %66, %69 : vector<16x16x32xf32>
    %cst_44 = arith.constant 0.000000e+00 : f32
    %71 = vector.broadcast %cst_44 : f32 to vector<16x16x32xf32>
    %72 = arith.maximumf %70, %71 : vector<16x16x32xf32>
    %73 = vector.shape_cast %72 : vector<16x16x32xf32> to vector<8x2x16x32xf32>
    %74 = vector.extract_strided_slice %73 {offsets = [0, 0, 0, 0], sizes = [8, 1, 16, 32], strides = [1, 1, 1, 1]} : vector<8x2x16x32xf32> to vector<8x1x16x32xf32>
    %75 = vector.shape_cast %74 : vector<8x1x16x32xf32> to vector<8x16x32xf32>
    %76 = vector.extract_strided_slice %73 {offsets = [0, 1, 0, 0], sizes = [8, 1, 16, 32], strides = [1, 1, 1, 1]} : vector<8x2x16x32xf32> to vector<8x1x16x32xf32>
    %77 = vector.shape_cast %76 : vector<8x1x16x32xf32> to vector<8x16x32xf32>
    %78 = arith.maximumf %75, %77 : vector<8x16x32xf32>
    %79 = arith.truncf %78 : vector<8x16x32xf32> to vector<8x16x32xbf16>
    %c1_45 = arith.constant 1 : index
    %c0_46 = arith.constant 0 : index
    %c0_47 = arith.constant 0 : index
    %80 = vector.load %arg15[%c1_45, %c0_46, %c0_47] : memref<10x16x32xbf16, #tpu.memory_space<vmem>>, vector<8x16x32xbf16>
    tpu.vector_store %arg15[%c1_45, %c0_46, %c0_47], %79 {strides = array<i32>} : memref<10x16x32xbf16, #tpu.memory_space<vmem>>, vector<8x16x32xbf16>,
    %cst_48 = arith.constant 0.000000e+00 : bf16
    %81 = vector.broadcast %cst_48 : bf16 to vector<1x16x32xbf16>
    %c0_49 = arith.constant 0 : index
    %c0_50 = arith.constant 0 : index
    %c0_51 = arith.constant 0 : index
    %82 = vector.load %arg15[%c0_49, %c0_50, %c0_51] : memref<10x16x32xbf16, #tpu.memory_space<vmem>>, vector<1x16x32xbf16>
    tpu.vector_store %arg15[%c0_49, %c0_50, %c0_51], %81 {strides = array<i32>} : memref<10x16x32xbf16, #tpu.memory_space<vmem>>, vector<1x16x32xbf16>,
    %cst_52 = arith.constant 0.000000e+00 : bf16
    %83 = vector.broadcast %cst_52 : bf16 to vector<1x16x32xbf16>
    %c9 = arith.constant 9 : index
    %c0_53 = arith.constant 0 : index
    %c0_54 = arith.constant 0 : index
    %84 = vector.load %arg15[%c9, %c0_53, %c0_54] : memref<10x16x32xbf16, #tpu.memory_space<vmem>>, vector<1x16x32xbf16>
    tpu.vector_store %arg15[%c9, %c0_53, %c0_54], %83 {strides = array<i32>} : memref<10x16x32xbf16, #tpu.memory_space<vmem>>, vector<1x16x32xbf16>,
    %c0_55 = arith.constant 0 : index
    %c0_56 = arith.constant 0 : index
    %c0_57 = arith.constant 0 : index
    %85 = vector.load %arg15[%c0_55, %c0_56, %c0_57] : memref<10x16x32xbf16, #tpu.memory_space<vmem>>, vector<10x16x32xbf16>
    %86 = vector.shape_cast %85 : vector<10x16x32xbf16> to vector<160x32xbf16>
    %c0_58 = arith.constant 0 : index
    %c0_59 = arith.constant 0 : index
    %87 = vector.load %arg8[%c0_58, %c0_59] : memref<32x96xbf16, #tpu.memory_space<vmem>>, vector<32x96xbf16>
    %cst_60 = arith.constant dense<0.000000e+00> : vector<160x96xf32>
    %88 = tpu.matmul %86, %87, %cst_60 {dimension_numbers = #tpu.dot_dimension_numbers<[1], [0], [0], [1], [0, 0, 1, 1], [], []>} : vector<160x32xbf16>, vector<32x96xbf16>, vector<160x96xf32> -> vector<160x96xf32>
    %89 = vector.shape_cast %88 : vector<160x96xf32> to vector<10x16x96xf32>
    %90 = vector.extract_strided_slice %89 {offsets = [0, 0, 0], sizes = [8, 16, 32], strides = [1, 1, 1]} : vector<10x16x96xf32> to vector<8x16x32xf32>
    %91 = vector.extract_strided_slice %89 {offsets = [1, 0, 32], sizes = [8, 16, 32], strides = [1, 1, 1]} : vector<10x16x96xf32> to vector<8x16x32xf32>
    %92 = arith.addf %90, %91 : vector<8x16x32xf32>
    %93 = vector.extract_strided_slice %89 {offsets = [2, 0, 64], sizes = [8, 16, 32], strides = [1, 1, 1]} : vector<10x16x96xf32> to vector<8x16x32xf32>
    %94 = arith.addf %92, %93 : vector<8x16x32xf32>
    %c0_61 = arith.constant 0 : index
    %c0_62 = arith.constant 0 : index
    %95 = vector.load %arg9[%c0_61, %c0_62] : memref<1x32xf32, #tpu.memory_space<vmem>>, vector<1x32xf32>
    %96 = vector.shape_cast %95 : vector<1x32xf32> to vector<1x1x32xf32>
    %97 = vector.broadcast %96 : vector<1x1x32xf32> to vector<8x16x32xf32>
    %98 = arith.addf %94, %97 : vector<8x16x32xf32>
    %cst_63 = arith.constant 0.000000e+00 : f32
    %99 = vector.broadcast %cst_63 : f32 to vector<8x16x32xf32>
    %100 = arith.maximumf %98, %99 : vector<8x16x32xf32>
    %101 = vector.shape_cast %100 : vector<8x16x32xf32> to vector<4x2x16x32xf32>
    %102 = vector.extract_strided_slice %101 {offsets = [0, 0, 0, 0], sizes = [4, 1, 16, 32], strides = [1, 1, 1, 1]} : vector<4x2x16x32xf32> to vector<4x1x16x32xf32>
    %103 = vector.shape_cast %102 : vector<4x1x16x32xf32> to vector<4x16x32xf32>
    %104 = vector.extract_strided_slice %101 {offsets = [0, 1, 0, 0], sizes = [4, 1, 16, 32], strides = [1, 1, 1, 1]} : vector<4x2x16x32xf32> to vector<4x1x16x32xf32>
    %105 = vector.shape_cast %104 : vector<4x1x16x32xf32> to vector<4x16x32xf32>
    %106 = arith.maximumf %103, %105 : vector<4x16x32xf32>
    %107 = vector.extract_strided_slice %106 {offsets = [0, 0, 0], sizes = [1, 16, 32], strides = [1, 1, 1]} : vector<4x16x32xf32> to vector<1x16x32xf32>
    %108 = vector.shape_cast %107 : vector<1x16x32xf32> to vector<16x32xf32>
    %109 = vector.extract_strided_slice %106 {offsets = [1, 0, 0], sizes = [1, 16, 32], strides = [1, 1, 1]} : vector<4x16x32xf32> to vector<1x16x32xf32>
    %110 = vector.shape_cast %109 : vector<1x16x32xf32> to vector<16x32xf32>
    %111 = vector.extract_strided_slice %106 {offsets = [2, 0, 0], sizes = [1, 16, 32], strides = [1, 1, 1]} : vector<4x16x32xf32> to vector<1x16x32xf32>
    %112 = vector.shape_cast %111 : vector<1x16x32xf32> to vector<16x32xf32>
    %113 = vector.extract_strided_slice %106 {offsets = [3, 0, 0], sizes = [1, 16, 32], strides = [1, 1, 1]} : vector<4x16x32xf32> to vector<1x16x32xf32>
    %114 = vector.shape_cast %113 : vector<1x16x32xf32> to vector<16x32xf32>
    %115 = tpu.concatenate %108, %110, %112, %114 in 1 : vector<16x32xf32>, vector<16x32xf32>, vector<16x32xf32>, vector<16x32xf32> -> vector<16x128xf32>
    %116 = arith.truncf %115 : vector<16x128xf32> to vector<16x128xbf16>
    %c0_64 = arith.constant 0 : index
    %c0_65 = arith.constant 0 : index
    %117 = vector.load %arg10[%c0_64, %c0_65] : memref<128x8xbf16, #tpu.memory_space<vmem>>, vector<128x8xbf16>
    %cst_66 = arith.constant dense<0.000000e+00> : vector<16x8xf32>
    %118 = tpu.matmul %116, %117, %cst_66 {dimension_numbers = #tpu.dot_dimension_numbers<[1], [0], [0], [1], [0, 0, 1, 1], [], []>} : vector<16x128xbf16>, vector<128x8xbf16>, vector<16x8xf32> -> vector<16x8xf32>
    %c0_67 = arith.constant 0 : index
    %c0_68 = arith.constant 0 : index
    %119 = vector.load %arg11[%c0_67, %c0_68] : memref<1x8xf32, #tpu.memory_space<vmem>>, vector<1x8xf32>
    %120 = vector.broadcast %119 : vector<1x8xf32> to vector<16x8xf32>
    %121 = arith.addf %118, %120 : vector<16x8xf32>
    %c0_69 = arith.constant 0 : index
    %c0_70 = arith.constant 0 : index
    %122 = vector.load %arg12[%c0_69, %c0_70] : memref<16x8xf32, #tpu.memory_space<vmem>>, vector<16x8xf32>
    tpu.vector_store %arg12[%c0_69, %c0_70], %121 {strides = array<i32>} : memref<16x8xf32, #tpu.memory_space<vmem>>, vector<16x8xf32>,
    return
  }
  func.func @transform_0(%arg0: i32) -> (i32, i32, i32, i32) {
    %c0_i32 = arith.constant 0 : i32
    %c0_i32_0 = arith.constant 0 : i32
    %c0_i32_1 = arith.constant 0 : i32
    %c0_i32_2 = arith.constant 0 : i32
    return %arg0, %c0_i32, %c0_i32_0, %c0_i32_1 : i32, i32, i32, i32
  }
  func.func @transform_1(%arg0: i32) -> (i32, i32) {
    %c0_i32 = arith.constant 0 : i32
    %c0_i32_0 = arith.constant 0 : i32
    %c0_i32_1 = arith.constant 0 : i32
    return %c0_i32, %c0_i32_0 : i32, i32
  }
  func.func @transform_2(%arg0: i32) -> (i32, i32) {
    %c0_i32 = arith.constant 0 : i32
    %c0_i32_0 = arith.constant 0 : i32
    %c0_i32_1 = arith.constant 0 : i32
    return %c0_i32, %c0_i32_0 : i32, i32
  }
  func.func @transform_3(%arg0: i32) -> (i32, i32) {
    %c0_i32 = arith.constant 0 : i32
    %c0_i32_0 = arith.constant 0 : i32
    %c0_i32_1 = arith.constant 0 : i32
    return %c0_i32, %c0_i32_0 : i32, i32
  }
  func.func @transform_4(%arg0: i32) -> (i32, i32) {
    %c0_i32 = arith.constant 0 : i32
    %c0_i32_0 = arith.constant 0 : i32
    %c0_i32_1 = arith.constant 0 : i32
    return %c0_i32, %c0_i32_0 : i32, i32
  }
  func.func @transform_5(%arg0: i32) -> (i32, i32) {
    %c0_i32 = arith.constant 0 : i32
    %c0_i32_0 = arith.constant 0 : i32
    %c0_i32_1 = arith.constant 0 : i32
    return %c0_i32, %c0_i32_0 : i32, i32
  }
  func.func @transform_6(%arg0: i32) -> (i32, i32) {
    %c0_i32 = arith.constant 0 : i32
    %c0_i32_0 = arith.constant 0 : i32
    %c0_i32_1 = arith.constant 0 : i32
    return %c0_i32, %c0_i32_0 : i32, i32
  }
  func.func @transform_7(%arg0: i32) -> (i32, i32) {
    %c0_i32 = arith.constant 0 : i32
    %c0_i32_0 = arith.constant 0 : i32
    %c0_i32_1 = arith.constant 0 : i32
    return %c0_i32, %c0_i32_0 : i32, i32
  }
  func.func @transform_8(%arg0: i32) -> (i32, i32) {
    %c0_i32 = arith.constant 0 : i32
    %c0_i32_0 = arith.constant 0 : i32
    %c0_i32_1 = arith.constant 0 : i32
    return %c0_i32, %c0_i32_0 : i32, i32
  }
  func.func @transform_9(%arg0: i32) -> (i32, i32) {
    %c0_i32 = arith.constant 0 : i32
    %c0_i32_0 = arith.constant 0 : i32
    %c0_i32_1 = arith.constant 0 : i32
    return %c0_i32, %c0_i32_0 : i32, i32
  }
  func.func @transform_10(%arg0: i32) -> (i32, i32) {
    %c0_i32 = arith.constant 0 : i32
    %c0_i32_0 = arith.constant 0 : i32
    %c0_i32_1 = arith.constant 0 : i32
    return %c0_i32, %c0_i32_0 : i32, i32
  }
  func.func @transform_11(%arg0: i32) -> (i32, i32) {
    %c0_i32 = arith.constant 0 : i32
    %c0_i32_0 = arith.constant 0 : i32
    return %arg0, %c0_i32 : i32, i32
  }
}

</mosaic_0001>

<llo_original>
// kernel: tpu_custom_call.1
$region0: #{tpu_custom_call.1}
  #allocation0 [shape = 'u32[]', space=smem, size = 0x4, offset = 0x4, fixed_abs, tag = 'smem constant byte address 0x4 - core index']
  #allocation1 [shape = 'u32[144,128]{1,0:T(1,128)}', space=vmem, size = 0x12000, scoped, tag = 'internal scratch']
  #allocation2 [shape = 'bf16[34,16,32]{2,1,0:T(8,128)(2,1)}', space=vmem, size = 0x22000, scoped, tag = 'scratch operand']
  #allocation3 [shape = 'bf16[18,16,32]{2,1,0:T(8,128)(2,1)}', space=vmem, size = 0x12000, scoped, tag = 'scratch operand']
  #allocation4 [shape = 'bf16[10,16,32]{2,1,0:T(8,128)(2,1)}', space=vmem, size = 0xa000, scoped, tag = 'scratch operand']
  %s0 = inlined_call_operand.vmem [shape: bf16[2,66,16,2], index: 0, kind: input, shape index: {}]
  %s1 = inlined_call_operand.vmem [shape: bf16[2,96], index: 1, kind: input, shape index: {}]
  %s2 = inlined_call_operand.vmem [shape: f32[1,32], index: 2, kind: input, shape index: {}]
  %s3 = inlined_call_operand.vmem [shape: bf16[32,96], index: 3, kind: input, shape index: {}]
  %s4 = inlined_call_operand.vmem [shape: f32[1,32], index: 4, kind: input, shape index: {}]
  %s5 = inlined_call_operand.vmem [shape: bf16[32,96], index: 5, kind: input, shape index: {}]
  %s6 = inlined_call_operand.vmem [shape: f32[1,32], index: 6, kind: input, shape index: {}]
  %s7 = inlined_call_operand.vmem [shape: bf16[32,96], index: 7, kind: input, shape index: {}]
  %s8 = inlined_call_operand.vmem [shape: f32[1,32], index: 8, kind: input, shape index: {}]
  %s9 = inlined_call_operand.vmem [shape: bf16[128,8], index: 9, kind: input, shape index: {}]
  %s10 = inlined_call_operand.vmem [shape: f32[1,8], index: 10, kind: input, shape index: {}]
  %s11 = inlined_call_operand.vmem [shape: f32[32,8], index: 11, kind: output, shape index: {}]
  %s12 = sld [smem:[#allocation0]]
  $region77: #{tpu_custom_call.1} parent=0
    _
  %s14 = ssub.s32 1, %s12
  %s15 = scalar_select 0, %s14, %s12
  loop: start=0, step=1, limit=4
  $region2: #{tpu_custom_call.1} parent=0 // loop_pre_header
    _
  $region3: #{tpu_custom_call.1} parent=0 // loop_header
    %s17 = sphi 0, %s21
    %p18 = scmp.ge.s32.totalorder %s17, 4
    %s27 = sphi 0, %s29
    %s30 = sphi 0, %s27
    %s31 = sphi 0, %s30
    %s47 = sphi 0, %s31
    %s51 = sphi 0, %s51
    %s53 = sphi 0, %s51
    %s54 = sphi 0, %s53
    %s68 = sphi 0, %s54
    %s72 = sphi 0, %s72
    %s74 = sphi 0, %s72
    %s75 = sphi 0, %s74
    %s89 = sphi 0, %s75
    %s93 = sphi 0, %s93
    %s95 = sphi 0, %s93
    %s96 = sphi 0, %s95
    %s110 = sphi 0, %s96
    %s114 = sphi 0, %s114
    %s116 = sphi 0, %s114
    %s117 = sphi 0, %s116
    %s131 = sphi 0, %s117
    %s135 = sphi 0, %s135
    %s137 = sphi 0, %s135
    %s138 = sphi 0, %s137
    %s152 = sphi 0, %s138
    %s156 = sphi 0, %s156
    %s158 = sphi 0, %s156
    %s159 = sphi 0, %s158
    %s173 = sphi 0, %s159
    %s177 = sphi 0, %s177
    %s179 = sphi 0, %s177
    %s180 = sphi 0, %s179
    %s194 = sphi 0, %s180
    %s198 = sphi 0, %s198
    %s200 = sphi 0, %s198
    %s201 = sphi 0, %s200
    %s215 = sphi 0, %s201
    %s219 = sphi 0, %s219
    %s221 = sphi 0, %s219
    %s222 = sphi 0, %s221
    %s236 = sphi 0, %s222
    %s240 = sphi 0, %s240
    %s242 = sphi 0, %s240
    %s243 = sphi 0, %s242
    %s257 = sphi 0, %s243
    %s263 = sphi 0, %s265
    %s266 = sphi 0, %s263
    %s267 = sphi 0, %s266
    %s283 = sphi 0, %s267
  $region4: #{tpu_custom_call.1} parent=0 // loop_header_branch
    %20 = sbr.rel (%p18) target = $region8
  $region5: #{tpu_custom_call.1} parent=0 // loop_body
    %s22 = ssub.s32 %s17, 1
    %s23 = ssub.s32 %s17, 2
    %s24 = sadd.s32 %s17, 1
    %s25 = ssub.s32 %s17, %s24
    %p26 = scmp.eq.s32.totalorder %s25, 0
    %s28 = sadd.s32 %s27, 1
    %s29 = scalar_select %p26, %s27, %s28
    %p32 = pneg %p26
    %p33 = scmp.eq.s32.totalorder %s17, 1
    %p34 = por %p32, %p33
    %p35 = scmp.ne.s32.totalorder %s27, %s30
    %p36 = scmp.eq.s32.totalorder %s17, 0
    %p37 = por %p35, %p36
    %p38 = scmp.ne.s32.totalorder %s27, %s30
    %p39 = scmp.eq.s32.totalorder %s22, 1
    %p40 = por %p38, %p39
    %p41 = scmp.ne.s32.totalorder %s30, %s31
    %p42 = scmp.eq.s32.totalorder %s22, 0
    %p43 = por %p41, %p42
    %p44 = scmp.ne.s32.totalorder %s30, %s31
    %p45 = scmp.eq.s32.totalorder %s23, 1
    %p46 = por %p44, %p45
    %p48 = scmp.ne.s32.totalorder %s31, %s47
    %p49 = scmp.eq.s32.totalorder %s23, 0
    %p50 = por %p48, %p49
    %s52 = sadd.s32 %s51, 1
    %p55 = scmp.eq.s32.totalorder %s17, 1
    %p56 = scmp.ne.s32.totalorder %s51, %s53
    %p57 = scmp.eq.s32.totalorder %s17, 0
    %p58 = por %p56, %p57
    %p59 = scmp.ne.s32.totalorder %s51, %s53
    %p60 = scmp.eq.s32.totalorder %s22, 1
    %p61 = por %p59, %p60
    %p62 = scmp.ne.s32.totalorder %s53, %s54
    %p63 = scmp.eq.s32.totalorder %s22, 0
    %p64 = por %p62, %p63
    %p65 = scmp.ne.s32.totalorder %s53, %s54
    %p66 = scmp.eq.s32.totalorder %s23, 1
    %p67 = por %p65, %p66
    %p69 = scmp.ne.s32.totalorder %s54, %s68
    %p70 = scmp.eq.s32.totalorder %s23, 0
    %p71 = por %p69, %p70
    %s73 = sadd.s32 %s72, 1
    %p76 = scmp.eq.s32.totalorder %s17, 1
    %p77 = scmp.ne.s32.totalorder %s72, %s74
    %p78 = scmp.eq.s32.totalorder %s17, 0
    %p79 = por %p77, %p78
    %p80 = scmp.ne.s32.totalorder %s72, %s74
    %p81 = scmp.eq.s32.totalorder %s22, 1
    %p82 = por %p80, %p81
    %p83 = scmp.ne.s32.totalorder %s74, %s75
    %p84 = scmp.eq.s32.totalorder %s22, 0
    %p85 = por %p83, %p84
    %p86 = scmp.ne.s32.totalorder %s74, %s75
    %p87 = scmp.eq.s32.totalorder %s23, 1
    %p88 = por %p86, %p87
    %p90 = scmp.ne.s32.totalorder %s75, %s89
    %p91 = scmp.eq.s32.totalorder %s23, 0
    %p92 = por %p90, %p91
    %s94 = sadd.s32 %s93, 1
    %p97 = scmp.eq.s32.totalorder %s17, 1
    %p98 = scmp.ne.s32.totalorder %s93, %s95
    %p99 = scmp.eq.s32.totalorder %s17, 0
    %p100 = por %p98, %p99
    %p101 = scmp.ne.s32.totalorder %s93, %s95
    %p102 = scmp.eq.s32.totalorder %s22, 1
    %p103 = por %p101, %p102
    %p104 = scmp.ne.s32.totalorder %s95, %s96
    %p105 = scmp.eq.s32.totalorder %s22, 0
    %p106 = por %p104, %p105
    %p107 = scmp.ne.s32.totalorder %s95, %s96
    %p108 = scmp.eq.s32.totalorder %s23, 1
    %p109 = por %p107, %p108
    %p111 = scmp.ne.s32.totalorder %s96, %s110
    %p112 = scmp.eq.s32.totalorder %s23, 0
    %p113 = por %p111, %p112
    %s115 = sadd.s32 %s114, 1
    %p118 = scmp.eq.s32.totalorder %s17, 1
    %p119 = scmp.ne.s32.totalorder %s114, %s116
    %p120 = scmp.eq.s32.totalorder %s17, 0
    %p121 = por %p119, %p120
    %p122 = scmp.ne.s32.totalorder %s114, %s116
    %p123 = scmp.eq.s32.totalorder %s22, 1
    %p124 = por %p122, %p123
    %p125 = scmp.ne.s32.totalorder %s116, %s117
    %p126 = scmp.eq.s32.totalorder %s22, 0
    %p127 = por %p125, %p126
    %p128 = scmp.ne.s32.totalorder %s116, %s117
    %p129 = scmp.eq.s32.totalorder %s23, 1
    %p130 = por %p128, %p129
    %p132 = scmp.ne.s32.totalorder %s117, %s131
    %p133 = scmp.eq.s32.totalorder %s23, 0
    %p134 = por %p132, %p133
    %s136 = sadd.s32 %s135, 1
    %p139 = scmp.eq.s32.totalorder %s17, 1
    %p140 = scmp.ne.s32.totalorder %s135, %s137
    %p141 = scmp.eq.s32.totalorder %s17, 0
    %p142 = por %p140, %p141
    %p143 = scmp.ne.s32.totalorder %s135, %s137
    %p144 = scmp.eq.s32.totalorder %s22, 1
    %p145 = por %p143, %p144
    %p146 = scmp.ne.s32.totalorder %s137, %s138
    %p147 = scmp.eq.s32.totalorder %s22, 0
    %p148 = por %p146, %p147
    %p149 = scmp.ne.s32.totalorder %s137, %s138
    %p150 = scmp.eq.s32.totalorder %s23, 1
    %p151 = por %p149, %p150
    %p153 = scmp.ne.s32.totalorder %s138, %s152
    %p154 = scmp.eq.s32.totalorder %s23, 0
    %p155 = por %p153, %p154
    %s157 = sadd.s32 %s156, 1
    %p160 = scmp.eq.s32.totalorder %s17, 1
    %p161 = scmp.ne.s32.totalorder %s156, %s158
    %p162 = scmp.eq.s32.totalorder %s17, 0
    %p163 = por %p161, %p162
    %p164 = scmp.ne.s32.totalorder %s156, %s158
    %p165 = scmp.eq.s32.totalorder %s22, 1
    %p166 = por %p164, %p165
    %p167 = scmp.ne.s32.totalorder %s158, %s159
    %p168 = scmp.eq.s32.totalorder %s22, 0
    %p169 = por %p167, %p168
    %p170 = scmp.ne.s32.totalorder %s158, %s159
    %p171 = scmp.eq.s32.totalorder %s23, 1
    %p172 = por %p170, %p171
    %p174 = scmp.ne.s32.totalorder %s159, %s173
    %p175 = scmp.eq.s32.totalorder %s23, 0
    %p176 = por %p174, %p175
    %s178 = sadd.s32 %s177, 1
    %p181 = scmp.eq.s32.totalorder %s17, 1
    %p182 = scmp.ne.s32.totalorder %s177, %s179
    %p183 = scmp.eq.s32.totalorder %s17, 0
    %p184 = por %p182, %p183
    %p185 = scmp.ne.s32.totalorder %s177, %s179
    %p186 = scmp.eq.s32.totalorder %s22, 1
    %p187 = por %p185, %p186
    %p188 = scmp.ne.s32.totalorder %s179, %s180
    %p189 = scmp.eq.s32.totalorder %s22, 0
    %p190 = por %p188, %p189
    %p191 = scmp.ne.s32.totalorder %s179, %s180
    %p192 = scmp.eq.s32.totalorder %s23, 1
    %p193 = por %p191, %p192
    %p195 = scmp.ne.s32.totalorder %s180, %s194
    %p196 = scmp.eq.s32.totalorder %s23, 0
    %p197 = por %p195, %p196
    %s199 = sadd.s32 %s198, 1
    %p202 = scmp.eq.s32.totalorder %s17, 1
    %p203 = scmp.ne.s32.totalorder %s198, %s200
    %p204 = scmp.eq.s32.totalorder %s17, 0
    %p205 = por %p203, %p204
    %p206 = scmp.ne.s32.totalorder %s198, %s200
    %p207 = scmp.eq.s32.totalorder %s22, 1
    %p208 = por %p206, %p207
    %p209 = scmp.ne.s32.totalorder %s200, %s201
    %p210 = scmp.eq.s32.totalorder %s22, 0
    %p211 = por %p209, %p210
    %p212 = scmp.ne.s32.totalorder %s200, %s201
    %p213 = scmp.eq.s32.totalorder %s23, 1
    %p214 = por %p212, %p213
    %p216 = scmp.ne.s32.totalorder %s201, %s215
    %p217 = scmp.eq.s32.totalorder %s23, 0
    %p218 = por %p216, %p217
    %s220 = sadd.s32 %s219, 1
    %p223 = scmp.eq.s32.totalorder %s17, 1
    %p224 = scmp.ne.s32.totalorder %s219, %s221
    %p225 = scmp.eq.s32.totalorder %s17, 0
    %p226 = por %p224, %p225
    %p227 = scmp.ne.s32.totalorder %s219, %s221
    %p228 = scmp.eq.s32.totalorder %s22, 1
    %p229 = por %p227, %p228
    %p230 = scmp.ne.s32.totalorder %s221, %s222
    %p231 = scmp.eq.s32.totalorder %s22, 0
    %p232 = por %p230, %p231
    %p233 = scmp.ne.s32.totalorder %s221, %s222
    %p234 = scmp.eq.s32.totalorder %s23, 1
    %p235 = por %p233, %p234
    %p237 = scmp.ne.s32.totalorder %s222, %s236
    %p238 = scmp.eq.s32.totalorder %s23, 0
    %p239 = por %p237, %p238
    %s241 = sadd.s32 %s240, 1
    %p244 = scmp.eq.s32.totalorder %s17, 1
    %p245 = scmp.ne.s32.totalorder %s240, %s242
    %p246 = scmp.eq.s32.totalorder %s17, 0
    %p247 = por %p245, %p246
    %p248 = scmp.ne.s32.totalorder %s240, %s242
    %p249 = scmp.eq.s32.totalorder %s22, 1
    %p250 = por %p248, %p249
    %p251 = scmp.ne.s32.totalorder %s242, %s243
    %p252 = scmp.eq.s32.totalorder %s22, 0
    %p253 = por %p251, %p252
    %p254 = scmp.ne.s32.totalorder %s242, %s243
    %p255 = scmp.eq.s32.totalorder %s23, 1
    %p256 = por %p254, %p255
    %p258 = scmp.ne.s32.totalorder %s243, %s257
    %p259 = scmp.eq.s32.totalorder %s23, 0
    %p260 = por %p258, %p259
    %s261 = ssub.s32 %s17, %s24
    %p262 = scmp.eq.s32.totalorder %s261, 0
    %s264 = sadd.s32 %s263, 1
    %s265 = scalar_select %p262, %s263, %s264
    %p268 = pneg %p262
    %p269 = scmp.eq.s32.totalorder %s17, 1
    %p270 = por %p268, %p269
    %p271 = scmp.ne.s32.totalorder %s263, %s266
    %p272 = scmp.eq.s32.totalorder %s17, 0
    %p273 = por %p271, %p272
    %p274 = scmp.ne.s32.totalorder %s263, %s266
    %p275 = scmp.eq.s32.totalorder %s22, 1
    %p276 = por %p274, %p275
    %p277 = scmp.ne.s32.totalorder %s266, %s267
    %p278 = scmp.eq.s32.totalorder %s22, 0
    %p279 = por %p277, %p278
    %p280 = scmp.ne.s32.totalorder %s266, %s267
    %p281 = scmp.eq.s32.totalorder %s23, 1
    %p282 = por %p280, %p281
    %p284 = scmp.ne.s32.totalorder %s267, %s283
    %p285 = scmp.eq.s32.totalorder %s23, 0
    %p286 = por %p284, %p285
    %p287 = scmp.le.s32.totalorder 1, %s17
    %p288 = scmp.lt.s32.totalorder %s17, 3
    %p289 = pnand %p287, %p288
    %p290 = pneg %p289
    // Predicated region
    $region9: #{tpu_custom_call.1} parent=5 // pred_check
      _
    $region10: #{tpu_custom_call.1} parent=5 // pred_check_branch
      %292 = sbr.rel (%p289) target = $region12
    $region11: #{tpu_custom_call.1} parent=5 // pred_region
      %s293 = ssub.s32 %s17, 1
      // Predicated region
      $region13: #{tpu_custom_call.1} parent=11 // pred_check
        %p294 = pneg %p64
      $region14: #{tpu_custom_call.1} parent=11 // pred_check_branch
        %296 = sbr.rel (%p294) target = $region16
      $region15: #{tpu_custom_call.1} parent=11 // pred_region
        _
      $region16: #{tpu_custom_call.1} parent=11 // pred_fallthru
        _
      // Predicated region
      $region17: #{tpu_custom_call.1} parent=11 // pred_check
        %p297 = pneg %p85
      $region18: #{tpu_custom_call.1} parent=11 // pred_check_branch
        %299 = sbr.rel (%p297) target = $region20
      $region19: #{tpu_custom_call.1} parent=11 // pred_region
        _
      $region20: #{tpu_custom_call.1} parent=11 // pred_fallthru
        _
      // Predicated region
      $region21: #{tpu_custom_call.1} parent=11 // pred_check
        %p300 = pneg %p106
      $region22: #{tpu_custom_call.1} parent=11 // pred_check_branch
        %302 = sbr.rel (%p300) target = $region24
      $region23: #{tpu_custom_call.1} parent=11 // pred_region
        _
      $region24: #{tpu_custom_call.1} parent=11 // pred_fallthru
        _
      // Predicated region
      $region25: #{tpu_custom_call.1} parent=11 // pred_check
        %p303 = pneg %p127
      $region26: #{tpu_custom_call.1} parent=11 // pred_check_branch
        %305 = sbr.rel (%p303) target = $region28
      $region27: #{tpu_custom_call.1} parent=11 // pred_region
        _
      $region28: #{tpu_custom_call.1} parent=11 // pred_fallthru
        _
      // Predicated region
      $region29: #{tpu_custom_call.1} parent=11 // pred_check
        %p306 = pneg %p148
      $region30: #{tpu_custom_call.1} parent=11 // pred_check_branch
        %308 = sbr.rel (%p306) target = $region32
      $region31: #{tpu_custom_call.1} parent=11 // pred_region
        _
      $region32: #{tpu_custom_call.1} parent=11 // pred_fallthru
        _
      // Predicated region
      $region33: #{tpu_custom_call.1} parent=11 // pred_check
        %p309 = pneg %p169
      $region34: #{tpu_custom_call.1} parent=11 // pred_check_branch
        %311 = sbr.rel (%p309) target = $region36
      $region35: #{tpu_custom_call.1} parent=11 // pred_region
        _
      $region36: #{tpu_custom_call.1} parent=11 // pred_fallthru
        _
      // Predicated region
      $region37: #{tpu_custom_call.1} parent=11 // pred_check
        %p312 = pneg %p190
      $region38: #{tpu_custom_call.1} parent=11 // pred_check_branch
        %314 = sbr.rel (%p312) target = $region40
      $region39: #{tpu_custom_call.1} parent=11 // pred_region
        _
      $region40: #{tpu_custom_call.1} parent=11 // pred_fallthru
        _
      // Predicated region
      $region41: #{tpu_custom_call.1} parent=11 // pred_check
        %p315 = pneg %p211
      $region42: #{tpu_custom_call.1} parent=11 // pred_check_branch
        %317 = sbr.rel (%p315) target = $region44
      $region43: #{tpu_custom_call.1} parent=11 // pred_region
        _
      $region44: #{tpu_custom_call.1} parent=11 // pred_fallthru
        _
      // Predicated region
      $region45: #{tpu_custom_call.1} parent=11 // pred_check
        %p318 = pneg %p232
      $region46: #{tpu_custom_call.1} parent=11 // pred_check_branch
        %320 = sbr.rel (%p318) target = $region48
      $region47: #{tpu_custom_call.1} parent=11 // pred_region
        _
      $region48: #{tpu_custom_call.1} parent=11 // pred_fallthru
        _
      // Predicated region
      $region49: #{tpu_custom_call.1} parent=11 // pred_check
        %p321 = pneg %p253
      $region50: #{tpu_custom_call.1} parent=11 // pred_check_branch
        %323 = sbr.rel (%p321) target = $region52
      $region51: #{tpu_custom_call.1} parent=11 // pred_region
        _
      $region52: #{tpu_custom_call.1} parent=11 // pred_fallthru
        _
    $region12: #{tpu_custom_call.1} parent=5 // pred_fallthru
      _
    %p324 = scmp.lt.s32.totalorder %s17, 2
    // Predicated region
    $region53: #{tpu_custom_call.1} parent=5 // pred_check
      %p325 = pneg %p324
    $region54: #{tpu_custom_call.1} parent=5 // pred_check_branch
      %327 = sbr.rel (%p325) target = $region56
    $region55: #{tpu_custom_call.1} parent=5 // pred_region
      // Predicated region
      $region57: #{tpu_custom_call.1} parent=55 // pred_check
        %p328 = pneg %p37
      $region58: #{tpu_custom_call.1} parent=55 // pred_check_branch
        %330 = sbr.rel (%p328) target = $region60
      $region59: #{tpu_custom_call.1} parent=55 // pred_region
        %p331 = scmp.lt.s32.totalorder %s17, 1
        %s332 = scalar_select %p331, %s17, 1
        %s333 = smul.addr %s332, 132
        %s334 = smul.addr %s333, 4
        %s335 = scalar_lea.vmem %s0, %s334
      $region60: #{tpu_custom_call.1} parent=55 // pred_fallthru
        _
    $region56: #{tpu_custom_call.1} parent=5 // pred_fallthru
      _
    %p336 = scmp.le.s32.totalorder 1, %s17
    %p337 = scmp.lt.s32.totalorder %s17, 3
    %p338 = pnand %p336, %p337
    %p339 = pneg %p338
    // Predicated region
    $region61: #{tpu_custom_call.1} parent=5 // pred_check
      _
    $region62: #{tpu_custom_call.1} parent=5 // pred_check_branch
      %341 = sbr.rel (%p338) target = $region64
    $region63: #{tpu_custom_call.1} parent=5 // pred_region
      %s342 = ssub.s32 %s17, 1
      %p343 = scmp.lt.s32.totalorder %s22, 1
      %s344 = scalar_select %p343, %s22, 1
      %s345 = smul.addr %s344, 132
      %s346 = smul.addr %s345, 4
      %s347 = scalar_lea.vmem %s0, %s346
      %p348 = pneg %p43
      %p349 = pneg %p40
      %p350 = pneg %p64
      %p351 = pneg %p61
      %p352 = pneg %p85
      %p353 = pneg %p82
      %p354 = pneg %p106
      %p355 = pneg %p103
      %p356 = pneg %p127
      %p357 = pneg %p124
      %p358 = pneg %p148
      %p359 = pneg %p145
      %p360 = pneg %p169
      %p361 = pneg %p166
      %p362 = pneg %p190
      %p363 = pneg %p187
      %p364 = pneg %p211
      %p365 = pneg %p208
      %p366 = pneg %p232
      %p367 = pneg %p229
      %p368 = pneg %p253
      %p369 = pneg %p250
      %p370 = pneg %p279
      %p371 = pneg %p276
      %s372 = smul.u32 2, %s22
      %p373 = scmp.lt.s32.totalorder %s372, 3
      %s374 = scalar_select %p373, %s372, 3
      %s375 = smul.addr %s374, 8
      %s376 = scalar_lea.vmem %s11, %s375
      %p377 = scmp.lt.s32.totalorder %s22, 1
      %s378 = scalar_select %p377, %s22, 1
      %s379 = smul.addr %s378, 132
      %s380 = smul.addr %s379, 4
      %s381 = scalar_lea.vmem %s0, %s380
      %s382 = smul.u32 2, %s22
      %p383 = scmp.lt.s32.totalorder %s382, 3
      %s384 = scalar_select %p383, %s382, 3
      %s385 = smul.addr %s384, 8
      %s386 = scalar_lea.vmem %s11, %s385
      %s387 = smul.u32 2, %s22
      %v389 = vld [vmem:[%s381] sm:$0xf]
      %v390 = vld [vmem:[%s381 + $0x4] sm:$0xf]
      %v391 = vld [vmem:[%s381 + $0x8] sm:$0xf]
      %v392 = vld [vmem:[%s381 + $0xc] sm:$0xf]
      %v393 = vld [vmem:[%s381 + $0x10] sm:$0xf]
      %v394 = vld [vmem:[%s381 + $0x14] sm:$0xf]
      %v395 = vld [vmem:[%s381 + $0x18] sm:$0xf]
      %v396 = vld [vmem:[%s381 + $0x1c] sm:$0xf]
      %v397 = vld [vmem:[%s381 + $0x20] sm:$0xf]
      %v398 = vld [vmem:[%s381 + $0x24] sm:$0xf]
      %v399 = vld [vmem:[%s381 + $0x28] sm:$0xf]
      %v400 = vld [vmem:[%s381 + $0x2c] sm:$0xf]
      %v401 = vld [vmem:[%s381 + $0x30] sm:$0xf]
      %v402 = vld [vmem:[%s381 + $0x34] sm:$0xf]
      %v403 = vld [vmem:[%s381 + $0x38] sm:$0xf]
      %v404 = vld [vmem:[%s381 + $0x3c] sm:$0xf]
      %v405 = vld [vmem:[%s381 + $0x40] sm:$0xf]
      %v406 = vld [vmem:[%s381 + $0x44] sm:$0xf]
      %v407 = vld [vmem:[%s381 + $0x48] sm:$0xf]
      %v408 = vld [vmem:[%s381 + $0x4c] sm:$0xf]
      %v409 = vld [vmem:[%s381 + $0x50] sm:$0xf]
      %v410 = vld [vmem:[%s381 + $0x54] sm:$0xf]
      %v411 = vld [vmem:[%s381 + $0x58] sm:$0xf]
      %v412 = vld [vmem:[%s381 + $0x5c] sm:$0xf]
      %v413 = vld [vmem:[%s381 + $0x60] sm:$0xf]
      %v414 = vld [vmem:[%s381 + $0x64] sm:$0xf]
      %v415 = vld [vmem:[%s381 + $0x68] sm:$0xf]
      %v416 = vld [vmem:[%s381 + $0x6c] sm:$0xf]
      %v417 = vld [vmem:[%s381 + $0x70] sm:$0xf]
      %v418 = vld [vmem:[%s381 + $0x74] sm:$0xf]
      %v419 = vld [vmem:[%s381 + $0x78] sm:$0xf]
      %v420 = vld [vmem:[%s381 + $0x7c] sm:$0xf]
      %v421 = vld [vmem:[%s381 + $0x80] sm:$0xf]
      %v422 = vld [vmem:[%s381 + $0x84] sm:$0xf]
      %v423 = vld [vmem:[%s381 + $0x88] sm:$0xf]
      %v424 = vld [vmem:[%s381 + $0x8c] sm:$0xf]
      %v425 = vld [vmem:[%s381 + $0x90] sm:$0xf]
      %v426 = vld [vmem:[%s381 + $0x94] sm:$0xf]
      %v427 = vld [vmem:[%s381 + $0x98] sm:$0xf]
      %v428 = vld [vmem:[%s381 + $0x9c] sm:$0xf]
      %v429 = vld [vmem:[%s381 + $0xa0] sm:$0xf]
      %v430 = vld [vmem:[%s381 + $0xa4] sm:$0xf]
      %v431 = vld [vmem:[%s381 + $0xa8] sm:$0xf]
      %v432 = vld [vmem:[%s381 + $0xac] sm:$0xf]
      %v433 = vld [vmem:[%s381 + $0xb0] sm:$0xf]
      %v434 = vld [vmem:[%s381 + $0xb4] sm:$0xf]
      %v435 = vld [vmem:[%s381 + $0xb8] sm:$0xf]
      %v436 = vld [vmem:[%s381 + $0xbc] sm:$0xf]
      %v437 = vld [vmem:[%s381 + $0xc0] sm:$0xf]
      %v438 = vld [vmem:[%s381 + $0xc4] sm:$0xf]
      %v439 = vld [vmem:[%s381 + $0xc8] sm:$0xf]
      %v440 = vld [vmem:[%s381 + $0xcc] sm:$0xf]
      %v441 = vld [vmem:[%s381 + $0xd0] sm:$0xf]
      %v442 = vld [vmem:[%s381 + $0xd4] sm:$0xf]
      %v443 = vld [vmem:[%s381 + $0xd8] sm:$0xf]
      %v444 = vld [vmem:[%s381 + $0xdc] sm:$0xf]
      %v445 = vld [vmem:[%s381 + $0xe0] sm:$0xf]
      %v446 = vld [vmem:[%s381 + $0xe4] sm:$0xf]
      %v447 = vld [vmem:[%s381 + $0xe8] sm:$0xf]
      %v448 = vld [vmem:[%s381 + $0xec] sm:$0xf]
      %v449 = vld [vmem:[%s381 + $0xf0] sm:$0xf]
      %v450 = vld [vmem:[%s381 + $0xf4] sm:$0xf]
      %v451 = vld [vmem:[%s381 + $0xf8] sm:$0xf]
      %v452 = vld [vmem:[%s381 + $0xfc] sm:$0xf]
      %v453 = vld [vmem:[%s381 + $0x100] sm:$0xf]
      %v454 = vld [vmem:[%s381 + $0x104] sm:$0xf]
      %v455 = vld [vmem:[%s381 + $0x108] sm:$0xf]
      %v456 = vld [vmem:[%s381 + $0x10c] sm:$0xf]
      %v457 = vld [vmem:[%s381 + $0x110] sm:$0xf]
      %v458 = vld [vmem:[%s381 + $0x114] sm:$0xf]
      %v459 = vld [vmem:[%s381 + $0x118] sm:$0xf]
      %v460 = vld [vmem:[%s381 + $0x11c] sm:$0xf]
      %v461 = vld [vmem:[%s381 + $0x120] sm:$0xf]
      %v462 = vld [vmem:[%s381 + $0x124] sm:$0xf]
      %v463 = vld [vmem:[%s381 + $0x128] sm:$0xf]
      %v464 = vld [vmem:[%s381 + $0x12c] sm:$0xf]
      %v465 = vld [vmem:[%s381 + $0x130] sm:$0xf]
      %v466 = vld [vmem:[%s381 + $0x134] sm:$0xf]
      %v467 = vld [vmem:[%s381 + $0x138] sm:$0xf]
      %v468 = vld [vmem:[%s381 + $0x13c] sm:$0xf]
      %v469 = vld [vmem:[%s381 + $0x140] sm:$0xf]
      %v470 = vld [vmem:[%s381 + $0x144] sm:$0xf]
      %v471 = vld [vmem:[%s381 + $0x148] sm:$0xf]
      %v472 = vld [vmem:[%s381 + $0x14c] sm:$0xf]
      %v473 = vld [vmem:[%s381 + $0x150] sm:$0xf]
      %v474 = vld [vmem:[%s381 + $0x154] sm:$0xf]
      %v475 = vld [vmem:[%s381 + $0x158] sm:$0xf]
      %v476 = vld [vmem:[%s381 + $0x15c] sm:$0xf]
      %v477 = vld [vmem:[%s381 + $0x160] sm:$0xf]
      %v478 = vld [vmem:[%s381 + $0x164] sm:$0xf]
      %v479 = vld [vmem:[%s381 + $0x168] sm:$0xf]
      %v480 = vld [vmem:[%s381 + $0x16c] sm:$0xf]
      %v481 = vld [vmem:[%s381 + $0x170] sm:$0xf]
      %v482 = vld [vmem:[%s381 + $0x174] sm:$0xf]
      %v483 = vld [vmem:[%s381 + $0x178] sm:$0xf]
      %v484 = vld [vmem:[%s381 + $0x17c] sm:$0xf]
      %v485 = vld [vmem:[%s381 + $0x180] sm:$0xf]
      %v486 = vld [vmem:[%s381 + $0x184] sm:$0xf]
      %v487 = vld [vmem:[%s381 + $0x188] sm:$0xf]
      %v488 = vld [vmem:[%s381 + $0x18c] sm:$0xf]
      %v489 = vld [vmem:[%s381 + $0x190] sm:$0xf]
      %v490 = vld [vmem:[%s381 + $0x194] sm:$0xf]
      %v491 = vld [vmem:[%s381 + $0x198] sm:$0xf]
      %v492 = vld [vmem:[%s381 + $0x19c] sm:$0xf]
      %v493 = vld [vmem:[%s381 + $0x1a0] sm:$0xf]
      %v494 = vld [vmem:[%s381 + $0x1a4] sm:$0xf]
      %v495 = vld [vmem:[%s381 + $0x1a8] sm:$0xf]
      %v496 = vld [vmem:[%s381 + $0x1ac] sm:$0xf]
      %v497 = vld [vmem:[%s381 + $0x1b0] sm:$0xf]
      %v498 = vld [vmem:[%s381 + $0x1b4] sm:$0xf]
      %v499 = vld [vmem:[%s381 + $0x1b8] sm:$0xf]
      %v500 = vld [vmem:[%s381 + $0x1bc] sm:$0xf]
      %v501 = vld [vmem:[%s381 + $0x1c0] sm:$0xf]
      %v502 = vld [vmem:[%s381 + $0x1c4] sm:$0xf]
      %v503 = vld [vmem:[%s381 + $0x1c8] sm:$0xf]
      %v504 = vld [vmem:[%s381 + $0x1cc] sm:$0xf]
      %v505 = vld [vmem:[%s381 + $0x1d0] sm:$0xf]
      %v506 = vld [vmem:[%s381 + $0x1d4] sm:$0xf]
      %v507 = vld [vmem:[%s381 + $0x1d8] sm:$0xf]
      %v508 = vld [vmem:[%s381 + $0x1dc] sm:$0xf]
      %v509 = vld [vmem:[%s381 + $0x1e0] sm:$0xf]
      %v510 = vld [vmem:[%s381 + $0x1e4] sm:$0xf]
      %v511 = vld [vmem:[%s381 + $0x1e8] sm:$0xf]
      %v512 = vld [vmem:[%s381 + $0x1ec] sm:$0xf]
      %v513 = vld [vmem:[%s381 + $0x1f0] sm:$0xf]
      %v514 = vld [vmem:[%s381 + $0x1f4] sm:$0xf]
      %v515 = vld [vmem:[%s381 + $0x1f8] sm:$0xf]
      %v516 = vld [vmem:[%s381 + $0x1fc] sm:$0xf]
      %v517 = vld [vmem:[%s381 + $0x200] sm:$0xf]
      %v518 = vld [vmem:[%s381 + $0x204] sm:$0xf]
      %v519 = vld [vmem:[%s381 + $0x208] sm:$0xf]
      %v520 = vld [vmem:[%s381 + $0x20c] sm:$0xf]
      %v521 = vld [vmem:[%s1] sm:$0x1]
      %v654 = vunpack.c.l.b16 %v389
      %v655 = vunpack.c.l.b16 %v390
      %v656 = vunpack.c.l.b16 %v391
      %v657 = vunpack.c.l.b16 %v392
      %v658 = vunpack.c.l.b16 %v393
      %v659 = vunpack.c.l.b16 %v394
      %v660 = vunpack.c.l.b16 %v395
      %v661 = vunpack.c.l.b16 %v396
      %v662 = vunpack.c.l.b16 %v397
      %v663 = vunpack.c.l.b16 %v398
      %v664 = vunpack.c.l.b16 %v399
      %v665 = vunpack.c.l.b16 %v400
      %v666 = vunpack.c.l.b16 %v401
      %v667 = vunpack.c.l.b16 %v402
      %v668 = vunpack.c.l.b16 %v403
      %v669 = vunpack.c.l.b16 %v404
      %v670 = vunpack.c.l.b16 %v405
      %v671 = vunpack.c.l.b16 %v406
      %v672 = vunpack.c.l.b16 %v407
      %v673 = vunpack.c.l.b16 %v408
      %v674 = vunpack.c.l.b16 %v409
      %v675 = vunpack.c.l.b16 %v410
      %v676 = vunpack.c.l.b16 %v411
      %v677 = vunpack.c.l.b16 %v412
      %v678 = vunpack.c.l.b16 %v413
      %v679 = vunpack.c.l.b16 %v414
      %v680 = vunpack.c.l.b16 %v415
      %v681 = vunpack.c.l.b16 %v416
      %v682 = vunpack.c.l.b16 %v417
      %v683 = vunpack.c.l.b16 %v418
      %v684 = vunpack.c.l.b16 %v419
      %v685 = vunpack.c.l.b16 %v420
      %v686 = vunpack.c.l.b16 %v421
      %v687 = vunpack.c.l.b16 %v422
      %v688 = vunpack.c.l.b16 %v423
      %v689 = vunpack.c.l.b16 %v424
      %v690 = vunpack.c.l.b16 %v425
      %v691 = vunpack.c.l.b16 %v426
      %v692 = vunpack.c.l.b16 %v427
      %v693 = vunpack.c.l.b16 %v428
      %v694 = vunpack.c.l.b16 %v429
      %v695 = vunpack.c.l.b16 %v430
      %v696 = vunpack.c.l.b16 %v431
      %v697 = vunpack.c.l.b16 %v432
      %v698 = vunpack.c.l.b16 %v433
      %v699 = vunpack.c.l.b16 %v434
      %v700 = vunpack.c.l.b16 %v435
      %v701 = vunpack.c.l.b16 %v436
      %v702 = vunpack.c.l.b16 %v437
      %v703 = vunpack.c.l.b16 %v438
      %v704 = vunpack.c.l.b16 %v439
      %v705 = vunpack.c.l.b16 %v440
      %v706 = vunpack.c.l.b16 %v441
      %v707 = vunpack.c.l.b16 %v442
      %v708 = vunpack.c.l.b16 %v443
      %v709 = vunpack.c.l.b16 %v444
      %v710 = vunpack.c.l.b16 %v445
      %v711 = vunpack.c.l.b16 %v446
      %v712 = vunpack.c.l.b16 %v447
      %v713 = vunpack.c.l.b16 %v448
      %v714 = vunpack.c.l.b16 %v449
      %v715 = vunpack.c.l.b16 %v450
      %v716 = vunpack.c.l.b16 %v451
      %v717 = vunpack.c.l.b16 %v452
      %v718 = vunpack.c.l.b16 %v453
      %v719 = vunpack.c.l.b16 %v454
      %v720 = vunpack.c.l.b16 %v455
      %v721 = vunpack.c.l.b16 %v456
      %v722 = vunpack.c.l.b16 %v457
      %v723 = vunpack.c.l.b16 %v458
      %v724 = vunpack.c.l.b16 %v459
      %v725 = vunpack.c.l.b16 %v460
      %v726 = vunpack.c.l.b16 %v461
      %v727 = vunpack.c.l.b16 %v462
      %v728 = vunpack.c.l.b16 %v463
      %v729 = vunpack.c.l.b16 %v464
      %v730 = vunpack.c.l.b16 %v465
      %v731 = vunpack.c.l.b16 %v466
      %v732 = vunpack.c.l.b16 %v467
      %v733 = vunpack.c.l.b16 %v468
      %v734 = vunpack.c.l.b16 %v469
      %v735 = vunpack.c.l.b16 %v470
      %v736 = vunpack.c.l.b16 %v471
      %v737 = vunpack.c.l.b16 %v472
      %v738 = vunpack.c.l.b16 %v473
      %v739 = vunpack.c.l.b16 %v474
      %v740 = vunpack.c.l.b16 %v475
      %v741 = vunpack.c.l.b16 %v476
      %v742 = vunpack.c.l.b16 %v477
      %v743 = vunpack.c.l.b16 %v478
      %v744 = vunpack.c.l.b16 %v479
      %v745 = vunpack.c.l.b16 %v480
      %v746 = vunpack.c.l.b16 %v481
      %v747 = vunpack.c.l.b16 %v482
      %v748 = vunpack.c.l.b16 %v483
      %v749 = vunpack.c.l.b16 %v484
      %v750 = vunpack.c.l.b16 %v485
      %v751 = vunpack.c.l.b16 %v486
      %v752 = vunpack.c.l.b16 %v487
      %v753 = vunpack.c.l.b16 %v488
      %v754 = vunpack.c.l.b16 %v489
      %v755 = vunpack.c.l.b16 %v490
      %v756 = vunpack.c.l.b16 %v491
      %v757 = vunpack.c.l.b16 %v492
      %v758 = vunpack.c.l.b16 %v493
      %v759 = vunpack.c.l.b16 %v494
      %v760 = vunpack.c.l.b16 %v495
      %v761 = vunpack.c.l.b16 %v496
      %v762 = vunpack.c.l.b16 %v497
      %v763 = vunpack.c.l.b16 %v498
      %v764 = vunpack.c.l.b16 %v499
      %v765 = vunpack.c.l.b16 %v500
      %v766 = vunpack.c.l.b16 %v501
      %v767 = vunpack.c.l.b16 %v502
      %v768 = vunpack.c.l.b16 %v503
      %v769 = vunpack.c.l.b16 %v504
      %v770 = vunpack.c.l.b16 %v505
      %v771 = vunpack.c.l.b16 %v506
      %v772 = vunpack.c.l.b16 %v507
      %v773 = vunpack.c.l.b16 %v508
      %v774 = vunpack.c.l.b16 %v509
      %v775 = vunpack.c.l.b16 %v510
      %v776 = vunpack.c.l.b16 %v511
      %v777 = vunpack.c.l.b16 %v512
      %v778 = vunpack.c.l.b16 %v513
      %v779 = vunpack.c.l.b16 %v514
      %v780 = vunpack.c.l.b16 %v515
      %v781 = vunpack.c.l.b16 %v516
      %v782 = vunpack.c.l.b16 %v517
      %v783 = vunpack.c.l.b16 %v518
      %v784 = vunpack.c.l.b16 %v519
      %v785 = vunpack.c.l.b16 %v520
      %v786 = vpack.c.b16 %v655, %v654
      %v787 = vpack.c.b16 %v657, %v656
      %v788 = vpack.c.b16 %v659, %v658
      %v789 = vpack.c.b16 %v661, %v660
      %v790 = vpack.c.b16 %v663, %v662
      %v791 = vpack.c.b16 %v665, %v664
      %v792 = vpack.c.b16 %v667, %v666
      %v793 = vpack.c.b16 %v669, %v668
      %v794 = vpack.c.b16 %v671, %v670
      %v795 = vpack.c.b16 %v673, %v672
      %v796 = vpack.c.b16 %v675, %v674
      %v797 = vpack.c.b16 %v677, %v676
      %v798 = vpack.c.b16 %v679, %v678
      %v799 = vpack.c.b16 %v681, %v680
      %v800 = vpack.c.b16 %v683, %v682
      %v801 = vpack.c.b16 %v685, %v684
      %v802 = vpack.c.b16 %v687, %v686
      %v803 = vpack.c.b16 %v689, %v688
      %v804 = vpack.c.b16 %v691, %v690
      %v805 = vpack.c.b16 %v693, %v692
      %v806 = vpack.c.b16 %v695, %v694
      %v807 = vpack.c.b16 %v697, %v696
      %v808 = vpack.c.b16 %v699, %v698
      %v809 = vpack.c.b16 %v701, %v700
      %v810 = vpack.c.b16 %v703, %v702
      %v811 = vpack.c.b16 %v705, %v704
      %v812 = vpack.c.b16 %v707, %v706
      %v813 = vpack.c.b16 %v709, %v708
      %v814 = vpack.c.b16 %v711, %v710
      %v815 = vpack.c.b16 %v713, %v712
      %v816 = vpack.c.b16 %v715, %v714
      %v817 = vpack.c.b16 %v717, %v716
      %v818 = vpack.c.b16 %v719, %v718
      %v819 = vpack.c.b16 %v721, %v720
      %v820 = vpack.c.b16 %v723, %v722
      %v821 = vpack.c.b16 %v725, %v724
      %v822 = vpack.c.b16 %v727, %v726
      %v823 = vpack.c.b16 %v729, %v728
      %v824 = vpack.c.b16 %v731, %v730
      %v825 = vpack.c.b16 %v733, %v732
      %v826 = vpack.c.b16 %v735, %v734
      %v827 = vpack.c.b16 %v737, %v736
      %v828 = vpack.c.b16 %v739, %v738
      %v829 = vpack.c.b16 %v741, %v740
      %v830 = vpack.c.b16 %v743, %v742
      %v831 = vpack.c.b16 %v745, %v744
      %v832 = vpack.c.b16 %v747, %v746
      %v833 = vpack.c.b16 %v749, %v748
      %v834 = vpack.c.b16 %v751, %v750
      %v835 = vpack.c.b16 %v753, %v752
      %v836 = vpack.c.b16 %v755, %v754
      %v837 = vpack.c.b16 %v757, %v756
      %v838 = vpack.c.b16 %v759, %v758
      %v839 = vpack.c.b16 %v761, %v760
      %v840 = vpack.c.b16 %v763, %v762
      %v841 = vpack.c.b16 %v765, %v764
      %v842 = vpack.c.b16 %v767, %v766
      %v843 = vpack.c.b16 %v769, %v768
      %v844 = vpack.c.b16 %v771, %v770
      %v845 = vpack.c.b16 %v773, %v772
      %v846 = vpack.c.b16 %v775, %v774
      %v847 = vpack.c.b16 %v777, %v776
      %v848 = vpack.c.b16 %v779, %v778
      %v849 = vpack.c.b16 %v781, %v780
      %v850 = vpack.c.b16 %v783, %v782
      %v851 = vpack.c.b16 %v785, %v784
      %vm852 = vcmask 15360
      %v854 = vsel %vm852, %v786, 0
      %v857 = vsel %vm852, %v787, 0
      %v860 = vsel %vm852, %v788, 0
      %v863 = vsel %vm852, %v789, 0
      %v866 = vsel %vm852, %v790, 0
      %v869 = vsel %vm852, %v791, 0
      %v872 = vsel %vm852, %v792, 0
      %v875 = vsel %vm852, %v793, 0
      %v878 = vsel %vm852, %v794, 0
      %v881 = vsel %vm852, %v795, 0
      %v884 = vsel %vm852, %v796, 0
      %v887 = vsel %vm852, %v797, 0
      %v890 = vsel %vm852, %v798, 0
      %v893 = vsel %vm852, %v799, 0
      %v896 = vsel %vm852, %v800, 0
      %v899 = vsel %vm852, %v801, 0
      %v902 = vsel %vm852, %v802, 0
      %v905 = vsel %vm852, %v803, 0
      %v908 = vsel %vm852, %v804, 0
      %v911 = vsel %vm852, %v805, 0
      %v914 = vsel %vm852, %v806, 0
      %v917 = vsel %vm852, %v807, 0
      %v920 = vsel %vm852, %v808, 0
      %v923 = vsel %vm852, %v809, 0
      %v926 = vsel %vm852, %v810, 0
      %v929 = vsel %vm852, %v811, 0
      %v932 = vsel %vm852, %v812, 0
      %v935 = vsel %vm852, %v813, 0
      %v938 = vsel %vm852, %v814, 0
      %v941 = vsel %vm852, %v815, 0
      %v944 = vsel %vm852, %v816, 0
      %v947 = vsel %vm852, %v817, 0
      %v950 = vsel %vm852, %v818, 0
      %v953 = vsel %vm852, %v819, 0
      %v956 = vsel %vm852, %v820, 0
      %v959 = vsel %vm852, %v821, 0
      %v962 = vsel %vm852, %v822, 0
      %v965 = vsel %vm852, %v823, 0
      %v968 = vsel %vm852, %v824, 0
      %v971 = vsel %vm852, %v825, 0
      %v974 = vsel %vm852, %v826, 0
      %v977 = vsel %vm852, %v827, 0
      %v980 = vsel %vm852, %v828, 0
      %v983 = vsel %vm852, %v829, 0
      %v986 = vsel %vm852, %v830, 0
      %v989 = vsel %vm852, %v831, 0
      %v992 = vsel %vm852, %v832, 0
      %v995 = vsel %vm852, %v833, 0
      %v998 = vsel %vm852, %v834, 0
      %v1001 = vsel %vm852, %v835, 0
      %v1004 = vsel %vm852, %v836, 0
      %v1007 = vsel %vm852, %v837, 0
      %v1010 = vsel %vm852, %v838, 0
      %v1013 = vsel %vm852, %v839, 0
      %v1016 = vsel %vm852, %v840, 0
      %v1019 = vsel %vm852, %v841, 0
      %v1022 = vsel %vm852, %v842, 0
      %v1025 = vsel %vm852, %v843, 0
      %v1028 = vsel %vm852, %v844, 0
      %v1031 = vsel %vm852, %v845, 0
      %v1034 = vsel %vm852, %v846, 0
      %v1037 = vsel %vm852, %v847, 0
      %v1040 = vsel %vm852, %v848, 0
      %v1043 = vsel %vm852, %v849, 0
      %v1046 = vsel %vm852, %v850, 0
      %v1049 = vsel %vm852, %v851, 0
      %vm1051 = vcmask 1040384
      %v1053 = vsel %vm1051, %v521, 0
      %1055 = vmatprep.subr.bf16.mxu0 0
      %1056 = vmatpush1.bf16.msra.mxu0 0
      %1057 = vmatprep.subr.bf16.mxu0 0
      %1058 = vmatpush1.bf16.msra.mxu0 0
      %1059 = vmatprep.subr.bf16.mxu0 0
      %1060 = vmatpush1.bf16.msra.mxu0 0
      %1061 = vmatprep.subr.bf16.mxu0 0
      %1062 = vmatpush1.bf16.msra.mxu0 0
      %1063 = vmatprep.subr.bf16.mxu0 0
      %1064 = vmatpush1.bf16.msra.mxu0 0
      %1065 = vmatprep.subr.bf16.mxu0 0
      %1066 = vmatpush1.bf16.msra.mxu0 0
      %1067 = vmatprep.subr.bf16.mxu0 0
      %1068 = vmatpush1.bf16.msra.mxu0 0
      %1069 = vmatprep.subr.bf16.mxu0 0
      %1070 = vmatpush1.bf16.msra.mxu0 %v1053
      %1071 = vmatprep.subr.bf16.mxu0 0
      %1072 = vmatpush2.bf16.msra.mxu0 0
      %1073 = vmatprep.subr.bf16.mxu0 0
      %1074 = vmatpush2.bf16.msra.mxu0 0
      %1075 = vmatprep.subr.bf16.mxu0 0
      %1076 = vmatpush2.bf16.msra.mxu0 0
      %1077 = vmatprep.subr.bf16.mxu0 0
      %1078 = vmatpush2.bf16.msra.mxu0 0
      %1079 = vmatprep.subr.bf16.mxu0 0
      %1080 = vmatpush2.bf16.msra.mxu0 0
      %1081 = vmatprep.subr.bf16.mxu0 0
      %1082 = vmatpush2.bf16.msra.mxu0 0
      %1083 = vmatprep.subr.bf16.mxu0 0
      %1084 = vmatpush2.bf16.msra.mxu0 0
      %1085 = vmatprep.subr.bf16.mxu0 0
      %1086 = vmatpush2.bf16.msra.mxu0 0
      %1087 = vmatprep.mubr.bf16.mxu0 0
      %1088 = vmatmul.mubr.bf16.gmra.mxu0 %v854
      %v1089 = vpop.f32.mrf.mxu0
      %v1090 = vadd.f32 0.0, %v1089
      %v1091 = vpop.f32.mrf.mxu0
      %v1092 = vpop.f32.mrf.mxu0
      %v1093 = vadd.f32 0.0, %v1092
      %v1094 = vpop.f32.mrf.mxu0
      %1095 = vmatprep.mubr.bf16.mxu0 0
      %1096 = vmatmul.mubr.bf16.gmra.mxu0 %v857
      %v1097 = vpop.f32.mrf.mxu0
      %v1098 = vadd.f32 0.0, %v1097
      %v1099 = vpop.f32.mrf.mxu0
      %v1100 = vpop.f32.mrf.mxu0
      %v1101 = vadd.f32 0.0, %v1100
      %v1102 = vpop.f32.mrf.mxu0
      %1103 = vmatprep.mubr.bf16.mxu0 0
      %1104 = vmatmul.mubr.bf16.gmra.mxu0 %v860
      %v1105 = vpop.f32.mrf.mxu0
      %v1106 = vadd.f32 0.0, %v1105
      %v1107 = vpop.f32.mrf.mxu0
      %v1108 = vpop.f32.mrf.mxu0
      %v1109 = vadd.f32 0.0, %v1108
      %v1110 = vpop.f32.mrf.mxu0
      %1111 = vmatprep.mubr.bf16.mxu0 0
      %1112 = vmatmul.mubr.bf16.gmra.mxu0 %v863
      %v1113 = vpop.f32.mrf.mxu0
      %v1114 = vadd.f32 0.0, %v1113
      %v1115 = vpop.f32.mrf.mxu0
      %v1116 = vpop.f32.mrf.mxu0
      %v1117 = vadd.f32 0.0, %v1116
      %v1118 = vpop.f32.mrf.mxu0
      %1119 = vmatprep.mubr.bf16.mxu0 0
      %1120 = vmatmul.mubr.bf16.gmra.mxu0 %v866
      %v1121 = vpop.f32.mrf.mxu0
      %v1122 = vadd.f32 0.0, %v1121
      %v1123 = vpop.f32.mrf.mxu0
      %v1124 = vpop.f32.mrf.mxu0
      %v1125 = vadd.f32 0.0, %v1124
      %v1126 = vpop.f32.mrf.mxu0
      %1127 = vmatprep.mubr.bf16.mxu0 0
      %1128 = vmatmul.mubr.bf16.gmra.mxu0 %v869
      %v1129 = vpop.f32.mrf.mxu0
      %v1130 = vadd.f32 0.0, %v1129
      %v1131 = vpop.f32.mrf.mxu0
      %v1132 = vpop.f32.mrf.mxu0
      %v1133 = vadd.f32 0.0, %v1132
      %v1134 = vpop.f32.mrf.mxu0
      %1135 = vmatprep.mubr.bf16.mxu0 0
      %1136 = vmatmul.mubr.bf16.gmra.mxu0 %v872
      %v1137 = vpop.f32.mrf.mxu0
      %v1138 = vadd.f32 0.0, %v1137
      %v1139 = vpop.f32.mrf.mxu0
      %v1140 = vpop.f32.mrf.mxu0
      %v1141 = vadd.f32 0.0, %v1140
      %v1142 = vpop.f32.mrf.mxu0
      %1143 = vmatprep.mubr.bf16.mxu0 0
      %1144 = vmatmul.mubr.bf16.gmra.mxu0 %v875
      %v1145 = vpop.f32.mrf.mxu0
      %v1146 = vadd.f32 0.0, %v1145
      %v1147 = vpop.f32.mrf.mxu0
      %v1148 = vpop.f32.mrf.mxu0
      %v1149 = vadd.f32 0.0, %v1148
      %v1150 = vpop.f32.mrf.mxu0
      %1151 = vmatprep.mubr.bf16.mxu0 0
      %1152 = vmatmul.mubr.bf16.gmra.mxu0 %v878
      %v1153 = vpop.f32.mrf.mxu0
      %v1154 = vadd.f32 0.0, %v1153
      %v1155 = vpop.f32.mrf.mxu0
      %v1156 = vpop.f32.mrf.mxu0
      %v1157 = vadd.f32 0.0, %v1156
      %v1158 = vpop.f32.mrf.mxu0
      %1159 = vmatprep.mubr.bf16.mxu0 0
      %1160 = vmatmul.mubr.bf16.gmra.mxu0 %v881
      %v1161 = vpop.f32.mrf.mxu0
      %v1162 = vadd.f32 0.0, %v1161
      %v1163 = vpop.f32.mrf.mxu0
      %v1164 = vpop.f32.mrf.mxu0
      %v1165 = vadd.f32 0.0, %v1164
      %v1166 = vpop.f32.mrf.mxu0
      %1167 = vmatprep.mubr.bf16.mxu0 0
      %1168 = vmatmul.mubr.bf16.gmra.mxu0 %v884
      %v1169 = vpop.f32.mrf.mxu0
      %v1170 = vadd.f32 0.0, %v1169
      %v1171 = vpop.f32.mrf.mxu0
      %v1172 = vpop.f32.mrf.mxu0
      %v1173 = vadd.f32 0.0, %v1172
      %v1174 = vpop.f32.mrf.mxu0
      %1175 = vmatprep.mubr.bf16.mxu0 0
      %1176 = vmatmul.mubr.bf16.gmra.mxu0 %v887
      %v1177 = vpop.f32.mrf.mxu0
      %v1178 = vadd.f32 0.0, %v1177
      %v1179 = vpop.f32.mrf.mxu0
      %v1180 = vpop.f32.mrf.mxu0
      %v1181 = vadd.f32 0.0, %v1180
      %v1182 = vpop.f32.mrf.mxu0
      %1183 = vmatprep.mubr.bf16.mxu0 0
      %1184 = vmatmul.mubr.bf16.gmra.mxu0 %v890
      %v1185 = vpop.f32.mrf.mxu0
      %v1186 = vadd.f32 0.0, %v1185
      %v1187 = vpop.f32.mrf.mxu0
      %v1188 = vpop.f32.mrf.mxu0
      %v1189 = vadd.f32 0.0, %v1188
      %v1190 = vpop.f32.mrf.mxu0
      %1191 = vmatprep.mubr.bf16.mxu0 0
      %1192 = vmatmul.mubr.bf16.gmra.mxu0 %v893
      %v1193 = vpop.f32.mrf.mxu0
      %v1194 = vadd.f32 0.0, %v1193
      %v1195 = vpop.f32.mrf.mxu0
      %v1196 = vpop.f32.mrf.mxu0
      %v1197 = vadd.f32 0.0, %v1196
      %v1198 = vpop.f32.mrf.mxu0
      %1199 = vmatprep.mubr.bf16.mxu0 0
      %1200 = vmatmul.mubr.bf16.gmra.mxu0 %v896
      %v1201 = vpop.f32.mrf.mxu0
      %v1202 = vadd.f32 0.0, %v1201
      %v1203 = vpop.f32.mrf.mxu0
      %v1204 = vpop.f32.mrf.mxu0
      %v1205 = vadd.f32 0.0, %v1204
      %v1206 = vpop.f32.mrf.mxu0
      %1207 = vmatprep.mubr.bf16.mxu0 0
      %1208 = vmatmul.mubr.bf16.gmra.mxu0 %v899
      %v1209 = vpop.f32.mrf.mxu0
      %v1210 = vadd.f32 0.0, %v1209
      %v1211 = vpop.f32.mrf.mxu0
      %v1212 = vpop.f32.mrf.mxu0
      %v1213 = vadd.f32 0.0, %v1212
      %v1214 = vpop.f32.mrf.mxu0
      %1215 = vmatprep.mubr.bf16.mxu0 0
      %1216 = vmatmul.mubr.bf16.gmra.mxu0 %v902
      %v1217 = vpop.f32.mrf.mxu0
      %v1218 = vadd.f32 0.0, %v1217
      %v1219 = vpop.f32.mrf.mxu0
      %v1220 = vpop.f32.mrf.mxu0
      %v1221 = vadd.f32 0.0, %v1220
      %v1222 = vpop.f32.mrf.mxu0
      %1223 = vmatprep.mubr.bf16.mxu0 0
      %1224 = vmatmul.mubr.bf16.gmra.mxu0 %v905
      %v1225 = vpop.f32.mrf.mxu0
      %v1226 = vadd.f32 0.0, %v1225
      %v1227 = vpop.f32.mrf.mxu0
      %v1228 = vpop.f32.mrf.mxu0
      %v1229 = vadd.f32 0.0, %v1228
      %v1230 = vpop.f32.mrf.mxu0
      %1231 = vmatprep.mubr.bf16.mxu0 0
      %1232 = vmatmul.mubr.bf16.gmra.mxu0 %v908
      %v1233 = vpop.f32.mrf.mxu0
      %v1234 = vadd.f32 0.0, %v1233
      %v1235 = vpop.f32.mrf.mxu0
      %v1236 = vpop.f32.mrf.mxu0
      %v1237 = vadd.f32 0.0, %v1236
      %v1238 = vpop.f32.mrf.mxu0
      %1239 = vmatprep.mubr.bf16.mxu0 0
      %1240 = vmatmul.mubr.bf16.gmra.mxu0 %v911
      %v1241 = vpop.f32.mrf.mxu0
      %v1242 = vadd.f32 0.0, %v1241
      %v1243 = vpop.f32.mrf.mxu0
      %v1244 = vpop.f32.mrf.mxu0
      %v1245 = vadd.f32 0.0, %v1244
      %v1246 = vpop.f32.mrf.mxu0
      %1247 = vmatprep.mubr.bf16.mxu0 0
      %1248 = vmatmul.mubr.bf16.gmra.mxu0 %v914
      %v1249 = vpop.f32.mrf.mxu0
      %v1250 = vadd.f32 0.0, %v1249
      %v1251 = vpop.f32.mrf.mxu0
      %v1252 = vpop.f32.mrf.mxu0
      %v1253 = vadd.f32 0.0, %v1252
      %v1254 = vpop.f32.mrf.mxu0
      %1255 = vmatprep.mubr.bf16.mxu0 0
      %1256 = vmatmul.mubr.bf16.gmra.mxu0 %v917
      %v1257 = vpop.f32.mrf.mxu0
      %v1258 = vadd.f32 0.0, %v1257
      %v1259 = vpop.f32.mrf.mxu0
      %v1260 = vpop.f32.mrf.mxu0
      %v1261 = vadd.f32 0.0, %v1260
      %v1262 = vpop.f32.mrf.mxu0
      %1263 = vmatprep.mubr.bf16.mxu0 0
      %1264 = vmatmul.mubr.bf16.gmra.mxu0 %v920
      %v1265 = vpop.f32.mrf.mxu0
      %v1266 = vadd.f32 0.0, %v1265
      %v1267 = vpop.f32.mrf.mxu0
      %v1268 = vpop.f32.mrf.mxu0
      %v1269 = vadd.f32 0.0, %v1268
      %v1270 = vpop.f32.mrf.mxu0
      %1271 = vmatprep.mubr.bf16.mxu0 0
      %1272 = vmatmul.mubr.bf16.gmra.mxu0 %v923
      %v1273 = vpop.f32.mrf.mxu0
      %v1274 = vadd.f32 0.0, %v1273
      %v1275 = vpop.f32.mrf.mxu0
      %v1276 = vpop.f32.mrf.mxu0
      %v1277 = vadd.f32 0.0, %v1276
      %v1278 = vpop.f32.mrf.mxu0
      %1279 = vmatprep.mubr.bf16.mxu0 0
      %1280 = vmatmul.mubr.bf16.gmra.mxu0 %v926
      %v1281 = vpop.f32.mrf.mxu0
      %v1282 = vadd.f32 0.0, %v1281
      %v1283 = vpop.f32.mrf.mxu0
      %v1284 = vpop.f32.mrf.mxu0
      %v1285 = vadd.f32 0.0, %v1284
      %v1286 = vpop.f32.mrf.mxu0
      %1287 = vmatprep.mubr.bf16.mxu0 0
      %1288 = vmatmul.mubr.bf16.gmra.mxu0 %v929
      %v1289 = vpop.f32.mrf.mxu0
      %v1290 = vadd.f32 0.0, %v1289
      %v1291 = vpop.f32.mrf.mxu0
      %v1292 = vpop.f32.mrf.mxu0
      %v1293 = vadd.f32 0.0, %v1292
      %v1294 = vpop.f32.mrf.mxu0
      %1295 = vmatprep.mubr.bf16.mxu0 0
      %1296 = vmatmul.mubr.bf16.gmra.mxu0 %v932
      %v1297 = vpop.f32.mrf.mxu0
      %v1298 = vadd.f32 0.0, %v1297
      %v1299 = vpop.f32.mrf.mxu0
      %v1300 = vpop.f32.mrf.mxu0
      %v1301 = vadd.f32 0.0, %v1300
      %v1302 = vpop.f32.mrf.mxu0
      %1303 = vmatprep.mubr.bf16.mxu0 0
      %1304 = vmatmul.mubr.bf16.gmra.mxu0 %v935
      %v1305 = vpop.f32.mrf.mxu0
      %v1306 = vadd.f32 0.0, %v1305
      %v1307 = vpop.f32.mrf.mxu0
      %v1308 = vpop.f32.mrf.mxu0
      %v1309 = vadd.f32 0.0, %v1308
      %v1310 = vpop.f32.mrf.mxu0
      %1311 = vmatprep.mubr.bf16.mxu0 0
      %1312 = vmatmul.mubr.bf16.gmra.mxu0 %v938
      %v1313 = vpop.f32.mrf.mxu0
      %v1314 = vadd.f32 0.0, %v1313
      %v1315 = vpop.f32.mrf.mxu0
      %v1316 = vpop.f32.mrf.mxu0
      %v1317 = vadd.f32 0.0, %v1316
      %v1318 = vpop.f32.mrf.mxu0
      %1319 = vmatprep.mubr.bf16.mxu0 0
      %1320 = vmatmul.mubr.bf16.gmra.mxu0 %v941
      %v1321 = vpop.f32.mrf.mxu0
      %v1322 = vadd.f32 0.0, %v1321
      %v1323 = vpop.f32.mrf.mxu0
      %v1324 = vpop.f32.mrf.mxu0
      %v1325 = vadd.f32 0.0, %v1324
      %v1326 = vpop.f32.mrf.mxu0
      %1327 = vmatprep.mubr.bf16.mxu0 0
      %1328 = vmatmul.mubr.bf16.gmra.mxu0 %v944
      %v1329 = vpop.f32.mrf.mxu0
      %v1330 = vadd.f32 0.0, %v1329
      %v1331 = vpop.f32.mrf.mxu0
      %v1332 = vpop.f32.mrf.mxu0
      %v1333 = vadd.f32 0.0, %v1332
      %v1334 = vpop.f32.mrf.mxu0
      %1335 = vmatprep.mubr.bf16.mxu0 0
      %1336 = vmatmul.mubr.bf16.gmra.mxu0 %v947
      %v1337 = vpop.f32.mrf.mxu0
      %v1338 = vadd.f32 0.0, %v1337
      %v1339 = vpop.f32.mrf.mxu0
      %v1340 = vpop.f32.mrf.mxu0
      %v1341 = vadd.f32 0.0, %v1340
      %v1342 = vpop.f32.mrf.mxu0
      %1343 = vmatprep.mubr.bf16.mxu0 0
      %1344 = vmatmul.mubr.bf16.gmra.mxu0 %v950
      %v1345 = vpop.f32.mrf.mxu0
      %v1346 = vadd.f32 0.0, %v1345
      %v1347 = vpop.f32.mrf.mxu0
      %v1348 = vpop.f32.mrf.mxu0
      %v1349 = vadd.f32 0.0, %v1348
      %v1350 = vpop.f32.mrf.mxu0
      %1351 = vmatprep.mubr.bf16.mxu0 0
      %1352 = vmatmul.mubr.bf16.gmra.mxu0 %v953
      %v1353 = vpop.f32.mrf.mxu0
      %v1354 = vadd.f32 0.0, %v1353
      %v1355 = vpop.f32.mrf.mxu0
      %v1356 = vpop.f32.mrf.mxu0
      %v1357 = vadd.f32 0.0, %v1356
      %v1358 = vpop.f32.mrf.mxu0
      %1359 = vmatprep.mubr.bf16.mxu0 0
      %1360 = vmatmul.mubr.bf16.gmra.mxu0 %v956
      %v1361 = vpop.f32.mrf.mxu0
      %v1362 = vadd.f32 0.0, %v1361
      %v1363 = vpop.f32.mrf.mxu0
      %v1364 = vpop.f32.mrf.mxu0
      %v1365 = vadd.f32 0.0, %v1364
      %v1366 = vpop.f32.mrf.mxu0
      %1367 = vmatprep.mubr.bf16.mxu0 0
      %1368 = vmatmul.mubr.bf16.gmra.mxu0 %v959
      %v1369 = vpop.f32.mrf.mxu0
      %v1370 = vadd.f32 0.0, %v1369
      %v1371 = vpop.f32.mrf.mxu0
      %v1372 = vpop.f32.mrf.mxu0
      %v1373 = vadd.f32 0.0, %v1372
      %v1374 = vpop.f32.mrf.mxu0
      %1375 = vmatprep.mubr.bf16.mxu0 0
      %1376 = vmatmul.mubr.bf16.gmra.mxu0 %v962
      %v1377 = vpop.f32.mrf.mxu0
      %v1378 = vadd.f32 0.0, %v1377
      %v1379 = vpop.f32.mrf.mxu0
      %v1380 = vpop.f32.mrf.mxu0
      %v1381 = vadd.f32 0.0, %v1380
      %v1382 = vpop.f32.mrf.mxu0
      %1383 = vmatprep.mubr.bf16.mxu0 0
      %1384 = vmatmul.mubr.bf16.gmra.mxu0 %v965
      %v1385 = vpop.f32.mrf.mxu0
      %v1386 = vadd.f32 0.0, %v1385
      %v1387 = vpop.f32.mrf.mxu0
      %v1388 = vpop.f32.mrf.mxu0
      %v1389 = vadd.f32 0.0, %v1388
      %v1390 = vpop.f32.mrf.mxu0
      %1391 = vmatprep.mubr.bf16.mxu0 0
      %1392 = vmatmul.mubr.bf16.gmra.mxu0 %v968
      %v1393 = vpop.f32.mrf.mxu0
      %v1394 = vadd.f32 0.0, %v1393
      %v1395 = vpop.f32.mrf.mxu0
      %v1396 = vpop.f32.mrf.mxu0
      %v1397 = vadd.f32 0.0, %v1396
      %v1398 = vpop.f32.mrf.mxu0
      %1399 = vmatprep.mubr.bf16.mxu0 0
      %1400 = vmatmul.mubr.bf16.gmra.mxu0 %v971
      %v1401 = vpop.f32.mrf.mxu0
      %v1402 = vadd.f32 0.0, %v1401
      %v1403 = vpop.f32.mrf.mxu0
      %v1404 = vpop.f32.mrf.mxu0
      %v1405 = vadd.f32 0.0, %v1404
      %v1406 = vpop.f32.mrf.mxu0
      %1407 = vmatprep.mubr.bf16.mxu0 0
      %1408 = vmatmul.mubr.bf16.gmra.mxu0 %v974
      %v1409 = vpop.f32.mrf.mxu0
      %v1410 = vadd.f32 0.0, %v1409
      %v1411 = vpop.f32.mrf.mxu0
      %v1412 = vpop.f32.mrf.mxu0
      %v1413 = vadd.f32 0.0, %v1412
      %v1414 = vpop.f32.mrf.mxu0
      %1415 = vmatprep.mubr.bf16.mxu0 0
      %1416 = vmatmul.mubr.bf16.gmra.mxu0 %v977
      %v1417 = vpop.f32.mrf.mxu0
      %v1418 = vadd.f32 0.0, %v1417
      %v1419 = vpop.f32.mrf.mxu0
      %v1420 = vpop.f32.mrf.mxu0
      %v1421 = vadd.f32 0.0, %v1420
      %v1422 = vpop.f32.mrf.mxu0
      %1423 = vmatprep.mubr.bf16.mxu0 0
      %1424 = vmatmul.mubr.bf16.gmra.mxu0 %v980
      %v1425 = vpop.f32.mrf.mxu0
      %v1426 = vadd.f32 0.0, %v1425
      %v1427 = vpop.f32.mrf.mxu0
      %v1428 = vpop.f32.mrf.mxu0
      %v1429 = vadd.f32 0.0, %v1428
      %v1430 = vpop.f32.mrf.mxu0
      %1431 = vmatprep.mubr.bf16.mxu0 0
      %1432 = vmatmul.mubr.bf16.gmra.mxu0 %v983
      %v1433 = vpop.f32.mrf.mxu0
      %v1434 = vadd.f32 0.0, %v1433
      %v1435 = vpop.f32.mrf.mxu0
      %v1436 = vpop.f32.mrf.mxu0
      %v1437 = vadd.f32 0.0, %v1436
      %v1438 = vpop.f32.mrf.mxu0
      %1439 = vmatprep.mubr.bf16.mxu0 0
      %1440 = vmatmul.mubr.bf16.gmra.mxu0 %v986
      %v1441 = vpop.f32.mrf.mxu0
      %v1442 = vadd.f32 0.0, %v1441
      %v1443 = vpop.f32.mrf.mxu0
      %v1444 = vpop.f32.mrf.mxu0
      %v1445 = vadd.f32 0.0, %v1444
      %v1446 = vpop.f32.mrf.mxu0
      %1447 = vmatprep.mubr.bf16.mxu0 0
      %1448 = vmatmul.mubr.bf16.gmra.mxu0 %v989
      %v1449 = vpop.f32.mrf.mxu0
      %v1450 = vadd.f32 0.0, %v1449
      %v1451 = vpop.f32.mrf.mxu0
      %v1452 = vpop.f32.mrf.mxu0
      %v1453 = vadd.f32 0.0, %v1452
      %v1454 = vpop.f32.mrf.mxu0
      %1455 = vmatprep.mubr.bf16.mxu0 0
      %1456 = vmatmul.mubr.bf16.gmra.mxu0 %v992
      %v1457 = vpop.f32.mrf.mxu0
      %v1458 = vadd.f32 0.0, %v1457
      %v1459 = vpop.f32.mrf.mxu0
      %v1460 = vpop.f32.mrf.mxu0
      %v1461 = vadd.f32 0.0, %v1460
      %v1462 = vpop.f32.mrf.mxu0
      %1463 = vmatprep.mubr.bf16.mxu0 0
      %1464 = vmatmul.mubr.bf16.gmra.mxu0 %v995
      %v1465 = vpop.f32.mrf.mxu0
      %v1466 = vadd.f32 0.0, %v1465
      %v1467 = vpop.f32.mrf.mxu0
      %v1468 = vpop.f32.mrf.mxu0
      %v1469 = vadd.f32 0.0, %v1468
      %v1470 = vpop.f32.mrf.mxu0
      %1471 = vmatprep.mubr.bf16.mxu0 0
      %1472 = vmatmul.mubr.bf16.gmra.mxu0 %v998
      %v1473 = vpop.f32.mrf.mxu0
      %v1474 = vadd.f32 0.0, %v1473
      %v1475 = vpop.f32.mrf.mxu0
      %v1476 = vpop.f32.mrf.mxu0
      %v1477 = vadd.f32 0.0, %v1476
      %v1478 = vpop.f32.mrf.mxu0
      %1479 = vmatprep.mubr.bf16.mxu0 0
      %1480 = vmatmul.mubr.bf16.gmra.mxu0 %v1001
      %v1481 = vpop.f32.mrf.mxu0
      %v1482 = vadd.f32 0.0, %v1481
      %v1483 = vpop.f32.mrf.mxu0
      %v1484 = vpop.f32.mrf.mxu0
      %v1485 = vadd.f32 0.0, %v1484
      %v1486 = vpop.f32.mrf.mxu0
      %1487 = vmatprep.mubr.bf16.mxu0 0
      %1488 = vmatmul.mubr.bf16.gmra.mxu0 %v1004
      %v1489 = vpop.f32.mrf.mxu0
      %v1490 = vadd.f32 0.0, %v1489
      %v1491 = vpop.f32.mrf.mxu0
      %v1492 = vpop.f32.mrf.mxu0
      %v1493 = vadd.f32 0.0, %v1492
      %v1494 = vpop.f32.mrf.mxu0
      %1495 = vmatprep.mubr.bf16.mxu0 0
      %1496 = vmatmul.mubr.bf16.gmra.mxu0 %v1007
      %v1497 = vpop.f32.mrf.mxu0
      %v1498 = vadd.f32 0.0, %v1497
      %v1499 = vpop.f32.mrf.mxu0
      %v1500 = vpop.f32.mrf.mxu0
      %v1501 = vadd.f32 0.0, %v1500
      %v1502 = vpop.f32.mrf.mxu0
      %1503 = vmatprep.mubr.bf16.mxu0 0
      %1504 = vmatmul.mubr.bf16.gmra.mxu0 %v1010
      %v1505 = vpop.f32.mrf.mxu0
      %v1506 = vadd.f32 0.0, %v1505
      %v1507 = vpop.f32.mrf.mxu0
      %v1508 = vpop.f32.mrf.mxu0
      %v1509 = vadd.f32 0.0, %v1508
      %v1510 = vpop.f32.mrf.mxu0
      %1511 = vmatprep.mubr.bf16.mxu0 0
      %1512 = vmatmul.mubr.bf16.gmra.mxu0 %v1013
      %v1513 = vpop.f32.mrf.mxu0
      %v1514 = vadd.f32 0.0, %v1513
      %v1515 = vpop.f32.mrf.mxu0
      %v1516 = vpop.f32.mrf.mxu0
      %v1517 = vadd.f32 0.0, %v1516
      %v1518 = vpop.f32.mrf.mxu0
      %1519 = vmatprep.mubr.bf16.mxu0 0
      %1520 = vmatmul.mubr.bf16.gmra.mxu0 %v1016
      %v1521 = vpop.f32.mrf.mxu0
      %v1522 = vadd.f32 0.0, %v1521
      %v1523 = vpop.f32.mrf.mxu0
      %v1524 = vpop.f32.mrf.mxu0
      %v1525 = vadd.f32 0.0, %v1524
      %v1526 = vpop.f32.mrf.mxu0
      %1527 = vmatprep.mubr.bf16.mxu0 0
      %1528 = vmatmul.mubr.bf16.gmra.mxu0 %v1019
      %v1529 = vpop.f32.mrf.mxu0
      %v1530 = vadd.f32 0.0, %v1529
      %v1531 = vpop.f32.mrf.mxu0
      %v1532 = vpop.f32.mrf.mxu0
      %v1533 = vadd.f32 0.0, %v1532
      %v1534 = vpop.f32.mrf.mxu0
      %1535 = vmatprep.mubr.bf16.mxu0 0
      %1536 = vmatmul.mubr.bf16.gmra.mxu0 %v1022
      %v1537 = vpop.f32.mrf.mxu0
      %v1538 = vadd.f32 0.0, %v1537
      %v1539 = vpop.f32.mrf.mxu0
      %v1540 = vpop.f32.mrf.mxu0
      %v1541 = vadd.f32 0.0, %v1540
      %v1542 = vpop.f32.mrf.mxu0
      %1543 = vmatprep.mubr.bf16.mxu0 0
      %1544 = vmatmul.mubr.bf16.gmra.mxu0 %v1025
      %v1545 = vpop.f32.mrf.mxu0
      %v1546 = vadd.f32 0.0, %v1545
      %v1547 = vpop.f32.mrf.mxu0
      %v1548 = vpop.f32.mrf.mxu0
      %v1549 = vadd.f32 0.0, %v1548
      %v1550 = vpop.f32.mrf.mxu0
      %1551 = vmatprep.mubr.bf16.mxu0 0
      %1552 = vmatmul.mubr.bf16.gmra.mxu0 %v1028
      %v1553 = vpop.f32.mrf.mxu0
      %v1554 = vadd.f32 0.0, %v1553
      %v1555 = vpop.f32.mrf.mxu0
      %v1556 = vpop.f32.mrf.mxu0
      %v1557 = vadd.f32 0.0, %v1556
      %v1558 = vpop.f32.mrf.mxu0
      %1559 = vmatprep.mubr.bf16.mxu0 0
      %1560 = vmatmul.mubr.bf16.gmra.mxu0 %v1031
      %v1561 = vpop.f32.mrf.mxu0
      %v1562 = vadd.f32 0.0, %v1561
      %v1563 = vpop.f32.mrf.mxu0
      %v1564 = vpop.f32.mrf.mxu0
      %v1565 = vadd.f32 0.0, %v1564
      %v1566 = vpop.f32.mrf.mxu0
      %1567 = vmatprep.mubr.bf16.mxu0 0
      %1568 = vmatmul.mubr.bf16.gmra.mxu0 %v1034
      %v1569 = vpop.f32.mrf.mxu0
      %v1570 = vadd.f32 0.0, %v1569
      %v1571 = vpop.f32.mrf.mxu0
      %v1572 = vpop.f32.mrf.mxu0
      %v1573 = vadd.f32 0.0, %v1572
      %v1574 = vpop.f32.mrf.mxu0
      %1575 = vmatprep.mubr.bf16.mxu0 0
      %1576 = vmatmul.mubr.bf16.gmra.mxu0 %v1037
      %v1577 = vpop.f32.mrf.mxu0
      %v1578 = vadd.f32 0.0, %v1577
      %v1579 = vpop.f32.mrf.mxu0
      %v1580 = vpop.f32.mrf.mxu0
      %v1581 = vadd.f32 0.0, %v1580
      %v1582 = vpop.f32.mrf.mxu0
      %1583 = vmatprep.mubr.bf16.mxu0 0
      %1584 = vmatmul.mubr.bf16.gmra.mxu0 %v1040
      %v1585 = vpop.f32.mrf.mxu0
      %v1586 = vadd.f32 0.0, %v1585
      %v1587 = vpop.f32.mrf.mxu0
      %v1588 = vpop.f32.mrf.mxu0
      %v1589 = vadd.f32 0.0, %v1588
      %v1590 = vpop.f32.mrf.mxu0
      %1591 = vmatprep.mubr.bf16.mxu0 0
      %1592 = vmatmul.mubr.bf16.gmra.mxu0 %v1043
      %v1593 = vpop.f32.mrf.mxu0
      %v1594 = vadd.f32 0.0, %v1593
      %v1595 = vpop.f32.mrf.mxu0
      %v1596 = vpop.f32.mrf.mxu0
      %v1597 = vadd.f32 0.0, %v1596
      %v1598 = vpop.f32.mrf.mxu0
      %1599 = vmatprep.mubr.bf16.mxu0 0
      %1600 = vmatmul.mubr.bf16.gmra.mxu0 %v1046
      %v1601 = vpop.f32.mrf.mxu0
      %v1602 = vadd.f32 0.0, %v1601
      %v1603 = vpop.f32.mrf.mxu0
      %v1604 = vpop.f32.mrf.mxu0
      %v1605 = vadd.f32 0.0, %v1604
      %v1606 = vpop.f32.mrf.mxu0
      %1607 = vmatprep.mubr.bf16.mxu0 0
      %1608 = vmatmul.mubr.bf16.gmra.mxu0 %v1049
      %v1609 = vpop.f32.mrf.mxu0
      %v1610 = vadd.f32 0.0, %v1609
      %v1611 = vpop.f32.mrf.mxu0
      %v1612 = vpop.f32.mrf.mxu0
      %v1613 = vadd.f32 0.0, %v1612
      %v1614 = vpop.f32.mrf.mxu0
      %1615 = vdwg.mxu0
      %1744 = vrot.lane.b32.xlu0 %v1098, 96
      %v1745 = vpop.permute.xlu0 %1744
      %1746 = vrot.lane.b32.xlu0 %v1101, 96
      %v1747 = vpop.permute.xlu0 %1746
      %1748 = vrot.lane.b32.xlu0 %v1106, 96
      %v1749 = vpop.permute.xlu0 %1748
      %1750 = vrot.lane.b32.xlu0 %v1109, 96
      %v1751 = vpop.permute.xlu0 %1750
      %1752 = vrot.lane.b32.xlu0 %v1114, 96
      %v1753 = vpop.permute.xlu0 %1752
      %1754 = vrot.lane.b32.xlu0 %v1117, 96
      %v1755 = vpop.permute.xlu0 %1754
      %1756 = vrot.lane.b32.xlu0 %v1122, 96
      %v1757 = vpop.permute.xlu0 %1756
      %1758 = vrot.lane.b32.xlu0 %v1125, 96
      %v1759 = vpop.permute.xlu0 %1758
      %1760 = vrot.lane.b32.xlu0 %v1130, 96
      %v1761 = vpop.permute.xlu0 %1760
      %1762 = vrot.lane.b32.xlu0 %v1133, 96
      %v1763 = vpop.permute.xlu0 %1762
      %1764 = vrot.lane.b32.xlu0 %v1138, 96
      %v1765 = vpop.permute.xlu0 %1764
      %1766 = vrot.lane.b32.xlu0 %v1141, 96
      %v1767 = vpop.permute.xlu0 %1766
      %1768 = vrot.lane.b32.xlu0 %v1146, 96
      %v1769 = vpop.permute.xlu0 %1768
      %1770 = vrot.lane.b32.xlu0 %v1149, 96
      %v1771 = vpop.permute.xlu0 %1770
      %1772 = vrot.lane.b32.xlu0 %v1154, 96
      %v1773 = vpop.permute.xlu0 %1772
      %1774 = vrot.lane.b32.xlu0 %v1157, 96
      %v1775 = vpop.permute.xlu0 %1774
      %1776 = vrot.lane.b32.xlu0 %v1162, 96
      %v1777 = vpop.permute.xlu0 %1776
      %1778 = vrot.lane.b32.xlu0 %v1165, 96
      %v1779 = vpop.permute.xlu0 %1778
      %1780 = vrot.lane.b32.xlu0 %v1170, 96
      %v1781 = vpop.permute.xlu0 %1780
      %1782 = vrot.lane.b32.xlu0 %v1173, 96
      %v1783 = vpop.permute.xlu0 %1782
      %1784 = vrot.lane.b32.xlu0 %v1178, 96
      %v1785 = vpop.permute.xlu0 %1784
      %1786 = vrot.lane.b32.xlu0 %v1181, 96
      %v1787 = vpop.permute.xlu0 %1786
      %1788 = vrot.lane.b32.xlu0 %v1186, 96
      %v1789 = vpop.permute.xlu0 %1788
      %1790 = vrot.lane.b32.xlu0 %v1189, 96
      %v1791 = vpop.permute.xlu0 %1790
      %1792 = vrot.lane.b32.xlu0 %v1194, 96
      %v1793 = vpop.permute.xlu0 %1792
      %1794 = vrot.lane.b32.xlu0 %v1197, 96
      %v1795 = vpop.permute.xlu0 %1794
      %1796 = vrot.lane.b32.xlu0 %v1202, 96
      %v1797 = vpop.permute.xlu0 %1796
      %1798 = vrot.lane.b32.xlu0 %v1205, 96
      %v1799 = vpop.permute.xlu0 %1798
      %1800 = vrot.lane.b32.xlu0 %v1210, 96
      %v1801 = vpop.permute.xlu0 %1800
      %1802 = vrot.lane.b32.xlu0 %v1213, 96
      %v1803 = vpop.permute.xlu0 %1802
      %1804 = vrot.lane.b32.xlu0 %v1218, 96
      %v1805 = vpop.permute.xlu0 %1804
      %1806 = vrot.lane.b32.xlu0 %v1221, 96
      %v1807 = vpop.permute.xlu0 %1806
      %1808 = vrot.lane.b32.xlu0 %v1226, 96
      %v1809 = vpop.permute.xlu0 %1808
      %1810 = vrot.lane.b32.xlu0 %v1229, 96
      %v1811 = vpop.permute.xlu0 %1810
      %1812 = vrot.lane.b32.xlu0 %v1234, 96
      %v1813 = vpop.permute.xlu0 %1812
      %1814 = vrot.lane.b32.xlu0 %v1237, 96
      %v1815 = vpop.permute.xlu0 %1814
      %1816 = vrot.lane.b32.xlu0 %v1242, 96
      %v1817 = vpop.permute.xlu0 %1816
      %1818 = vrot.lane.b32.xlu0 %v1245, 96
      %v1819 = vpop.permute.xlu0 %1818
      %1820 = vrot.lane.b32.xlu0 %v1250, 96
      %v1821 = vpop.permute.xlu0 %1820
      %1822 = vrot.lane.b32.xlu0 %v1253, 96
      %v1823 = vpop.permute.xlu0 %1822
      %1824 = vrot.lane.b32.xlu0 %v1258, 96
      %v1825 = vpop.permute.xlu0 %1824
      %1826 = vrot.lane.b32.xlu0 %v1261, 96
      %v1827 = vpop.permute.xlu0 %1826
      %1828 = vrot.lane.b32.xlu0 %v1266, 96
      %v1829 = vpop.permute.xlu0 %1828
      %1830 = vrot.lane.b32.xlu0 %v1269, 96
      %v1831 = vpop.permute.xlu0 %1830
      %1832 = vrot.lane.b32.xlu0 %v1274, 96
      %v1833 = vpop.permute.xlu0 %1832
      %1834 = vrot.lane.b32.xlu0 %v1277, 96
      %v1835 = vpop.permute.xlu0 %1834
      %1836 = vrot.lane.b32.xlu0 %v1282, 96
      %v1837 = vpop.permute.xlu0 %1836
      %1838 = vrot.lane.b32.xlu0 %v1285, 96
      %v1839 = vpop.permute.xlu0 %1838
      %1840 = vrot.lane.b32.xlu0 %v1290, 96
      %v1841 = vpop.permute.xlu0 %1840
      %1842 = vrot.lane.b32.xlu0 %v1293, 96
      %v1843 = vpop.permute.xlu0 %1842
      %1844 = vrot.lane.b32.xlu0 %v1298, 96
      %v1845 = vpop.permute.xlu0 %1844
      %1846 = vrot.lane.b32.xlu0 %v1301, 96
      %v1847 = vpop.permute.xlu0 %1846
      %1848 = vrot.lane.b32.xlu0 %v1306, 96
      %v1849 = vpop.permute.xlu0 %1848
      %1850 = vrot.lane.b32.xlu0 %v1309, 96
      %v1851 = vpop.permute.xlu0 %1850
      %1852 = vrot.lane.b32.xlu0 %v1314, 96
      %v1853 = vpop.permute.xlu0 %1852
      %1854 = vrot.lane.b32.xlu0 %v1317, 96
      %v1855 = vpop.permute.xlu0 %1854
      %1856 = vrot.lane.b32.xlu0 %v1322, 96
      %v1857 = vpop.permute.xlu0 %1856
      %1858 = vrot.lane.b32.xlu0 %v1325, 96
      %v1859 = vpop.permute.xlu0 %1858
      %1860 = vrot.lane.b32.xlu0 %v1330, 96
      %v1861 = vpop.permute.xlu0 %1860
      %1862 = vrot.lane.b32.xlu0 %v1333, 96
      %v1863 = vpop.permute.xlu0 %1862
      %1864 = vrot.lane.b32.xlu0 %v1338, 96
      %v1865 = vpop.permute.xlu0 %1864
      %1866 = vrot.lane.b32.xlu0 %v1341, 96
      %v1867 = vpop.permute.xlu0 %1866
      %1868 = vrot.lane.b32.xlu0 %v1346, 96
      %v1869 = vpop.permute.xlu0 %1868
      %1870 = vrot.lane.b32.xlu0 %v1349, 96
      %v1871 = vpop.permute.xlu0 %1870
      %1872 = vrot.lane.b32.xlu0 %v1354, 96
      %v1873 = vpop.permute.xlu0 %1872
      %1874 = vrot.lane.b32.xlu0 %v1357, 96
      %v1875 = vpop.permute.xlu0 %1874
      %1876 = vrot.lane.b32.xlu0 %v1362, 96
      %v1877 = vpop.permute.xlu0 %1876
      %1878 = vrot.lane.b32.xlu0 %v1365, 96
      %v1879 = vpop.permute.xlu0 %1878
      %1880 = vrot.lane.b32.xlu0 %v1370, 96
      %v1881 = vpop.permute.xlu0 %1880
      %1882 = vrot.lane.b32.xlu0 %v1373, 96
      %v1883 = vpop.permute.xlu0 %1882
      %1884 = vrot.lane.b32.xlu0 %v1378, 96
      %v1885 = vpop.permute.xlu0 %1884
      %1886 = vrot.lane.b32.xlu0 %v1381, 96
      %v1887 = vpop.permute.xlu0 %1886
      %1888 = vrot.lane.b32.xlu0 %v1386, 96
      %v1889 = vpop.permute.xlu0 %1888
      %1890 = vrot.lane.b32.xlu0 %v1389, 96
      %v1891 = vpop.permute.xlu0 %1890
      %1892 = vrot.lane.b32.xlu0 %v1394, 96
      %v1893 = vpop.permute.xlu0 %1892
      %1894 = vrot.lane.b32.xlu0 %v1397, 96
      %v1895 = vpop.permute.xlu0 %1894
      %1896 = vrot.lane.b32.xlu0 %v1402, 96
      %v1897 = vpop.permute.xlu0 %1896
      %1898 = vrot.lane.b32.xlu0 %v1405, 96
      %v1899 = vpop.permute.xlu0 %1898
      %1900 = vrot.lane.b32.xlu0 %v1410, 96
      %v1901 = vpop.permute.xlu0 %1900
      %1902 = vrot.lane.b32.xlu0 %v1413, 96
      %v1903 = vpop.permute.xlu0 %1902
      %1904 = vrot.lane.b32.xlu0 %v1418, 96
      %v1905 = vpop.permute.xlu0 %1904
      %1906 = vrot.lane.b32.xlu0 %v1421, 96
      %v1907 = vpop.permute.xlu0 %1906
      %1908 = vrot.lane.b32.xlu0 %v1426, 96
      %v1909 = vpop.permute.xlu0 %1908
      %1910 = vrot.lane.b32.xlu0 %v1429, 96
      %v1911 = vpop.permute.xlu0 %1910
      %1912 = vrot.lane.b32.xlu0 %v1434, 96
      %v1913 = vpop.permute.xlu0 %1912
      %1914 = vrot.lane.b32.xlu0 %v1437, 96
      %v1915 = vpop.permute.xlu0 %1914
      %1916 = vrot.lane.b32.xlu0 %v1442, 96
      %v1917 = vpop.permute.xlu0 %1916
      %1918 = vrot.lane.b32.xlu0 %v1445, 96
      %v1919 = vpop.permute.xlu0 %1918
      %1920 = vrot.lane.b32.xlu0 %v1450, 96
      %v1921 = vpop.permute.xlu0 %1920
      %1922 = vrot.lane.b32.xlu0 %v1453, 96
      %v1923 = vpop.permute.xlu0 %1922
      %1924 = vrot.lane.b32.xlu0 %v1458, 96
      %v1925 = vpop.permute.xlu0 %1924
      %1926 = vrot.lane.b32.xlu0 %v1461, 96
      %v1927 = vpop.permute.xlu0 %1926
      %1928 = vrot.lane.b32.xlu0 %v1466, 96
      %v1929 = vpop.permute.xlu0 %1928
      %1930 = vrot.lane.b32.xlu0 %v1469, 96
      %v1931 = vpop.permute.xlu0 %1930
      %1932 = vrot.lane.b32.xlu0 %v1474, 96
      %v1933 = vpop.permute.xlu0 %1932
      %1934 = vrot.lane.b32.xlu0 %v1477, 96
      %v1935 = vpop.permute.xlu0 %1934
      %1936 = vrot.lane.b32.xlu0 %v1482, 96
      %v1937 = vpop.permute.xlu0 %1936
      %1938 = vrot.lane.b32.xlu0 %v1485, 96
      %v1939 = vpop.permute.xlu0 %1938
      %1940 = vrot.lane.b32.xlu0 %v1490, 96
      %v1941 = vpop.permute.xlu0 %1940
      %1942 = vrot.lane.b32.xlu0 %v1493, 96
      %v1943 = vpop.permute.xlu0 %1942
      %1944 = vrot.lane.b32.xlu0 %v1498, 96
      %v1945 = vpop.permute.xlu0 %1944
      %1946 = vrot.lane.b32.xlu0 %v1501, 96
      %v1947 = vpop.permute.xlu0 %1946
      %1948 = vrot.lane.b32.xlu0 %v1506, 96
      %v1949 = vpop.permute.xlu0 %1948
      %1950 = vrot.lane.b32.xlu0 %v1509, 96
      %v1951 = vpop.permute.xlu0 %1950
      %1952 = vrot.lane.b32.xlu0 %v1514, 96
      %v1953 = vpop.permute.xlu0 %1952
      %1954 = vrot.lane.b32.xlu0 %v1517, 96
      %v1955 = vpop.permute.xlu0 %1954
      %1956 = vrot.lane.b32.xlu0 %v1522, 96
      %v1957 = vpop.permute.xlu0 %1956
      %1958 = vrot.lane.b32.xlu0 %v1525, 96
      %v1959 = vpop.permute.xlu0 %1958
      %1960 = vrot.lane.b32.xlu0 %v1530, 96
      %v1961 = vpop.permute.xlu0 %1960
      %1962 = vrot.lane.b32.xlu0 %v1533, 96
      %v1963 = vpop.permute.xlu0 %1962
      %1964 = vrot.lane.b32.xlu0 %v1538, 96
      %v1965 = vpop.permute.xlu0 %1964
      %1966 = vrot.lane.b32.xlu0 %v1541, 96
      %v1967 = vpop.permute.xlu0 %1966
      %1968 = vrot.lane.b32.xlu0 %v1546, 96
      %v1969 = vpop.permute.xlu0 %1968
      %1970 = vrot.lane.b32.xlu0 %v1549, 96
      %v1971 = vpop.permute.xlu0 %1970
      %1972 = vrot.lane.b32.xlu0 %v1554, 96
      %v1973 = vpop.permute.xlu0 %1972
      %1974 = vrot.lane.b32.xlu0 %v1557, 96
      %v1975 = vpop.permute.xlu0 %1974
      %1976 = vrot.lane.b32.xlu0 %v1562, 96
      %v1977 = vpop.permute.xlu0 %1976
      %1978 = vrot.lane.b32.xlu0 %v1565, 96
      %v1979 = vpop.permute.xlu0 %1978
      %1980 = vrot.lane.b32.xlu0 %v1570, 96
      %v1981 = vpop.permute.xlu0 %1980
      %1982 = vrot.lane.b32.xlu0 %v1573, 96
      %v1983 = vpop.permute.xlu0 %1982
      %1984 = vrot.lane.b32.xlu0 %v1578, 96
      %v1985 = vpop.permute.xlu0 %1984
      %1986 = vrot.lane.b32.xlu0 %v1581, 96
      %v1987 = vpop.permute.xlu0 %1986
      %1988 = vrot.lane.b32.xlu0 %v1586, 96
      %v1989 = vpop.permute.xlu0 %1988
      %1990 = vrot.lane.b32.xlu0 %v1589, 96
      %v1991 = vpop.permute.xlu0 %1990
      %1992 = vrot.lane.b32.xlu0 %v1594, 96
      %v1993 = vpop.permute.xlu0 %1992
      %1994 = vrot.lane.b32.xlu0 %v1597, 96
      %v1995 = vpop.permute.xlu0 %1994
      %1996 = vrot.lane.b32.xlu0 %v1602, 96
      %v1997 = vpop.permute.xlu0 %1996
      %1998 = vrot.lane.b32.xlu0 %v1605, 96
      %v1999 = vpop.permute.xlu0 %1998
      %v2128 = vadd.f32 %v1090, %v1745
      %v2129 = vadd.f32 %v1093, %v1747
      %v2130 = vadd.f32 %v1098, %v1749
      %v2131 = vadd.f32 %v1101, %v1751
      %v2132 = vadd.f32 %v1106, %v1753
      %v2133 = vadd.f32 %v1109, %v1755
      %v2134 = vadd.f32 %v1114, %v1757
      %v2135 = vadd.f32 %v1117, %v1759
      %v2136 = vadd.f32 %v1122, %v1761
      %v2137 = vadd.f32 %v1125, %v1763
      %v2138 = vadd.f32 %v1130, %v1765
      %v2139 = vadd.f32 %v1133, %v1767
      %v2140 = vadd.f32 %v1138, %v1769
      %v2141 = vadd.f32 %v1141, %v1771
      %v2142 = vadd.f32 %v1146, %v1773
      %v2143 = vadd.f32 %v1149, %v1775
      %v2144 = vadd.f32 %v1154, %v1777
      %v2145 = vadd.f32 %v1157, %v1779
      %v2146 = vadd.f32 %v1162, %v1781
      %v2147 = vadd.f32 %v1165, %v1783
      %v2148 = vadd.f32 %v1170, %v1785
      %v2149 = vadd.f32 %v1173, %v1787
      %v2150 = vadd.f32 %v1178, %v1789
      %v2151 = vadd.f32 %v1181, %v1791
      %v2152 = vadd.f32 %v1186, %v1793
      %v2153 = vadd.f32 %v1189, %v1795
      %v2154 = vadd.f32 %v1194, %v1797
      %v2155 = vadd.f32 %v1197, %v1799
      %v2156 = vadd.f32 %v1202, %v1801
      %v2157 = vadd.f32 %v1205, %v1803
      %v2158 = vadd.f32 %v1210, %v1805
      %v2159 = vadd.f32 %v1213, %v1807
      %v2160 = vadd.f32 %v1218, %v1809
      %v2161 = vadd.f32 %v1221, %v1811
      %v2162 = vadd.f32 %v1226, %v1813
      %v2163 = vadd.f32 %v1229, %v1815
      %v2164 = vadd.f32 %v1234, %v1817
      %v2165 = vadd.f32 %v1237, %v1819
      %v2166 = vadd.f32 %v1242, %v1821
      %v2167 = vadd.f32 %v1245, %v1823
      %v2168 = vadd.f32 %v1250, %v1825
      %v2169 = vadd.f32 %v1253, %v1827
      %v2170 = vadd.f32 %v1258, %v1829
      %v2171 = vadd.f32 %v1261, %v1831
      %v2172 = vadd.f32 %v1266, %v1833
      %v2173 = vadd.f32 %v1269, %v1835
      %v2174 = vadd.f32 %v1274, %v1837
      %v2175 = vadd.f32 %v1277, %v1839
      %v2176 = vadd.f32 %v1282, %v1841
      %v2177 = vadd.f32 %v1285, %v1843
      %v2178 = vadd.f32 %v1290, %v1845
      %v2179 = vadd.f32 %v1293, %v1847
      %v2180 = vadd.f32 %v1298, %v1849
      %v2181 = vadd.f32 %v1301, %v1851
      %v2182 = vadd.f32 %v1306, %v1853
      %v2183 = vadd.f32 %v1309, %v1855
      %v2184 = vadd.f32 %v1314, %v1857
      %v2185 = vadd.f32 %v1317, %v1859
      %v2186 = vadd.f32 %v1322, %v1861
      %v2187 = vadd.f32 %v1325, %v1863
      %v2188 = vadd.f32 %v1330, %v1865
      %v2189 = vadd.f32 %v1333, %v1867
      %v2190 = vadd.f32 %v1338, %v1869
      %v2191 = vadd.f32 %v1341, %v1871
      %v2192 = vadd.f32 %v1346, %v1873
      %v2193 = vadd.f32 %v1349, %v1875
      %v2194 = vadd.f32 %v1354, %v1877
      %v2195 = vadd.f32 %v1357, %v1879
      %v2196 = vadd.f32 %v1362, %v1881
      %v2197 = vadd.f32 %v1365, %v1883
      %v2198 = vadd.f32 %v1370, %v1885
      %v2199 = vadd.f32 %v1373, %v1887
      %v2200 = vadd.f32 %v1378, %v1889
      %v2201 = vadd.f32 %v1381, %v1891
      %v2202 = vadd.f32 %v1386, %v1893
      %v2203 = vadd.f32 %v1389, %v1895
      %v2204 = vadd.f32 %v1394, %v1897
      %v2205 = vadd.f32 %v1397, %v1899
      %v2206 = vadd.f32 %v1402, %v1901
      %v2207 = vadd.f32 %v1405, %v1903
      %v2208 = vadd.f32 %v1410, %v1905
      %v2209 = vadd.f32 %v1413, %v1907
      %v2210 = vadd.f32 %v1418, %v1909
      %v2211 = vadd.f32 %v1421, %v1911
      %v2212 = vadd.f32 %v1426, %v1913
      %v2213 = vadd.f32 %v1429, %v1915
      %v2214 = vadd.f32 %v1434, %v1917
      %v2215 = vadd.f32 %v1437, %v1919
      %v2216 = vadd.f32 %v1442, %v1921
      %v2217 = vadd.f32 %v1445, %v1923
      %v2218 = vadd.f32 %v1450, %v1925
      %v2219 = vadd.f32 %v1453, %v1927
      %v2220 = vadd.f32 %v1458, %v1929
      %v2221 = vadd.f32 %v1461, %v1931
      %v2222 = vadd.f32 %v1466, %v1933
      %v2223 = vadd.f32 %v1469, %v1935
      %v2224 = vadd.f32 %v1474, %v1937
      %v2225 = vadd.f32 %v1477, %v1939
      %v2226 = vadd.f32 %v1482, %v1941
      %v2227 = vadd.f32 %v1485, %v1943
      %v2228 = vadd.f32 %v1490, %v1945
      %v2229 = vadd.f32 %v1493, %v1947
      %v2230 = vadd.f32 %v1498, %v1949
      %v2231 = vadd.f32 %v1501, %v1951
      %v2232 = vadd.f32 %v1506, %v1953
      %v2233 = vadd.f32 %v1509, %v1955
      %v2234 = vadd.f32 %v1514, %v1957
      %v2235 = vadd.f32 %v1517, %v1959
      %v2236 = vadd.f32 %v1522, %v1961
      %v2237 = vadd.f32 %v1525, %v1963
      %v2238 = vadd.f32 %v1530, %v1965
      %v2239 = vadd.f32 %v1533, %v1967
      %v2240 = vadd.f32 %v1538, %v1969
      %v2241 = vadd.f32 %v1541, %v1971
      %v2242 = vadd.f32 %v1546, %v1973
      %v2243 = vadd.f32 %v1549, %v1975
      %v2244 = vadd.f32 %v1554, %v1977
      %v2245 = vadd.f32 %v1557, %v1979
      %v2246 = vadd.f32 %v1562, %v1981
      %v2247 = vadd.f32 %v1565, %v1983
      %v2248 = vadd.f32 %v1570, %v1985
      %v2249 = vadd.f32 %v1573, %v1987
      %v2250 = vadd.f32 %v1578, %v1989
      %v2251 = vadd.f32 %v1581, %v1991
      %v2252 = vadd.f32 %v1586, %v1993
      %v2253 = vadd.f32 %v1589, %v1995
      %v2254 = vadd.f32 %v1594, %v1997
      %v2255 = vadd.f32 %v1597, %v1999
      %2258 = vrot.lane.b32.xlu0 %v1106, 64
      %v2259 = vpop.permute.xlu0 %2258
      %2260 = vrot.lane.b32.xlu0 %v1109, 64
      %v2261 = vpop.permute.xlu0 %2260
      %2262 = vrot.lane.b32.xlu0 %v1114, 64
      %v2263 = vpop.permute.xlu0 %2262
      %2264 = vrot.lane.b32.xlu0 %v1117, 64
      %v2265 = vpop.permute.xlu0 %2264
      %2266 = vrot.lane.b32.xlu0 %v1122, 64
      %v2267 = vpop.permute.xlu0 %2266
      %2268 = vrot.lane.b32.xlu0 %v1125, 64
      %v2269 = vpop.permute.xlu0 %2268
      %2270 = vrot.lane.b32.xlu0 %v1130, 64
      %v2271 = vpop.permute.xlu0 %2270
      %2272 = vrot.lane.b32.xlu0 %v1133, 64
      %v2273 = vpop.permute.xlu0 %2272
      %2274 = vrot.lane.b32.xlu0 %v1138, 64
      %v2275 = vpop.permute.xlu0 %2274
      %2276 = vrot.lane.b32.xlu0 %v1141, 64
      %v2277 = vpop.permute.xlu0 %2276
      %2278 = vrot.lane.b32.xlu0 %v1146, 64
      %v2279 = vpop.permute.xlu0 %2278
      %2280 = vrot.lane.b32.xlu0 %v1149, 64
      %v2281 = vpop.permute.xlu0 %2280
      %2282 = vrot.lane.b32.xlu0 %v1154, 64
      %v2283 = vpop.permute.xlu0 %2282
      %2284 = vrot.lane.b32.xlu0 %v1157, 64
      %v2285 = vpop.permute.xlu0 %2284
      %2286 = vrot.lane.b32.xlu0 %v1162, 64
      %v2287 = vpop.permute.xlu0 %2286
      %2288 = vrot.lane.b32.xlu0 %v1165, 64
      %v2289 = vpop.permute.xlu0 %2288
      %2290 = vrot.lane.b32.xlu0 %v1170, 64
      %v2291 = vpop.permute.xlu0 %2290
      %2292 = vrot.lane.b32.xlu0 %v1173, 64
      %v2293 = vpop.permute.xlu0 %2292
      %2294 = vrot.lane.b32.xlu0 %v1178, 64
      %v2295 = vpop.permute.xlu0 %2294
      %2296 = vrot.lane.b32.xlu0 %v1181, 64
      %v2297 = vpop.permute.xlu0 %2296
      %2298 = vrot.lane.b32.xlu0 %v1186, 64
      %v2299 = vpop.permute.xlu0 %2298
      %2300 = vrot.lane.b32.xlu0 %v1189, 64
      %v2301 = vpop.permute.xlu0 %2300
      %2302 = vrot.lane.b32.xlu0 %v1194, 64
      %v2303 = vpop.permute.xlu0 %2302
      %2304 = vrot.lane.b32.xlu0 %v1197, 64
      %v2305 = vpop.permute.xlu0 %2304
      %2306 = vrot.lane.b32.xlu0 %v1202, 64
      %v2307 = vpop.permute.xlu0 %2306
      %2308 = vrot.lane.b32.xlu0 %v1205, 64
      %v2309 = vpop.permute.xlu0 %2308
      %2310 = vrot.lane.b32.xlu0 %v1210, 64
      %v2311 = vpop.permute.xlu0 %2310
      %2312 = vrot.lane.b32.xlu0 %v1213, 64
      %v2313 = vpop.permute.xlu0 %2312
      %2314 = vrot.lane.b32.xlu0 %v1218, 64
      %v2315 = vpop.permute.xlu0 %2314
      %2316 = vrot.lane.b32.xlu0 %v1221, 64
      %v2317 = vpop.permute.xlu0 %2316
      %2318 = vrot.lane.b32.xlu0 %v1226, 64
      %v2319 = vpop.permute.xlu0 %2318
      %2320 = vrot.lane.b32.xlu0 %v1229, 64
      %v2321 = vpop.permute.xlu0 %2320
      %2322 = vrot.lane.b32.xlu0 %v1234, 64
      %v2323 = vpop.permute.xlu0 %2322
      %2324 = vrot.lane.b32.xlu0 %v1237, 64
      %v2325 = vpop.permute.xlu0 %2324
      %2326 = vrot.lane.b32.xlu0 %v1242, 64
      %v2327 = vpop.permute.xlu0 %2326
      %2328 = vrot.lane.b32.xlu0 %v1245, 64
      %v2329 = vpop.permute.xlu0 %2328
      %2330 = vrot.lane.b32.xlu0 %v1250, 64
      %v2331 = vpop.permute.xlu0 %2330
      %2332 = vrot.lane.b32.xlu0 %v1253, 64
      %v2333 = vpop.permute.xlu0 %2332
      %2334 = vrot.lane.b32.xlu0 %v1258, 64
      %v2335 = vpop.permute.xlu0 %2334
      %2336 = vrot.lane.b32.xlu0 %v1261, 64
      %v2337 = vpop.permute.xlu0 %2336
      %2338 = vrot.lane.b32.xlu0 %v1266, 64
      %v2339 = vpop.permute.xlu0 %2338
      %2340 = vrot.lane.b32.xlu0 %v1269, 64
      %v2341 = vpop.permute.xlu0 %2340
      %2342 = vrot.lane.b32.xlu0 %v1274, 64
      %v2343 = vpop.permute.xlu0 %2342
      %2344 = vrot.lane.b32.xlu0 %v1277, 64
      %v2345 = vpop.permute.xlu0 %2344
      %2346 = vrot.lane.b32.xlu0 %v1282, 64
      %v2347 = vpop.permute.xlu0 %2346
      %2348 = vrot.lane.b32.xlu0 %v1285, 64
      %v2349 = vpop.permute.xlu0 %2348
      %2350 = vrot.lane.b32.xlu0 %v1290, 64
      %v2351 = vpop.permute.xlu0 %2350
      %2352 = vrot.lane.b32.xlu0 %v1293, 64
      %v2353 = vpop.permute.xlu0 %2352
      %2354 = vrot.lane.b32.xlu0 %v1298, 64
      %v2355 = vpop.permute.xlu0 %2354
      %2356 = vrot.lane.b32.xlu0 %v1301, 64
      %v2357 = vpop.permute.xlu0 %2356
      %2358 = vrot.lane.b32.xlu0 %v1306, 64
      %v2359 = vpop.permute.xlu0 %2358
      %2360 = vrot.lane.b32.xlu0 %v1309, 64
      %v2361 = vpop.permute.xlu0 %2360
      %2362 = vrot.lane.b32.xlu0 %v1314, 64
      %v2363 = vpop.permute.xlu0 %2362
      %2364 = vrot.lane.b32.xlu0 %v1317, 64
      %v2365 = vpop.permute.xlu0 %2364
      %2366 = vrot.lane.b32.xlu0 %v1322, 64
      %v2367 = vpop.permute.xlu0 %2366
      %2368 = vrot.lane.b32.xlu0 %v1325, 64
      %v2369 = vpop.permute.xlu0 %2368
      %2370 = vrot.lane.b32.xlu0 %v1330, 64
      %v2371 = vpop.permute.xlu0 %2370
      %2372 = vrot.lane.b32.xlu0 %v1333, 64
      %v2373 = vpop.permute.xlu0 %2372
      %2374 = vrot.lane.b32.xlu0 %v1338, 64
      %v2375 = vpop.permute.xlu0 %2374
      %2376 = vrot.lane.b32.xlu0 %v1341, 64
      %v2377 = vpop.permute.xlu0 %2376
      %2378 = vrot.lane.b32.xlu0 %v1346, 64
      %v2379 = vpop.permute.xlu0 %2378
      %2380 = vrot.lane.b32.xlu0 %v1349, 64
      %v2381 = vpop.permute.xlu0 %2380
      %2382 = vrot.lane.b32.xlu0 %v1354, 64
      %v2383 = vpop.permute.xlu0 %2382
      %2384 = vrot.lane.b32.xlu0 %v1357, 64
      %v2385 = vpop.permute.xlu0 %2384
      %2386 = vrot.lane.b32.xlu0 %v1362, 64
      %v2387 = vpop.permute.xlu0 %2386
      %2388 = vrot.lane.b32.xlu0 %v1365, 64
      %v2389 = vpop.permute.xlu0 %2388
      %2390 = vrot.lane.b32.xlu0 %v1370, 64
      %v2391 = vpop.permute.xlu0 %2390
      %2392 = vrot.lane.b32.xlu0 %v1373, 64
      %v2393 = vpop.permute.xlu0 %2392
      %2394 = vrot.lane.b32.xlu0 %v1378, 64
      %v2395 = vpop.permute.xlu0 %2394
      %2396 = vrot.lane.b32.xlu0 %v1381, 64
      %v2397 = vpop.permute.xlu0 %2396
      %2398 = vrot.lane.b32.xlu0 %v1386, 64
      %v2399 = vpop.permute.xlu0 %2398
      %2400 = vrot.lane.b32.xlu0 %v1389, 64
      %v2401 = vpop.permute.xlu0 %2400
      %2402 = vrot.lane.b32.xlu0 %v1394, 64
      %v2403 = vpop.permute.xlu0 %2402
      %2404 = vrot.lane.b32.xlu0 %v1397, 64
      %v2405 = vpop.permute.xlu0 %2404
      %2406 = vrot.lane.b32.xlu0 %v1402, 64
      %v2407 = vpop.permute.xlu0 %2406
      %2408 = vrot.lane.b32.xlu0 %v1405, 64
      %v2409 = vpop.permute.xlu0 %2408
      %2410 = vrot.lane.b32.xlu0 %v1410, 64
      %v2411 = vpop.permute.xlu0 %2410
      %2412 = vrot.lane.b32.xlu0 %v1413, 64
      %v2413 = vpop.permute.xlu0 %2412
      %2414 = vrot.lane.b32.xlu0 %v1418, 64
      %v2415 = vpop.permute.xlu0 %2414
      %2416 = vrot.lane.b32.xlu0 %v1421, 64
      %v2417 = vpop.permute.xlu0 %2416
      %2418 = vrot.lane.b32.xlu0 %v1426, 64
      %v2419 = vpop.permute.xlu0 %2418
      %2420 = vrot.lane.b32.xlu0 %v1429, 64
      %v2421 = vpop.permute.xlu0 %2420
      %2422 = vrot.lane.b32.xlu0 %v1434, 64
      %v2423 = vpop.permute.xlu0 %2422
      %2424 = vrot.lane.b32.xlu0 %v1437, 64
      %v2425 = vpop.permute.xlu0 %2424
      %2426 = vrot.lane.b32.xlu0 %v1442, 64
      %v2427 = vpop.permute.xlu0 %2426
      %2428 = vrot.lane.b32.xlu0 %v1445, 64
      %v2429 = vpop.permute.xlu0 %2428
      %2430 = vrot.lane.b32.xlu0 %v1450, 64
      %v2431 = vpop.permute.xlu0 %2430
      %2432 = vrot.lane.b32.xlu0 %v1453, 64
      %v2433 = vpop.permute.xlu0 %2432
      %2434 = vrot.lane.b32.xlu0 %v1458, 64
      %v2435 = vpop.permute.xlu0 %2434
      %2436 = vrot.lane.b32.xlu0 %v1461, 64
      %v2437 = vpop.permute.xlu0 %2436
      %2438 = vrot.lane.b32.xlu0 %v1466, 64
      %v2439 = vpop.permute.xlu0 %2438
      %2440 = vrot.lane.b32.xlu0 %v1469, 64
      %v2441 = vpop.permute.xlu0 %2440
      %2442 = vrot.lane.b32.xlu0 %v1474, 64
      %v2443 = vpop.permute.xlu0 %2442
      %2444 = vrot.lane.b32.xlu0 %v1477, 64
      %v2445 = vpop.permute.xlu0 %2444
      %2446 = vrot.lane.b32.xlu0 %v1482, 64
      %v2447 = vpop.permute.xlu0 %2446
      %2448 = vrot.lane.b32.xlu0 %v1485, 64
      %v2449 = vpop.permute.xlu0 %2448
      %2450 = vrot.lane.b32.xlu0 %v1490, 64
      %v2451 = vpop.permute.xlu0 %2450
      %2452 = vrot.lane.b32.xlu0 %v1493, 64
      %v2453 = vpop.permute.xlu0 %2452
      %2454 = vrot.lane.b32.xlu0 %v1498, 64
      %v2455 = vpop.permute.xlu0 %2454
      %2456 = vrot.lane.b32.xlu0 %v1501, 64
      %v2457 = vpop.permute.xlu0 %2456
      %2458 = vrot.lane.b32.xlu0 %v1506, 64
      %v2459 = vpop.permute.xlu0 %2458
      %2460 = vrot.lane.b32.xlu0 %v1509, 64
      %v2461 = vpop.permute.xlu0 %2460
      %2462 = vrot.lane.b32.xlu0 %v1514, 64
      %v2463 = vpop.permute.xlu0 %2462
      %2464 = vrot.lane.b32.xlu0 %v1517, 64
      %v2465 = vpop.permute.xlu0 %2464
      %2466 = vrot.lane.b32.xlu0 %v1522, 64
      %v2467 = vpop.permute.xlu0 %2466
      %2468 = vrot.lane.b32.xlu0 %v1525, 64
      %v2469 = vpop.permute.xlu0 %2468
      %2470 = vrot.lane.b32.xlu0 %v1530, 64
      %v2471 = vpop.permute.xlu0 %2470
      %2472 = vrot.lane.b32.xlu0 %v1533, 64
      %v2473 = vpop.permute.xlu0 %2472
      %2474 = vrot.lane.b32.xlu0 %v1538, 64
      %v2475 = vpop.permute.xlu0 %2474
      %2476 = vrot.lane.b32.xlu0 %v1541, 64
      %v2477 = vpop.permute.xlu0 %2476
      %2478 = vrot.lane.b32.xlu0 %v1546, 64
      %v2479 = vpop.permute.xlu0 %2478
      %2480 = vrot.lane.b32.xlu0 %v1549, 64
      %v2481 = vpop.permute.xlu0 %2480
      %2482 = vrot.lane.b32.xlu0 %v1554, 64
      %v2483 = vpop.permute.xlu0 %2482
      %2484 = vrot.lane.b32.xlu0 %v1557, 64
      %v2485 = vpop.permute.xlu0 %2484
      %2486 = vrot.lane.b32.xlu0 %v1562, 64
      %v2487 = vpop.permute.xlu0 %2486
      %2488 = vrot.lane.b32.xlu0 %v1565, 64
      %v2489 = vpop.permute.xlu0 %2488
      %2490 = vrot.lane.b32.xlu0 %v1570, 64
      %v2491 = vpop.permute.xlu0 %2490
      %2492 = vrot.lane.b32.xlu0 %v1573, 64
      %v2493 = vpop.permute.xlu0 %2492
      %2494 = vrot.lane.b32.xlu0 %v1578, 64
      %v2495 = vpop.permute.xlu0 %2494
      %2496 = vrot.lane.b32.xlu0 %v1581, 64
      %v2497 = vpop.permute.xlu0 %2496
      %2498 = vrot.lane.b32.xlu0 %v1586, 64
      %v2499 = vpop.permute.xlu0 %2498
      %2500 = vrot.lane.b32.xlu0 %v1589, 64
      %v2501 = vpop.permute.xlu0 %2500
      %2502 = vrot.lane.b32.xlu0 %v1594, 64
      %v2503 = vpop.permute.xlu0 %2502
      %2504 = vrot.lane.b32.xlu0 %v1597, 64
      %v2505 = vpop.permute.xlu0 %2504
      %2506 = vrot.lane.b32.xlu0 %v1602, 64
      %v2507 = vpop.permute.xlu0 %2506
      %2508 = vrot.lane.b32.xlu0 %v1605, 64
      %v2509 = vpop.permute.xlu0 %2508
      %2510 = vrot.lane.b32.xlu0 %v1610, 64
      %v2511 = vpop.permute.xlu0 %2510
      %2512 = vrot.lane.b32.xlu0 %v1613, 64
      %v2513 = vpop.permute.xlu0 %2512
      %v2642 = vadd.f32 %v2128, %v2259
      %v2643 = vadd.f32 %v2129, %v2261
      %v2644 = vadd.f32 %v2130, %v2263
      %v2645 = vadd.f32 %v2131, %v2265
      %v2646 = vadd.f32 %v2132, %v2267
      %v2647 = vadd.f32 %v2133, %v2269
      %v2648 = vadd.f32 %v2134, %v2271
      %v2649 = vadd.f32 %v2135, %v2273
      %v2650 = vadd.f32 %v2136, %v2275
      %v2651 = vadd.f32 %v2137, %v2277
      %v2652 = vadd.f32 %v2138, %v2279
      %v2653 = vadd.f32 %v2139, %v2281
      %v2654 = vadd.f32 %v2140, %v2283
      %v2655 = vadd.f32 %v2141, %v2285
      %v2656 = vadd.f32 %v2142, %v2287
      %v2657 = vadd.f32 %v2143, %v2289
      %v2658 = vadd.f32 %v2144, %v2291
      %v2659 = vadd.f32 %v2145, %v2293
      %v2660 = vadd.f32 %v2146, %v2295
      %v2661 = vadd.f32 %v2147, %v2297
      %v2662 = vadd.f32 %v2148, %v2299
      %v2663 = vadd.f32 %v2149, %v2301
      %v2664 = vadd.f32 %v2150, %v2303
      %v2665 = vadd.f32 %v2151, %v2305
      %v2666 = vadd.f32 %v2152, %v2307
      %v2667 = vadd.f32 %v2153, %v2309
      %v2668 = vadd.f32 %v2154, %v2311
      %v2669 = vadd.f32 %v2155, %v2313
      %v2670 = vadd.f32 %v2156, %v2315
      %v2671 = vadd.f32 %v2157, %v2317
      %v2672 = vadd.f32 %v2158, %v2319
      %v2673 = vadd.f32 %v2159, %v2321
      %v2674 = vadd.f32 %v2160, %v2323
      %v2675 = vadd.f32 %v2161, %v2325
      %v2676 = vadd.f32 %v2162, %v2327
      %v2677 = vadd.f32 %v2163, %v2329
      %v2678 = vadd.f32 %v2164, %v2331
      %v2679 = vadd.f32 %v2165, %v2333
      %v2680 = vadd.f32 %v2166, %v2335
      %v2681 = vadd.f32 %v2167, %v2337
      %v2682 = vadd.f32 %v2168, %v2339
      %v2683 = vadd.f32 %v2169, %v2341
      %v2684 = vadd.f32 %v2170, %v2343
      %v2685 = vadd.f32 %v2171, %v2345
      %v2686 = vadd.f32 %v2172, %v2347
      %v2687 = vadd.f32 %v2173, %v2349
      %v2688 = vadd.f32 %v2174, %v2351
      %v2689 = vadd.f32 %v2175, %v2353
      %v2690 = vadd.f32 %v2176, %v2355
      %v2691 = vadd.f32 %v2177, %v2357
      %v2692 = vadd.f32 %v2178, %v2359
      %v2693 = vadd.f32 %v2179, %v2361
      %v2694 = vadd.f32 %v2180, %v2363
      %v2695 = vadd.f32 %v2181, %v2365
      %v2696 = vadd.f32 %v2182, %v2367
      %v2697 = vadd.f32 %v2183, %v2369
      %v2698 = vadd.f32 %v2184, %v2371
      %v2699 = vadd.f32 %v2185, %v2373
      %v2700 = vadd.f32 %v2186, %v2375
      %v2701 = vadd.f32 %v2187, %v2377
      %v2702 = vadd.f32 %v2188, %v2379
      %v2703 = vadd.f32 %v2189, %v2381
      %v2704 = vadd.f32 %v2190, %v2383
      %v2705 = vadd.f32 %v2191, %v2385
      %v2706 = vadd.f32 %v2192, %v2387
      %v2707 = vadd.f32 %v2193, %v2389
      %v2708 = vadd.f32 %v2194, %v2391
      %v2709 = vadd.f32 %v2195, %v2393
      %v2710 = vadd.f32 %v2196, %v2395
      %v2711 = vadd.f32 %v2197, %v2397
      %v2712 = vadd.f32 %v2198, %v2399
      %v2713 = vadd.f32 %v2199, %v2401
      %v2714 = vadd.f32 %v2200, %v2403
      %v2715 = vadd.f32 %v2201, %v2405
      %v2716 = vadd.f32 %v2202, %v2407
      %v2717 = vadd.f32 %v2203, %v2409
      %v2718 = vadd.f32 %v2204, %v2411
      %v2719 = vadd.f32 %v2205, %v2413
      %v2720 = vadd.f32 %v2206, %v2415
      %v2721 = vadd.f32 %v2207, %v2417
      %v2722 = vadd.f32 %v2208, %v2419
      %v2723 = vadd.f32 %v2209, %v2421
      %v2724 = vadd.f32 %v2210, %v2423
      %v2725 = vadd.f32 %v2211, %v2425
      %v2726 = vadd.f32 %v2212, %v2427
      %v2727 = vadd.f32 %v2213, %v2429
      %v2728 = vadd.f32 %v2214, %v2431
      %v2729 = vadd.f32 %v2215, %v2433
      %v2730 = vadd.f32 %v2216, %v2435
      %v2731 = vadd.f32 %v2217, %v2437
      %v2732 = vadd.f32 %v2218, %v2439
      %v2733 = vadd.f32 %v2219, %v2441
      %v2734 = vadd.f32 %v2220, %v2443
      %v2735 = vadd.f32 %v2221, %v2445
      %v2736 = vadd.f32 %v2222, %v2447
      %v2737 = vadd.f32 %v2223, %v2449
      %v2738 = vadd.f32 %v2224, %v2451
      %v2739 = vadd.f32 %v2225, %v2453
      %v2740 = vadd.f32 %v2226, %v2455
      %v2741 = vadd.f32 %v2227, %v2457
      %v2742 = vadd.f32 %v2228, %v2459
      %v2743 = vadd.f32 %v2229, %v2461
      %v2744 = vadd.f32 %v2230, %v2463
      %v2745 = vadd.f32 %v2231, %v2465
      %v2746 = vadd.f32 %v2232, %v2467
      %v2747 = vadd.f32 %v2233, %v2469
      %v2748 = vadd.f32 %v2234, %v2471
      %v2749 = vadd.f32 %v2235, %v2473
      %v2750 = vadd.f32 %v2236, %v2475
      %v2751 = vadd.f32 %v2237, %v2477
      %v2752 = vadd.f32 %v2238, %v2479
      %v2753 = vadd.f32 %v2239, %v2481
      %v2754 = vadd.f32 %v2240, %v2483
      %v2755 = vadd.f32 %v2241, %v2485
      %v2756 = vadd.f32 %v2242, %v2487
      %v2757 = vadd.f32 %v2243, %v2489
      %v2758 = vadd.f32 %v2244, %v2491
      %v2759 = vadd.f32 %v2245, %v2493
      %v2760 = vadd.f32 %v2246, %v2495
      %v2761 = vadd.f32 %v2247, %v2497
      %v2762 = vadd.f32 %v2248, %v2499
      %v2763 = vadd.f32 %v2249, %v2501
      %v2764 = vadd.f32 %v2250, %v2503
      %v2765 = vadd.f32 %v2251, %v2505
      %v2766 = vadd.f32 %v2252, %v2507
      %v2767 = vadd.f32 %v2253, %v2509
      %v2768 = vadd.f32 %v2254, %v2511
      %v2769 = vadd.f32 %v2255, %v2513
      %v2770 = vld [vmem:[%s2] sm:$0x1]
      %v2772 = vlaneseq
      %v2773 = vshrl.u32 %v2772, 7
      %v2774 = vsub.s32 0, %v2773
      %v2775 = vrot.slane %v2770, %v2774
      %v2777 = vadd.f32 %v2642, %v2775
      %v2778 = vadd.f32 %v2643, %v2775
      %v2779 = vadd.f32 %v2644, %v2775
      %v2780 = vadd.f32 %v2645, %v2775
      %v2781 = vadd.f32 %v2646, %v2775
      %v2782 = vadd.f32 %v2647, %v2775
      %v2783 = vadd.f32 %v2648, %v2775
      %v2784 = vadd.f32 %v2649, %v2775
      %v2785 = vadd.f32 %v2650, %v2775
      %v2786 = vadd.f32 %v2651, %v2775
      %v2787 = vadd.f32 %v2652, %v2775
      %v2788 = vadd.f32 %v2653, %v2775
      %v2789 = vadd.f32 %v2654, %v2775
      %v2790 = vadd.f32 %v2655, %v2775
      %v2791 = vadd.f32 %v2656, %v2775
      %v2792 = vadd.f32 %v2657, %v2775
      %v2793 = vadd.f32 %v2658, %v2775
      %v2794 = vadd.f32 %v2659, %v2775
      %v2795 = vadd.f32 %v2660, %v2775
      %v2796 = vadd.f32 %v2661, %v2775
      %v2797 = vadd.f32 %v2662, %v2775
      %v2798 = vadd.f32 %v2663, %v2775
      %v2799 = vadd.f32 %v2664, %v2775
      %v2800 = vadd.f32 %v2665, %v2775
      %v2801 = vadd.f32 %v2666, %v2775
      %v2802 = vadd.f32 %v2667, %v2775
      %v2803 = vadd.f32 %v2668, %v2775
      %v2804 = vadd.f32 %v2669, %v2775
      %v2805 = vadd.f32 %v2670, %v2775
      %v2806 = vadd.f32 %v2671, %v2775
      %v2807 = vadd.f32 %v2672, %v2775
      %v2808 = vadd.f32 %v2673, %v2775
      %v2809 = vadd.f32 %v2674, %v2775
      %v2810 = vadd.f32 %v2675, %v2775
      %v2811 = vadd.f32 %v2676, %v2775
      %v2812 = vadd.f32 %v2677, %v2775
      %v2813 = vadd.f32 %v2678, %v2775
      %v2814 = vadd.f32 %v2679, %v2775
      %v2815 = vadd.f32 %v2680, %v2775
      %v2816 = vadd.f32 %v2681, %v2775
      %v2817 = vadd.f32 %v2682, %v2775
      %v2818 = vadd.f32 %v2683, %v2775
      %v2819 = vadd.f32 %v2684, %v2775
      %v2820 = vadd.f32 %v2685, %v2775
      %v2821 = vadd.f32 %v2686, %v2775
      %v2822 = vadd.f32 %v2687, %v2775
      %v2823 = vadd.f32 %v2688, %v2775
      %v2824 = vadd.f32 %v2689, %v2775
      %v2825 = vadd.f32 %v2690, %v2775
      %v2826 = vadd.f32 %v2691, %v2775
      %v2827 = vadd.f32 %v2692, %v2775
      %v2828 = vadd.f32 %v2693, %v2775
      %v2829 = vadd.f32 %v2694, %v2775
      %v2830 = vadd.f32 %v2695, %v2775
      %v2831 = vadd.f32 %v2696, %v2775
      %v2832 = vadd.f32 %v2697, %v2775
      %v2833 = vadd.f32 %v2698, %v2775
      %v2834 = vadd.f32 %v2699, %v2775
      %v2835 = vadd.f32 %v2700, %v2775
      %v2836 = vadd.f32 %v2701, %v2775
      %v2837 = vadd.f32 %v2702, %v2775
      %v2838 = vadd.f32 %v2703, %v2775
      %v2839 = vadd.f32 %v2704, %v2775
      %v2840 = vadd.f32 %v2705, %v2775
      %v2841 = vadd.f32 %v2706, %v2775
      %v2842 = vadd.f32 %v2707, %v2775
      %v2843 = vadd.f32 %v2708, %v2775
      %v2844 = vadd.f32 %v2709, %v2775
      %v2845 = vadd.f32 %v2710, %v2775
      %v2846 = vadd.f32 %v2711, %v2775
      %v2847 = vadd.f32 %v2712, %v2775
      %v2848 = vadd.f32 %v2713, %v2775
      %v2849 = vadd.f32 %v2714, %v2775
      %v2850 = vadd.f32 %v2715, %v2775
      %v2851 = vadd.f32 %v2716, %v2775
      %v2852 = vadd.f32 %v2717, %v2775
      %v2853 = vadd.f32 %v2718, %v2775
      %v2854 = vadd.f32 %v2719, %v2775
      %v2855 = vadd.f32 %v2720, %v2775
      %v2856 = vadd.f32 %v2721, %v2775
      %v2857 = vadd.f32 %v2722, %v2775
      %v2858 = vadd.f32 %v2723, %v2775
      %v2859 = vadd.f32 %v2724, %v2775
      %v2860 = vadd.f32 %v2725, %v2775
      %v2861 = vadd.f32 %v2726, %v2775
      %v2862 = vadd.f32 %v2727, %v2775
      %v2863 = vadd.f32 %v2728, %v2775
      %v2864 = vadd.f32 %v2729, %v2775
      %v2865 = vadd.f32 %v2730, %v2775
      %v2866 = vadd.f32 %v2731, %v2775
      %v2867 = vadd.f32 %v2732, %v2775
      %v2868 = vadd.f32 %v2733, %v2775
      %v2869 = vadd.f32 %v2734, %v2775
      %v2870 = vadd.f32 %v2735, %v2775
      %v2871 = vadd.f32 %v2736, %v2775
      %v2872 = vadd.f32 %v2737, %v2775
      %v2873 = vadd.f32 %v2738, %v2775
      %v2874 = vadd.f32 %v2739, %v2775
      %v2875 = vadd.f32 %v2740, %v2775
      %v2876 = vadd.f32 %v2741, %v2775
      %v2877 = vadd.f32 %v2742, %v2775
      %v2878 = vadd.f32 %v2743, %v2775
      %v2879 = vadd.f32 %v2744, %v2775
      %v2880 = vadd.f32 %v2745, %v2775
      %v2881 = vadd.f32 %v2746, %v2775
      %v2882 = vadd.f32 %v2747, %v2775
      %v2883 = vadd.f32 %v2748, %v2775
      %v2884 = vadd.f32 %v2749, %v2775
      %v2885 = vadd.f32 %v2750, %v2775
      %v2886 = vadd.f32 %v2751, %v2775
      %v2887 = vadd.f32 %v2752, %v2775
      %v2888 = vadd.f32 %v2753, %v2775
      %v2889 = vadd.f32 %v2754, %v2775
      %v2890 = vadd.f32 %v2755, %v2775
      %v2891 = vadd.f32 %v2756, %v2775
      %v2892 = vadd.f32 %v2757, %v2775
      %v2893 = vadd.f32 %v2758, %v2775
      %v2894 = vadd.f32 %v2759, %v2775
      %v2895 = vadd.f32 %v2760, %v2775
      %v2896 = vadd.f32 %v2761, %v2775
      %v2897 = vadd.f32 %v2762, %v2775
      %v2898 = vadd.f32 %v2763, %v2775
      %v2899 = vadd.f32 %v2764, %v2775
      %v2900 = vadd.f32 %v2765, %v2775
      %v2901 = vadd.f32 %v2766, %v2775
      %v2902 = vadd.f32 %v2767, %v2775
      %v2903 = vadd.f32 %v2768, %v2775
      %v2904 = vadd.f32 %v2769, %v2775
      %v2905 = vmax.f32 %v2777, 0.0
      %v2906 = vmax.f32 %v2778, 0.0
      %v2907 = vmax.f32 %v2779, 0.0
      %v2908 = vmax.f32 %v2780, 0.0
      %v2909 = vmax.f32 %v2781, 0.0
      %v2910 = vmax.f32 %v2782, 0.0
      %v2911 = vmax.f32 %v2783, 0.0
      %v2912 = vmax.f32 %v2784, 0.0
      %v2913 = vmax.f32 %v2785, 0.0
      %v2914 = vmax.f32 %v2786, 0.0
      %v2915 = vmax.f32 %v2787, 0.0
      %v2916 = vmax.f32 %v2788, 0.0
      %v2917 = vmax.f32 %v2789, 0.0
      %v2918 = vmax.f32 %v2790, 0.0
      %v2919 = vmax.f32 %v2791, 0.0
      %v2920 = vmax.f32 %v2792, 0.0
      %v2921 = vmax.f32 %v2793, 0.0
      %v2922 = vmax.f32 %v2794, 0.0
      %v2923 = vmax.f32 %v2795, 0.0
      %v2924 = vmax.f32 %v2796, 0.0
      %v2925 = vmax.f32 %v2797, 0.0
      %v2926 = vmax.f32 %v2798, 0.0
      %v2927 = vmax.f32 %v2799, 0.0
      %v2928 = vmax.f32 %v2800, 0.0
      %v2929 = vmax.f32 %v2801, 0.0
      %v2930 = vmax.f32 %v2802, 0.0
      %v2931 = vmax.f32 %v2803, 0.0
      %v2932 = vmax.f32 %v2804, 0.0
      %v2933 = vmax.f32 %v2805, 0.0
      %v2934 = vmax.f32 %v2806, 0.0
      %v2935 = vmax.f32 %v2807, 0.0
      %v2936 = vmax.f32 %v2808, 0.0
      %v2937 = vmax.f32 %v2809, 0.0
      %v2938 = vmax.f32 %v2810, 0.0
      %v2939 = vmax.f32 %v2811, 0.0
      %v2940 = vmax.f32 %v2812, 0.0
      %v2941 = vmax.f32 %v2813, 0.0
      %v2942 = vmax.f32 %v2814, 0.0
      %v2943 = vmax.f32 %v2815, 0.0
      %v2944 = vmax.f32 %v2816, 0.0
      %v2945 = vmax.f32 %v2817, 0.0
      %v2946 = vmax.f32 %v2818, 0.0
      %v2947 = vmax.f32 %v2819, 0.0
      %v2948 = vmax.f32 %v2820, 0.0
      %v2949 = vmax.f32 %v2821, 0.0
      %v2950 = vmax.f32 %v2822, 0.0
      %v2951 = vmax.f32 %v2823, 0.0
      %v2952 = vmax.f32 %v2824, 0.0
      %v2953 = vmax.f32 %v2825, 0.0
      %v2954 = vmax.f32 %v2826, 0.0
      %v2955 = vmax.f32 %v2827, 0.0
      %v2956 = vmax.f32 %v2828, 0.0
      %v2957 = vmax.f32 %v2829, 0.0
      %v2958 = vmax.f32 %v2830, 0.0
      %v2959 = vmax.f32 %v2831, 0.0
      %v2960 = vmax.f32 %v2832, 0.0
      %v2961 = vmax.f32 %v2833, 0.0
      %v2962 = vmax.f32 %v2834, 0.0
      %v2963 = vmax.f32 %v2835, 0.0
      %v2964 = vmax.f32 %v2836, 0.0
      %v2965 = vmax.f32 %v2837, 0.0
      %v2966 = vmax.f32 %v2838, 0.0
      %v2967 = vmax.f32 %v2839, 0.0
      %v2968 = vmax.f32 %v2840, 0.0
      %v2969 = vmax.f32 %v2841, 0.0
      %v2970 = vmax.f32 %v2842, 0.0
      %v2971 = vmax.f32 %v2843, 0.0
      %v2972 = vmax.f32 %v2844, 0.0
      %v2973 = vmax.f32 %v2845, 0.0
      %v2974 = vmax.f32 %v2846, 0.0
      %v2975 = vmax.f32 %v2847, 0.0
      %v2976 = vmax.f32 %v2848, 0.0
      %v2977 = vmax.f32 %v2849, 0.0
      %v2978 = vmax.f32 %v2850, 0.0
      %v2979 = vmax.f32 %v2851, 0.0
      %v2980 = vmax.f32 %v2852, 0.0
      %v2981 = vmax.f32 %v2853, 0.0
      %v2982 = vmax.f32 %v2854, 0.0
      %v2983 = vmax.f32 %v2855, 0.0
      %v2984 = vmax.f32 %v2856, 0.0
      %v2985 = vmax.f32 %v2857, 0.0
      %v2986 = vmax.f32 %v2858, 0.0
      %v2987 = vmax.f32 %v2859, 0.0
      %v2988 = vmax.f32 %v2860, 0.0
      %v2989 = vmax.f32 %v2861, 0.0
      %v2990 = vmax.f32 %v2862, 0.0
      %v2991 = vmax.f32 %v2863, 0.0
      %v2992 = vmax.f32 %v2864, 0.0
      %v2993 = vmax.f32 %v2865, 0.0
      %v2994 = vmax.f32 %v2866, 0.0
      %v2995 = vmax.f32 %v2867, 0.0
      %v2996 = vmax.f32 %v2868, 0.0
      %v2997 = vmax.f32 %v2869, 0.0
      %v2998 = vmax.f32 %v2870, 0.0
      %v2999 = vmax.f32 %v2871, 0.0
      %v3000 = vmax.f32 %v2872, 0.0
      %v3001 = vmax.f32 %v2873, 0.0
      %v3002 = vmax.f32 %v2874, 0.0
      %v3003 = vmax.f32 %v2875, 0.0
      %v3004 = vmax.f32 %v2876, 0.0
      %v3005 = vmax.f32 %v2877, 0.0
      %v3006 = vmax.f32 %v2878, 0.0
      %v3007 = vmax.f32 %v2879, 0.0
      %v3008 = vmax.f32 %v2880, 0.0
      %v3009 = vmax.f32 %v2881, 0.0
      %v3010 = vmax.f32 %v2882, 0.0
      %v3011 = vmax.f32 %v2883, 0.0
      %v3012 = vmax.f32 %v2884, 0.0
      %v3013 = vmax.f32 %v2885, 0.0
      %v3014 = vmax.f32 %v2886, 0.0
      %v3015 = vmax.f32 %v2887, 0.0
      %v3016 = vmax.f32 %v2888, 0.0
      %v3017 = vmax.f32 %v2889, 0.0
      %v3018 = vmax.f32 %v2890, 0.0
      %v3019 = vmax.f32 %v2891, 0.0
      %v3020 = vmax.f32 %v2892, 0.0
      %v3021 = vmax.f32 %v2893, 0.0
      %v3022 = vmax.f32 %v2894, 0.0
      %v3023 = vmax.f32 %v2895, 0.0
      %v3024 = vmax.f32 %v2896, 0.0
      %v3025 = vmax.f32 %v2897, 0.0
      %v3026 = vmax.f32 %v2898, 0.0
      %v3027 = vmax.f32 %v2899, 0.0
      %v3028 = vmax.f32 %v2900, 0.0
      %v3029 = vmax.f32 %v2901, 0.0
      %v3030 = vmax.f32 %v2902, 0.0
      %v3031 = vmax.f32 %v2903, 0.0
      %v3032 = vmax.f32 %v2904, 0.0
      %v3033 = vmax.f32 %v2905, %v2907
      %v3034 = vmax.f32 %v2906, %v2908
      %v3035 = vmax.f32 %v2909, %v2911
      %v3036 = vmax.f32 %v2910, %v2912
      %v3037 = vmax.f32 %v2913, %v2915
      %v3038 = vmax.f32 %v2914, %v2916
      %v3039 = vmax.f32 %v2917, %v2919
      %v3040 = vmax.f32 %v2918, %v2920
      %v3041 = vmax.f32 %v2921, %v2923
      %v3042 = vmax.f32 %v2922, %v2924
      %v3043 = vmax.f32 %v2925, %v2927
      %v3044 = vmax.f32 %v2926, %v2928
      %v3045 = vmax.f32 %v2929, %v2931
      %v3046 = vmax.f32 %v2930, %v2932
      %v3047 = vmax.f32 %v2933, %v2935
      %v3048 = vmax.f32 %v2934, %v2936
      %v3049 = vmax.f32 %v2937, %v2939
      %v3050 = vmax.f32 %v2938, %v2940
      %v3051 = vmax.f32 %v2941, %v2943
      %v3052 = vmax.f32 %v2942, %v2944
      %v3053 = vmax.f32 %v2945, %v2947
      %v3054 = vmax.f32 %v2946, %v2948
      %v3055 = vmax.f32 %v2949, %v2951
      %v3056 = vmax.f32 %v2950, %v2952
      %v3057 = vmax.f32 %v2953, %v2955
      %v3058 = vmax.f32 %v2954, %v2956
      %v3059 = vmax.f32 %v2957, %v2959
      %v3060 = vmax.f32 %v2958, %v2960
      %v3061 = vmax.f32 %v2961, %v2963
      %v3062 = vmax.f32 %v2962, %v2964
      %v3063 = vmax.f32 %v2965, %v2967
      %v3064 = vmax.f32 %v2966, %v2968
      %v3065 = vmax.f32 %v2969, %v2971
      %v3066 = vmax.f32 %v2970, %v2972
      %v3067 = vmax.f32 %v2973, %v2975
      %v3068 = vmax.f32 %v2974, %v2976
      %v3069 = vmax.f32 %v2977, %v2979
      %v3070 = vmax.f32 %v2978, %v2980
      %v3071 = vmax.f32 %v2981, %v2983
      %v3072 = vmax.f32 %v2982, %v2984
      %v3073 = vmax.f32 %v2985, %v2987
      %v3074 = vmax.f32 %v2986, %v2988
      %v3075 = vmax.f32 %v2989, %v2991
      %v3076 = vmax.f32 %v2990, %v2992
      %v3077 = vmax.f32 %v2993, %v2995
      %v3078 = vmax.f32 %v2994, %v2996
      %v3079 = vmax.f32 %v2997, %v2999
      %v3080 = vmax.f32 %v2998, %v3000
      %v3081 = vmax.f32 %v3001, %v3003
      %v3082 = vmax.f32 %v3002, %v3004
      %v3083 = vmax.f32 %v3005, %v3007
      %v3084 = vmax.f32 %v3006, %v3008
      %v3085 = vmax.f32 %v3009, %v3011
      %v3086 = vmax.f32 %v3010, %v3012
      %v3087 = vmax.f32 %v3013, %v3015
      %v3088 = vmax.f32 %v3014, %v3016
      %v3089 = vmax.f32 %v3017, %v3019
      %v3090 = vmax.f32 %v3018, %v3020
      %v3091 = vmax.f32 %v3021, %v3023
      %v3092 = vmax.f32 %v3022, %v3024
      %v3093 = vmax.f32 %v3025, %v3027
      %v3094 = vmax.f32 %v3026, %v3028
      %v3095 = vmax.f32 %v3029, %v3031
      %v3096 = vmax.f32 %v3030, %v3032
      %v3097 = vpack.c.bf16 %v3034, %v3033
      %v3098 = vpack.c.bf16 %v3036, %v3035
      %v3099 = vpack.c.bf16 %v3038, %v3037
      %v3100 = vpack.c.bf16 %v3040, %v3039
      %v3101 = vpack.c.bf16 %v3042, %v3041
      %v3102 = vpack.c.bf16 %v3044, %v3043
      %v3103 = vpack.c.bf16 %v3046, %v3045
      %v3104 = vpack.c.bf16 %v3048, %v3047
      %v3105 = vpack.c.bf16 %v3050, %v3049
      %v3106 = vpack.c.bf16 %v3052, %v3051
      %v3107 = vpack.c.bf16 %v3054, %v3053
      %v3108 = vpack.c.bf16 %v3056, %v3055
      %v3109 = vpack.c.bf16 %v3058, %v3057
      %v3110 = vpack.c.bf16 %v3060, %v3059
      %v3111 = vpack.c.bf16 %v3062, %v3061
      %v3112 = vpack.c.bf16 %v3064, %v3063
      %v3113 = vpack.c.bf16 %v3066, %v3065
      %v3114 = vpack.c.bf16 %v3068, %v3067
      %v3115 = vpack.c.bf16 %v3070, %v3069
      %v3116 = vpack.c.bf16 %v3072, %v3071
      %v3117 = vpack.c.bf16 %v3074, %v3073
      %v3118 = vpack.c.bf16 %v3076, %v3075
      %v3119 = vpack.c.bf16 %v3078, %v3077
      %v3120 = vpack.c.bf16 %v3080, %v3079
      %v3121 = vpack.c.bf16 %v3082, %v3081
      %v3122 = vpack.c.bf16 %v3084, %v3083
      %v3123 = vpack.c.bf16 %v3086, %v3085
      %v3124 = vpack.c.bf16 %v3088, %v3087
      %v3125 = vpack.c.bf16 %v3090, %v3089
      %v3126 = vpack.c.bf16 %v3092, %v3091
      %v3127 = vpack.c.bf16 %v3094, %v3093
      %v3128 = vpack.c.bf16 %v3096, %v3095
      %v3161 = vunpack.c.l.b16 %v3097
      %v3162 = vunpack.c.h.b16 %v3097
      %v3163 = vunpack.c.l.b16 %v3098
      %v3164 = vunpack.c.h.b16 %v3098
      %v3165 = vunpack.c.l.b16 %v3099
      %v3166 = vunpack.c.h.b16 %v3099
      %v3167 = vunpack.c.l.b16 %v3100
      %v3168 = vunpack.c.h.b16 %v3100
      %v3169 = vunpack.c.l.b16 %v3101
      %v3170 = vunpack.c.h.b16 %v3101
      %v3171 = vunpack.c.l.b16 %v3102
      %v3172 = vunpack.c.h.b16 %v3102
      %v3173 = vunpack.c.l.b16 %v3103
      %v3174 = vunpack.c.h.b16 %v3103
      %v3175 = vunpack.c.l.b16 %v3104
      %v3176 = vunpack.c.h.b16 %v3104
      %v3177 = vunpack.c.l.b16 %v3105
      %v3178 = vunpack.c.h.b16 %v3105
      %v3179 = vunpack.c.l.b16 %v3106
      %v3180 = vunpack.c.h.b16 %v3106
      %v3181 = vunpack.c.l.b16 %v3107
      %v3182 = vunpack.c.h.b16 %v3107
      %v3183 = vunpack.c.l.b16 %v3108
      %v3184 = vunpack.c.h.b16 %v3108
      %v3185 = vunpack.c.l.b16 %v3109
      %v3186 = vunpack.c.h.b16 %v3109
      %v3187 = vunpack.c.l.b16 %v3110
      %v3188 = vunpack.c.h.b16 %v3110
      %v3189 = vunpack.c.l.b16 %v3111
      %v3190 = vunpack.c.h.b16 %v3111
      %v3191 = vunpack.c.l.b16 %v3112
      %v3192 = vunpack.c.h.b16 %v3112
      %v3193 = vunpack.c.l.b16 %v3113
      %v3194 = vunpack.c.h.b16 %v3113
      %v3195 = vunpack.c.l.b16 %v3114
      %v3196 = vunpack.c.h.b16 %v3114
      %v3197 = vunpack.c.l.b16 %v3115
      %v3198 = vunpack.c.h.b16 %v3115
      %v3199 = vunpack.c.l.b16 %v3116
      %v3200 = vunpack.c.h.b16 %v3116
      %v3201 = vunpack.c.l.b16 %v3117
      %v3202 = vunpack.c.h.b16 %v3117
      %v3203 = vunpack.c.l.b16 %v3118
      %v3204 = vunpack.c.h.b16 %v3118
      %v3205 = vunpack.c.l.b16 %v3119
      %v3206 = vunpack.c.h.b16 %v3119
      %v3207 = vunpack.c.l.b16 %v3120
      %v3208 = vunpack.c.h.b16 %v3120
      %v3209 = vunpack.c.l.b16 %v3121
      %v3210 = vunpack.c.h.b16 %v3121
      %v3211 = vunpack.c.l.b16 %v3122
      %v3212 = vunpack.c.h.b16 %v3122
      %v3213 = vunpack.c.l.b16 %v3123
      %v3214 = vunpack.c.h.b16 %v3123
      %v3215 = vunpack.c.l.b16 %v3124
      %v3216 = vunpack.c.h.b16 %v3124
      %v3217 = vunpack.c.l.b16 %v3125
      %v3218 = vunpack.c.h.b16 %v3125
      %v3219 = vunpack.c.l.b16 %v3126
      %v3220 = vunpack.c.h.b16 %v3126
      %v3221 = vunpack.c.l.b16 %v3127
      %v3222 = vunpack.c.h.b16 %v3127
      %v3223 = vunpack.c.l.b16 %v3128
      %v3224 = vunpack.c.h.b16 %v3128
      %v3225 = vpack.c.b16 %v3161, %v3161
      %v3226 = vpack.c.b16 %v3162, %v3162
      %v3227 = vpack.c.b16 %v3163, %v3163
      %v3228 = vpack.c.b16 %v3164, %v3164
      %v3229 = vpack.c.b16 %v3165, %v3165
      %v3230 = vpack.c.b16 %v3166, %v3166
      %v3231 = vpack.c.b16 %v3167, %v3167
      %v3232 = vpack.c.b16 %v3168, %v3168
      %v3233 = vpack.c.b16 %v3169, %v3169
      %v3234 = vpack.c.b16 %v3170, %v3170
      %v3235 = vpack.c.b16 %v3171, %v3171
      %v3236 = vpack.c.b16 %v3172, %v3172
      %v3237 = vpack.c.b16 %v3173, %v3173
      %v3238 = vpack.c.b16 %v3174, %v3174
      %v3239 = vpack.c.b16 %v3175, %v3175
      %v3240 = vpack.c.b16 %v3176, %v3176
      %v3241 = vpack.c.b16 %v3177, %v3177
      %v3242 = vpack.c.b16 %v3178, %v3178
      %v3243 = vpack.c.b16 %v3179, %v3179
      %v3244 = vpack.c.b16 %v3180, %v3180
      %v3245 = vpack.c.b16 %v3181, %v3181
      %v3246 = vpack.c.b16 %v3182, %v3182
      %v3247 = vpack.c.b16 %v3183, %v3183
      %v3248 = vpack.c.b16 %v3184, %v3184
      %v3249 = vpack.c.b16 %v3185, %v3185
      %v3250 = vpack.c.b16 %v3186, %v3186
      %v3251 = vpack.c.b16 %v3187, %v3187
      %v3252 = vpack.c.b16 %v3188, %v3188
      %v3253 = vpack.c.b16 %v3189, %v3189
      %v3254 = vpack.c.b16 %v3190, %v3190
      %v3255 = vpack.c.b16 %v3191, %v3191
      %v3256 = vpack.c.b16 %v3192, %v3192
      %v3257 = vpack.c.b16 %v3193, %v3193
      %v3258 = vpack.c.b16 %v3194, %v3194
      %v3259 = vpack.c.b16 %v3195, %v3195
      %v3260 = vpack.c.b16 %v3196, %v3196
      %v3261 = vpack.c.b16 %v3197, %v3197
      %v3262 = vpack.c.b16 %v3198, %v3198
      %v3263 = vpack.c.b16 %v3199, %v3199
      %v3264 = vpack.c.b16 %v3200, %v3200
      %v3265 = vpack.c.b16 %v3201, %v3201
      %v3266 = vpack.c.b16 %v3202, %v3202
      %v3267 = vpack.c.b16 %v3203, %v3203
      %v3268 = vpack.c.b16 %v3204, %v3204
      %v3269 = vpack.c.b16 %v3205, %v3205
      %v3270 = vpack.c.b16 %v3206, %v3206
      %v3271 = vpack.c.b16 %v3207, %v3207
      %v3272 = vpack.c.b16 %v3208, %v3208
      %v3273 = vpack.c.b16 %v3209, %v3209
      %v3274 = vpack.c.b16 %v3210, %v3210
      %v3275 = vpack.c.b16 %v3211, %v3211
      %v3276 = vpack.c.b16 %v3212, %v3212
      %v3277 = vpack.c.b16 %v3213, %v3213
      %v3278 = vpack.c.b16 %v3214, %v3214
      %v3279 = vpack.c.b16 %v3215, %v3215
      %v3280 = vpack.c.b16 %v3216, %v3216
      %v3281 = vpack.c.b16 %v3217, %v3217
      %v3282 = vpack.c.b16 %v3218, %v3218
      %v3283 = vpack.c.b16 %v3219, %v3219
      %v3284 = vpack.c.b16 %v3220, %v3220
      %v3285 = vpack.c.b16 %v3221, %v3221
      %v3286 = vpack.c.b16 %v3222, %v3222
      %v3287 = vpack.c.b16 %v3223, %v3223
      %v3288 = vpack.c.b16 %v3224, %v3224
      %s3353 = scalar_lea.vmem [#allocation2], 8
      %vm3354 = vcmask 257024
      %3355 = vst.msk [vmem:[%s3353] sm:$0xf] %vm3354, %v3225
      %3356 = vst.msk [vmem:[%s3353 + $0x4] sm:$0xf] %vm3354, %v3226
      %3357 = vst.msk [vmem:[%s3353 + $0x8] sm:$0xf] %vm3354, %v3227
      %3358 = vst.msk [vmem:[%s3353 + $0xc] sm:$0xf] %vm3354, %v3228
      %3359 = vst.msk [vmem:[%s3353 + $0x10] sm:$0xf] %vm3354, %v3229
      %3360 = vst.msk [vmem:[%s3353 + $0x14] sm:$0xf] %vm3354, %v3230
      %3361 = vst.msk [vmem:[%s3353 + $0x18] sm:$0xf] %vm3354, %v3231
      %3362 = vst.msk [vmem:[%s3353 + $0x1c] sm:$0xf] %vm3354, %v3232
      %3363 = vst.msk [vmem:[%s3353 + $0x20] sm:$0xf] %vm3354, %v3233
      %3364 = vst.msk [vmem:[%s3353 + $0x24] sm:$0xf] %vm3354, %v3234
      %3365 = vst.msk [vmem:[%s3353 + $0x28] sm:$0xf] %vm3354, %v3235
      %3366 = vst.msk [vmem:[%s3353 + $0x2c] sm:$0xf] %vm3354, %v3236
      %3367 = vst.msk [vmem:[%s3353 + $0x30] sm:$0xf] %vm3354, %v3237
      %3368 = vst.msk [vmem:[%s3353 + $0x34] sm:$0xf] %vm3354, %v3238
      %3369 = vst.msk [vmem:[%s3353 + $0x38] sm:$0xf] %vm3354, %v3239
      %3370 = vst.msk [vmem:[%s3353 + $0x3c] sm:$0xf] %vm3354, %v3240
      %3371 = vst.msk [vmem:[%s3353 + $0x40] sm:$0xf] %vm3354, %v3241
      %3372 = vst.msk [vmem:[%s3353 + $0x44] sm:$0xf] %vm3354, %v3242
      %3373 = vst.msk [vmem:[%s3353 + $0x48] sm:$0xf] %vm3354, %v3243
      %3374 = vst.msk [vmem:[%s3353 + $0x4c] sm:$0xf] %vm3354, %v3244
      %3375 = vst.msk [vmem:[%s3353 + $0x50] sm:$0xf] %vm3354, %v3245
      %3376 = vst.msk [vmem:[%s3353 + $0x54] sm:$0xf] %vm3354, %v3246
      %3377 = vst.msk [vmem:[%s3353 + $0x58] sm:$0xf] %vm3354, %v3247
      %3378 = vst.msk [vmem:[%s3353 + $0x5c] sm:$0xf] %vm3354, %v3248
      %3379 = vst.msk [vmem:[%s3353 + $0x60] sm:$0xf] %vm3354, %v3249
      %3380 = vst.msk [vmem:[%s3353 + $0x64] sm:$0xf] %vm3354, %v3250
      %3381 = vst.msk [vmem:[%s3353 + $0x68] sm:$0xf] %vm3354, %v3251
      %3382 = vst.msk [vmem:[%s3353 + $0x6c] sm:$0xf] %vm3354, %v3252
      %3383 = vst.msk [vmem:[%s3353 + $0x70] sm:$0xf] %vm3354, %v3253
      %3384 = vst.msk [vmem:[%s3353 + $0x74] sm:$0xf] %vm3354, %v3254
      %3385 = vst.msk [vmem:[%s3353 + $0x78] sm:$0xf] %vm3354, %v3255
      %3386 = vst.msk [vmem:[%s3353 + $0x7c] sm:$0xf] %vm3354, %v3256
      %3387 = vst.msk [vmem:[%s3353 + $0x80] sm:$0xf] %vm3354, %v3257
      %3388 = vst.msk [vmem:[%s3353 + $0x84] sm:$0xf] %vm3354, %v3258
      %3389 = vst.msk [vmem:[%s3353 + $0x88] sm:$0xf] %vm3354, %v3259
      %3390 = vst.msk [vmem:[%s3353 + $0x8c] sm:$0xf] %vm3354, %v3260
      %3391 = vst.msk [vmem:[%s3353 + $0x90] sm:$0xf] %vm3354, %v3261
      %3392 = vst.msk [vmem:[%s3353 + $0x94] sm:$0xf] %vm3354, %v3262
      %3393 = vst.msk [vmem:[%s3353 + $0x98] sm:$0xf] %vm3354, %v3263
      %3394 = vst.msk [vmem:[%s3353 + $0x9c] sm:$0xf] %vm3354, %v3264
      %3395 = vst.msk [vmem:[%s3353 + $0xa0] sm:$0xf] %vm3354, %v3265
      %3396 = vst.msk [vmem:[%s3353 + $0xa4] sm:$0xf] %vm3354, %v3266
      %3397 = vst.msk [vmem:[%s3353 + $0xa8] sm:$0xf] %vm3354, %v3267
      %3398 = vst.msk [vmem:[%s3353 + $0xac] sm:$0xf] %vm3354, %v3268
      %3399 = vst.msk [vmem:[%s3353 + $0xb0] sm:$0xf] %vm3354, %v3269
      %3400 = vst.msk [vmem:[%s3353 + $0xb4] sm:$0xf] %vm3354, %v3270
      %3401 = vst.msk [vmem:[%s3353 + $0xb8] sm:$0xf] %vm3354, %v3271
      %3402 = vst.msk [vmem:[%s3353 + $0xbc] sm:$0xf] %vm3354, %v3272
      %3403 = vst.msk [vmem:[%s3353 + $0xc0] sm:$0xf] %vm3354, %v3273
      %3404 = vst.msk [vmem:[%s3353 + $0xc4] sm:$0xf] %vm3354, %v3274
      %3405 = vst.msk [vmem:[%s3353 + $0xc8] sm:$0xf] %vm3354, %v3275
      %3406 = vst.msk [vmem:[%s3353 + $0xcc] sm:$0xf] %vm3354, %v3276
      %3407 = vst.msk [vmem:[%s3353 + $0xd0] sm:$0xf] %vm3354, %v3277
      %3408 = vst.msk [vmem:[%s3353 + $0xd4] sm:$0xf] %vm3354, %v3278
      %3409 = vst.msk [vmem:[%s3353 + $0xd8] sm:$0xf] %vm3354, %v3279
      %3410 = vst.msk [vmem:[%s3353 + $0xdc] sm:$0xf] %vm3354, %v3280
      %3411 = vst.msk [vmem:[%s3353 + $0xe0] sm:$0xf] %vm3354, %v3281
      %3412 = vst.msk [vmem:[%s3353 + $0xe4] sm:$0xf] %vm3354, %v3282
      %3413 = vst.msk [vmem:[%s3353 + $0xe8] sm:$0xf] %vm3354, %v3283
      %3414 = vst.msk [vmem:[%s3353 + $0xec] sm:$0xf] %vm3354, %v3284
      %3415 = vst.msk [vmem:[%s3353 + $0xf0] sm:$0xf] %vm3354, %v3285
      %3416 = vst.msk [vmem:[%s3353 + $0xf4] sm:$0xf] %vm3354, %v3286
      %3417 = vst.msk [vmem:[%s3353 + $0xf8] sm:$0xf] %vm3354, %v3287
      %3418 = vst.msk [vmem:[%s3353 + $0xfc] sm:$0xf] %vm3354, %v3288
      %3419 = vst.msk [vmem:[#allocation2] sm:$0xf] %vm3354, 0
      %3420 = vst.msk [vmem:[#allocation2 + $0x4] sm:$0xf] %vm3354, 0
      %s3421 = scalar_lea.vmem [#allocation2], 264
      %3422 = vst.msk [vmem:[%s3421] sm:$0xf] %vm3354, 0
      %3423 = vst.msk [vmem:[%s3421 + $0x4] sm:$0xf] %vm3354, 0
      %v3424 = vld [vmem:[#allocation2] sm:$0xf]
      %v3425 = vld [vmem:[#allocation2 + $0x4] sm:$0xf]
      %v3426 = vld [vmem:[#allocation2 + $0x8] sm:$0xf]
      %v3427 = vld [vmem:[#allocation2 + $0xc] sm:$0xf]
      %v3428 = vld [vmem:[#allocation2 + $0x10] sm:$0xf]
      %v3429 = vld [vmem:[#allocation2 + $0x14] sm:$0xf]
      %v3430 = vld [vmem:[#allocation2 + $0x18] sm:$0xf]
      %v3431 = vld [vmem:[#allocation2 + $0x1c] sm:$0xf]
      %v3432 = vld [vmem:[#allocation2 + $0x20] sm:$0xf]
      %v3433 = vld [vmem:[#allocation2 + $0x24] sm:$0xf]
      %v3434 = vld [vmem:[#allocation2 + $0x28] sm:$0xf]
      %v3435 = vld [vmem:[#allocation2 + $0x2c] sm:$0xf]
      %v3436 = vld [vmem:[#allocation2 + $0x30] sm:$0xf]
      %v3437 = vld [vmem:[#allocation2 + $0x34] sm:$0xf]
      %v3438 = vld [vmem:[#allocation2 + $0x38] sm:$0xf]
      %v3439 = vld [vmem:[#allocation2 + $0x3c] sm:$0xf]
      %v3440 = vld [vmem:[#allocation2 + $0x40] sm:$0xf]
      %v3441 = vld [vmem:[#allocation2 + $0x44] sm:$0xf]
      %v3442 = vld [vmem:[#allocation2 + $0x48] sm:$0xf]
      %v3443 = vld [vmem:[#allocation2 + $0x4c] sm:$0xf]
      %v3444 = vld [vmem:[#allocation2 + $0x50] sm:$0xf]
      %v3445 = vld [vmem:[#allocation2 + $0x54] sm:$0xf]
      %v3446 = vld [vmem:[#allocation2 + $0x58] sm:$0xf]
      %v3447 = vld [vmem:[#allocation2 + $0x5c] sm:$0xf]
      %v3448 = vld [vmem:[#allocation2 + $0x60] sm:$0xf]
      %v3449 = vld [vmem:[#allocation2 + $0x64] sm:$0xf]
      %v3450 = vld [vmem:[#allocation2 + $0x68] sm:$0xf]
      %v3451 = vld [vmem:[#allocation2 + $0x6c] sm:$0xf]
      %v3452 = vld [vmem:[#allocation2 + $0x70] sm:$0xf]
      %v3453 = vld [vmem:[#allocation2 + $0x74] sm:$0xf]
      %v3454 = vld [vmem:[#allocation2 + $0x78] sm:$0xf]
      %v3455 = vld [vmem:[#allocation2 + $0x7c] sm:$0xf]
      %v3456 = vld [vmem:[#allocation2 + $0x80] sm:$0xf]
      %v3457 = vld [vmem:[#allocation2 + $0x84] sm:$0xf]
      %v3458 = vld [vmem:[#allocation2 + $0x88] sm:$0xf]
      %v3459 = vld [vmem:[#allocation2 + $0x8c] sm:$0xf]
      %v3460 = vld [vmem:[#allocation2 + $0x90] sm:$0xf]
      %v3461 = vld [vmem:[#allocation2 + $0x94] sm:$0xf]
      %v3462 = vld [vmem:[#allocation2 + $0x98] sm:$0xf]
      %v3463 = vld [vmem:[#allocation2 + $0x9c] sm:$0xf]
      %v3464 = vld [vmem:[#allocation2 + $0xa0] sm:$0xf]
      %v3465 = vld [vmem:[#allocation2 + $0xa4] sm:$0xf]
      %v3466 = vld [vmem:[#allocation2 + $0xa8] sm:$0xf]
      %v3467 = vld [vmem:[#allocation2 + $0xac] sm:$0xf]
      %v3468 = vld [vmem:[#allocation2 + $0xb0] sm:$0xf]
      %v3469 = vld [vmem:[#allocation2 + $0xb4] sm:$0xf]
      %v3470 = vld [vmem:[#allocation2 + $0xb8] sm:$0xf]
      %v3471 = vld [vmem:[#allocation2 + $0xbc] sm:$0xf]
      %v3472 = vld [vmem:[#allocation2 + $0xc0] sm:$0xf]
      %v3473 = vld [vmem:[#allocation2 + $0xc4] sm:$0xf]
      %v3474 = vld [vmem:[#allocation2 + $0xc8] sm:$0xf]
      %v3475 = vld [vmem:[#allocation2 + $0xcc] sm:$0xf]
      %v3476 = vld [vmem:[#allocation2 + $0xd0] sm:$0xf]
      %v3477 = vld [vmem:[#allocation2 + $0xd4] sm:$0xf]
      %v3478 = vld [vmem:[#allocation2 + $0xd8] sm:$0xf]
      %v3479 = vld [vmem:[#allocation2 + $0xdc] sm:$0xf]
      %v3480 = vld [vmem:[#allocation2 + $0xe0] sm:$0xf]
      %v3481 = vld [vmem:[#allocation2 + $0xe4] sm:$0xf]
      %v3482 = vld [vmem:[#allocation2 + $0xe8] sm:$0xf]
      %v3483 = vld [vmem:[#allocation2 + $0xec] sm:$0xf]
      %v3484 = vld [vmem:[#allocation2 + $0xf0] sm:$0xf]
      %v3485 = vld [vmem:[#allocation2 + $0xf4] sm:$0xf]
      %v3486 = vld [vmem:[#allocation2 + $0xf8] sm:$0xf]
      %v3487 = vld [vmem:[#allocation2 + $0xfc] sm:$0xf]
      %v3488 = vld [vmem:[#allocation2 + $0x100] sm:$0xf]
      %v3489 = vld [vmem:[#allocation2 + $0x104] sm:$0xf]
      %v3490 = vld [vmem:[#allocation2 + $0x108] sm:$0xf]
      %v3491 = vld [vmem:[#allocation2 + $0x10c] sm:$0xf]
      %v3492 = vld [vmem:[%s3] sm:$0xf]
      %v3493 = vld [vmem:[%s3 + $0x4] sm:$0xf]
      %v3494 = vld [vmem:[%s3 + $0x8] sm:$0xf]
      %v3495 = vld [vmem:[%s3 + $0xc] sm:$0xf]
      %v3564 = vunpack.c.l.b16 %v3424
      %v3565 = vunpack.c.l.b16 %v3425
      %v3566 = vunpack.c.l.b16 %v3426
      %v3567 = vunpack.c.l.b16 %v3427
      %v3568 = vunpack.c.l.b16 %v3428
      %v3569 = vunpack.c.l.b16 %v3429
      %v3570 = vunpack.c.l.b16 %v3430
      %v3571 = vunpack.c.l.b16 %v3431
      %v3572 = vunpack.c.l.b16 %v3432
      %v3573 = vunpack.c.l.b16 %v3433
      %v3574 = vunpack.c.l.b16 %v3434
      %v3575 = vunpack.c.l.b16 %v3435
      %v3576 = vunpack.c.l.b16 %v3436
      %v3577 = vunpack.c.l.b16 %v3437
      %v3578 = vunpack.c.l.b16 %v3438
      %v3579 = vunpack.c.l.b16 %v3439
      %v3580 = vunpack.c.l.b16 %v3440
      %v3581 = vunpack.c.l.b16 %v3441
      %v3582 = vunpack.c.l.b16 %v3442
      %v3583 = vunpack.c.l.b16 %v3443
      %v3584 = vunpack.c.l.b16 %v3444
      %v3585 = vunpack.c.l.b16 %v3445
      %v3586 = vunpack.c.l.b16 %v3446
      %v3587 = vunpack.c.l.b16 %v3447
      %v3588 = vunpack.c.l.b16 %v3448
      %v3589 = vunpack.c.l.b16 %v3449
      %v3590 = vunpack.c.l.b16 %v3450
      %v3591 = vunpack.c.l.b16 %v3451
      %v3592 = vunpack.c.l.b16 %v3452
      %v3593 = vunpack.c.l.b16 %v3453
      %v3594 = vunpack.c.l.b16 %v3454
      %v3595 = vunpack.c.l.b16 %v3455
      %v3596 = vunpack.c.l.b16 %v3456
      %v3597 = vunpack.c.l.b16 %v3457
      %v3598 = vunpack.c.l.b16 %v3458
      %v3599 = vunpack.c.l.b16 %v3459
      %v3600 = vunpack.c.l.b16 %v3460
      %v3601 = vunpack.c.l.b16 %v3461
      %v3602 = vunpack.c.l.b16 %v3462
      %v3603 = vunpack.c.l.b16 %v3463
      %v3604 = vunpack.c.l.b16 %v3464
      %v3605 = vunpack.c.l.b16 %v3465
      %v3606 = vunpack.c.l.b16 %v3466
      %v3607 = vunpack.c.l.b16 %v3467
      %v3608 = vunpack.c.l.b16 %v3468
      %v3609 = vunpack.c.l.b16 %v3469
      %v3610 = vunpack.c.l.b16 %v3470
      %v3611 = vunpack.c.l.b16 %v3471
      %v3612 = vunpack.c.l.b16 %v3472
      %v3613 = vunpack.c.l.b16 %v3473
      %v3614 = vunpack.c.l.b16 %v3474
      %v3615 = vunpack.c.l.b16 %v3475
      %v3616 = vunpack.c.l.b16 %v3476
      %v3617 = vunpack.c.l.b16 %v3477
      %v3618 = vunpack.c.l.b16 %v3478
      %v3619 = vunpack.c.l.b16 %v3479
      %v3620 = vunpack.c.l.b16 %v3480
      %v3621 = vunpack.c.l.b16 %v3481
      %v3622 = vunpack.c.l.b16 %v3482
      %v3623 = vunpack.c.l.b16 %v3483
      %v3624 = vunpack.c.l.b16 %v3484
      %v3625 = vunpack.c.l.b16 %v3485
      %v3626 = vunpack.c.l.b16 %v3486
      %v3627 = vunpack.c.l.b16 %v3487
      %v3628 = vunpack.c.l.b16 %v3488
      %v3629 = vunpack.c.l.b16 %v3489
      %v3630 = vunpack.c.l.b16 %v3490
      %v3631 = vunpack.c.l.b16 %v3491
      %v3632 = vpack.c.b16 %v3565, %v3564
      %v3633 = vpack.c.b16 %v3567, %v3566
      %v3634 = vpack.c.b16 %v3569, %v3568
      %v3635 = vpack.c.b16 %v3571, %v3570
      %v3636 = vpack.c.b16 %v3573, %v3572
      %v3637 = vpack.c.b16 %v3575, %v3574
      %v3638 = vpack.c.b16 %v3577, %v3576
      %v3639 = vpack.c.b16 %v3579, %v3578
      %v3640 = vpack.c.b16 %v3581, %v3580
      %v3641 = vpack.c.b16 %v3583, %v3582
      %v3642 = vpack.c.b16 %v3585, %v3584
      %v3643 = vpack.c.b16 %v3587, %v3586
      %v3644 = vpack.c.b16 %v3589, %v3588
      %v3645 = vpack.c.b16 %v3591, %v3590
      %v3646 = vpack.c.b16 %v3593, %v3592
      %v3647 = vpack.c.b16 %v3595, %v3594
      %v3648 = vpack.c.b16 %v3597, %v3596
      %v3649 = vpack.c.b16 %v3599, %v3598
      %v3650 = vpack.c.b16 %v3601, %v3600
      %v3651 = vpack.c.b16 %v3603, %v3602
      %v3652 = vpack.c.b16 %v3605, %v3604
      %v3653 = vpack.c.b16 %v3607, %v3606
      %v3654 = vpack.c.b16 %v3609, %v3608
      %v3655 = vpack.c.b16 %v3611, %v3610
      %v3656 = vpack.c.b16 %v3613, %v3612
      %v3657 = vpack.c.b16 %v3615, %v3614
      %v3658 = vpack.c.b16 %v3617, %v3616
      %v3659 = vpack.c.b16 %v3619, %v3618
      %v3660 = vpack.c.b16 %v3621, %v3620
      %v3661 = vpack.c.b16 %v3623, %v3622
      %v3662 = vpack.c.b16 %v3625, %v3624
      %v3663 = vpack.c.b16 %v3627, %v3626
      %v3664 = vpack.c.b16 %v3629, %v3628
      %v3665 = vpack.c.b16 %v3631, %v3630
      %v3670 = vunpack.c.l.b16 %v3492
      %v3671 = vunpack.c.l.b16 %v3493
      %v3672 = vunpack.c.l.b16 %v3494
      %v3673 = vunpack.c.l.b16 %v3495
      %v3674 = vpack.c.b16 %v3671, %v3670
      %v3675 = vpack.c.b16 %v3673, %v3672
      %vm3678 = vcmask 261120
      %v3680 = vsel %vm3678, %v3632, 0
      %v3683 = vsel %vm3678, %v3633, 0
      %v3686 = vsel %vm3678, %v3634, 0
      %v3689 = vsel %vm3678, %v3635, 0
      %v3692 = vsel %vm3678, %v3636, 0
      %v3695 = vsel %vm3678, %v3637, 0
      %v3698 = vsel %vm3678, %v3638, 0
      %v3701 = vsel %vm3678, %v3639, 0
      %v3704 = vsel %vm3678, %v3640, 0
      %v3707 = vsel %vm3678, %v3641, 0
      %v3710 = vsel %vm3678, %v3642, 0
      %v3713 = vsel %vm3678, %v3643, 0
      %v3716 = vsel %vm3678, %v3644, 0
      %v3719 = vsel %vm3678, %v3645, 0
      %v3722 = vsel %vm3678, %v3646, 0
      %v3725 = vsel %vm3678, %v3647, 0
      %v3728 = vsel %vm3678, %v3648, 0
      %v3731 = vsel %vm3678, %v3649, 0
      %v3734 = vsel %vm3678, %v3650, 0
      %v3737 = vsel %vm3678, %v3651, 0
      %v3740 = vsel %vm3678, %v3652, 0
      %v3743 = vsel %vm3678, %v3653, 0
      %v3746 = vsel %vm3678, %v3654, 0
      %v3749 = vsel %vm3678, %v3655, 0
      %v3752 = vsel %vm3678, %v3656, 0
      %v3755 = vsel %vm3678, %v3657, 0
      %v3758 = vsel %vm3678, %v3658, 0
      %v3761 = vsel %vm3678, %v3659, 0
      %v3764 = vsel %vm3678, %v3660, 0
      %v3767 = vsel %vm3678, %v3661, 0
      %v3770 = vsel %vm3678, %v3662, 0
      %v3773 = vsel %vm3678, %v3663, 0
      %v3776 = vsel %vm3678, %v3664, 0
      %v3779 = vsel %vm3678, %v3665, 0
      %3781 = vmatprep.subr.bf16.mxu0 0
      %3782 = vmatpush1.bf16.msra.mxu0 0
      %3783 = vmatprep.subr.bf16.mxu0 0
      %3784 = vmatpush1.bf16.msra.mxu0 0
      %3785 = vmatprep.subr.bf16.mxu0 0
      %3786 = vmatpush1.bf16.msra.mxu0 0
      %3787 = vmatprep.subr.bf16.mxu0 0
      %3788 = vmatpush1.bf16.msra.mxu0 0
      %3789 = vmatprep.subr.bf16.mxu0 0
      %3790 = vmatpush1.bf16.msra.mxu0 0
      %3791 = vmatprep.subr.bf16.mxu0 0
      %3792 = vmatpush1.bf16.msra.mxu0 0
      %3793 = vmatprep.subr.bf16.mxu0 0
      %3794 = vmatpush1.bf16.msra.mxu0 %v3675
      %3795 = vmatprep.subr.bf16.mxu0 0
      %3796 = vmatpush1.bf16.msra.mxu0 %v3674
      %3797 = vmatprep.subr.bf16.mxu0 0
      %3798 = vmatpush2.bf16.msra.mxu0 0
      %3799 = vmatprep.subr.bf16.mxu0 0
      %3800 = vmatpush2.bf16.msra.mxu0 0
      %3801 = vmatprep.subr.bf16.mxu0 0
      %3802 = vmatpush2.bf16.msra.mxu0 0
      %3803 = vmatprep.subr.bf16.mxu0 0
      %3804 = vmatpush2.bf16.msra.mxu0 0
      %3805 = vmatprep.subr.bf16.mxu0 0
      %3806 = vmatpush2.bf16.msra.mxu0 0
      %3807 = vmatprep.subr.bf16.mxu0 0
      %3808 = vmatpush2.bf16.msra.mxu0 0
      %3809 = vmatprep.subr.bf16.mxu0 0
      %3810 = vmatpush2.bf16.msra.mxu0 0
      %3811 = vmatprep.subr.bf16.mxu0 0
      %3812 = vmatpush2.bf16.msra.mxu0 0
      %3813 = vmatprep.mubr.bf16.mxu0 0
      %3814 = vmatmul.mubr.bf16.gmra.mxu0 %v3680
      %v3815 = vpop.f32.mrf.mxu0
      %v3816 = vadd.f32 0.0, %v3815
      %v3817 = vpop.f32.mrf.mxu0
      %v3818 = vpop.f32.mrf.mxu0
      %v3819 = vadd.f32 0.0, %v3818
      %v3820 = vpop.f32.mrf.mxu0
      %3821 = vmatprep.mubr.bf16.mxu0 0
      %3822 = vmatmul.mubr.bf16.gmra.mxu0 %v3683
      %v3823 = vpop.f32.mrf.mxu0
      %v3824 = vadd.f32 0.0, %v3823
      %v3825 = vpop.f32.mrf.mxu0
      %v3826 = vpop.f32.mrf.mxu0
      %v3827 = vadd.f32 0.0, %v3826
      %v3828 = vpop.f32.mrf.mxu0
      %3829 = vmatprep.mubr.bf16.mxu0 0
      %3830 = vmatmul.mubr.bf16.gmra.mxu0 %v3686
      %v3831 = vpop.f32.mrf.mxu0
      %v3832 = vadd.f32 0.0, %v3831
      %v3833 = vpop.f32.mrf.mxu0
      %v3834 = vpop.f32.mrf.mxu0
      %v3835 = vadd.f32 0.0, %v3834
      %v3836 = vpop.f32.mrf.mxu0
      %3837 = vmatprep.mubr.bf16.mxu0 0
      %3838 = vmatmul.mubr.bf16.gmra.mxu0 %v3689
      %v3839 = vpop.f32.mrf.mxu0
      %v3840 = vadd.f32 0.0, %v3839
      %v3841 = vpop.f32.mrf.mxu0
      %v3842 = vpop.f32.mrf.mxu0
      %v3843 = vadd.f32 0.0, %v3842
      %v3844 = vpop.f32.mrf.mxu0
      %3845 = vmatprep.mubr.bf16.mxu0 0
      %3846 = vmatmul.mubr.bf16.gmra.mxu0 %v3692
      %v3847 = vpop.f32.mrf.mxu0
      %v3848 = vadd.f32 0.0, %v3847
      %v3849 = vpop.f32.mrf.mxu0
      %v3850 = vpop.f32.mrf.mxu0
      %v3851 = vadd.f32 0.0, %v3850
      %v3852 = vpop.f32.mrf.mxu0
      %3853 = vmatprep.mubr.bf16.mxu0 0
      %3854 = vmatmul.mubr.bf16.gmra.mxu0 %v3695
      %v3855 = vpop.f32.mrf.mxu0
      %v3856 = vadd.f32 0.0, %v3855
      %v3857 = vpop.f32.mrf.mxu0
      %v3858 = vpop.f32.mrf.mxu0
      %v3859 = vadd.f32 0.0, %v3858
      %v3860 = vpop.f32.mrf.mxu0
      %3861 = vmatprep.mubr.bf16.mxu0 0
      %3862 = vmatmul.mubr.bf16.gmra.mxu0 %v3698
      %v3863 = vpop.f32.mrf.mxu0
      %v3864 = vadd.f32 0.0, %v3863
      %v3865 = vpop.f32.mrf.mxu0
      %v3866 = vpop.f32.mrf.mxu0
      %v3867 = vadd.f32 0.0, %v3866
      %v3868 = vpop.f32.mrf.mxu0
      %3869 = vmatprep.mubr.bf16.mxu0 0
      %3870 = vmatmul.mubr.bf16.gmra.mxu0 %v3701
      %v3871 = vpop.f32.mrf.mxu0
      %v3872 = vadd.f32 0.0, %v3871
      %v3873 = vpop.f32.mrf.mxu0
      %v3874 = vpop.f32.mrf.mxu0
      %v3875 = vadd.f32 0.0, %v3874
      %v3876 = vpop.f32.mrf.mxu0
      %3877 = vmatprep.mubr.bf16.mxu0 0
      %3878 = vmatmul.mubr.bf16.gmra.mxu0 %v3704
      %v3879 = vpop.f32.mrf.mxu0
      %v3880 = vadd.f32 0.0, %v3879
      %v3881 = vpop.f32.mrf.mxu0
      %v3882 = vpop.f32.mrf.mxu0
      %v3883 = vadd.f32 0.0, %v3882
      %v3884 = vpop.f32.mrf.mxu0
      %3885 = vmatprep.mubr.bf16.mxu0 0
      %3886 = vmatmul.mubr.bf16.gmra.mxu0 %v3707
      %v3887 = vpop.f32.mrf.mxu0
      %v3888 = vadd.f32 0.0, %v3887
      %v3889 = vpop.f32.mrf.mxu0
      %v3890 = vpop.f32.mrf.mxu0
      %v3891 = vadd.f32 0.0, %v3890
      %v3892 = vpop.f32.mrf.mxu0
      %3893 = vmatprep.mubr.bf16.mxu0 0
      %3894 = vmatmul.mubr.bf16.gmra.mxu0 %v3710
      %v3895 = vpop.f32.mrf.mxu0
      %v3896 = vadd.f32 0.0, %v3895
      %v3897 = vpop.f32.mrf.mxu0
      %v3898 = vpop.f32.mrf.mxu0
      %v3899 = vadd.f32 0.0, %v3898
      %v3900 = vpop.f32.mrf.mxu0
      %3901 = vmatprep.mubr.bf16.mxu0 0
      %3902 = vmatmul.mubr.bf16.gmra.mxu0 %v3713
      %v3903 = vpop.f32.mrf.mxu0
      %v3904 = vadd.f32 0.0, %v3903
      %v3905 = vpop.f32.mrf.mxu0
      %v3906 = vpop.f32.mrf.mxu0
      %v3907 = vadd.f32 0.0, %v3906
      %v3908 = vpop.f32.mrf.mxu0
      %3909 = vmatprep.mubr.bf16.mxu0 0
      %3910 = vmatmul.mubr.bf16.gmra.mxu0 %v3716
      %v3911 = vpop.f32.mrf.mxu0
      %v3912 = vadd.f32 0.0, %v3911
      %v3913 = vpop.f32.mrf.mxu0
      %v3914 = vpop.f32.mrf.mxu0
      %v3915 = vadd.f32 0.0, %v3914
      %v3916 = vpop.f32.mrf.mxu0
      %3917 = vmatprep.mubr.bf16.mxu0 0
      %3918 = vmatmul.mubr.bf16.gmra.mxu0 %v3719
      %v3919 = vpop.f32.mrf.mxu0
      %v3920 = vadd.f32 0.0, %v3919
      %v3921 = vpop.f32.mrf.mxu0
      %v3922 = vpop.f32.mrf.mxu0
      %v3923 = vadd.f32 0.0, %v3922
      %v3924 = vpop.f32.mrf.mxu0
      %3925 = vmatprep.mubr.bf16.mxu0 0
      %3926 = vmatmul.mubr.bf16.gmra.mxu0 %v3722
      %v3927 = vpop.f32.mrf.mxu0
      %v3928 = vadd.f32 0.0, %v3927
      %v3929 = vpop.f32.mrf.mxu0
      %v3930 = vpop.f32.mrf.mxu0
      %v3931 = vadd.f32 0.0, %v3930
      %v3932 = vpop.f32.mrf.mxu0
      %3933 = vmatprep.mubr.bf16.mxu0 0
      %3934 = vmatmul.mubr.bf16.gmra.mxu0 %v3725
      %v3935 = vpop.f32.mrf.mxu0
      %v3936 = vadd.f32 0.0, %v3935
      %v3937 = vpop.f32.mrf.mxu0
      %v3938 = vpop.f32.mrf.mxu0
      %v3939 = vadd.f32 0.0, %v3938
      %v3940 = vpop.f32.mrf.mxu0
      %3941 = vmatprep.mubr.bf16.mxu0 0
      %3942 = vmatmul.mubr.bf16.gmra.mxu0 %v3728
      %v3943 = vpop.f32.mrf.mxu0
      %v3944 = vadd.f32 0.0, %v3943
      %v3945 = vpop.f32.mrf.mxu0
      %v3946 = vpop.f32.mrf.mxu0
      %v3947 = vadd.f32 0.0, %v3946
      %v3948 = vpop.f32.mrf.mxu0
      %3949 = vmatprep.mubr.bf16.mxu0 0
      %3950 = vmatmul.mubr.bf16.gmra.mxu0 %v3731
      %v3951 = vpop.f32.mrf.mxu0
      %v3952 = vadd.f32 0.0, %v3951
      %v3953 = vpop.f32.mrf.mxu0
      %v3954 = vpop.f32.mrf.mxu0
      %v3955 = vadd.f32 0.0, %v3954
      %v3956 = vpop.f32.mrf.mxu0
      %3957 = vmatprep.mubr.bf16.mxu0 0
      %3958 = vmatmul.mubr.bf16.gmra.mxu0 %v3734
      %v3959 = vpop.f32.mrf.mxu0
      %v3960 = vadd.f32 0.0, %v3959
      %v3961 = vpop.f32.mrf.mxu0
      %v3962 = vpop.f32.mrf.mxu0
      %v3963 = vadd.f32 0.0, %v3962
      %v3964 = vpop.f32.mrf.mxu0
      %3965 = vmatprep.mubr.bf16.mxu0 0
      %3966 = vmatmul.mubr.bf16.gmra.mxu0 %v3737
      %v3967 = vpop.f32.mrf.mxu0
      %v3968 = vadd.f32 0.0, %v3967
      %v3969 = vpop.f32.mrf.mxu0
      %v3970 = vpop.f32.mrf.mxu0
      %v3971 = vadd.f32 0.0, %v3970
      %v3972 = vpop.f32.mrf.mxu0
      %3973 = vmatprep.mubr.bf16.mxu0 0
      %3974 = vmatmul.mubr.bf16.gmra.mxu0 %v3740
      %v3975 = vpop.f32.mrf.mxu0
      %v3976 = vadd.f32 0.0, %v3975
      %v3977 = vpop.f32.mrf.mxu0
      %v3978 = vpop.f32.mrf.mxu0
      %v3979 = vadd.f32 0.0, %v3978
      %v3980 = vpop.f32.mrf.mxu0
      %3981 = vmatprep.mubr.bf16.mxu0 0
      %3982 = vmatmul.mubr.bf16.gmra.mxu0 %v3743
      %v3983 = vpop.f32.mrf.mxu0
      %v3984 = vadd.f32 0.0, %v3983
      %v3985 = vpop.f32.mrf.mxu0
      %v3986 = vpop.f32.mrf.mxu0
      %v3987 = vadd.f32 0.0, %v3986
      %v3988 = vpop.f32.mrf.mxu0
      %3989 = vmatprep.mubr.bf16.mxu0 0
      %3990 = vmatmul.mubr.bf16.gmra.mxu0 %v3746
      %v3991 = vpop.f32.mrf.mxu0
      %v3992 = vadd.f32 0.0, %v3991
      %v3993 = vpop.f32.mrf.mxu0
      %v3994 = vpop.f32.mrf.mxu0
      %v3995 = vadd.f32 0.0, %v3994
      %v3996 = vpop.f32.mrf.mxu0
      %3997 = vmatprep.mubr.bf16.mxu0 0
      %3998 = vmatmul.mubr.bf16.gmra.mxu0 %v3749
      %v3999 = vpop.f32.mrf.mxu0
      %v4000 = vadd.f32 0.0, %v3999
      %v4001 = vpop.f32.mrf.mxu0
      %v4002 = vpop.f32.mrf.mxu0
      %v4003 = vadd.f32 0.0, %v4002
      %v4004 = vpop.f32.mrf.mxu0
      %4005 = vmatprep.mubr.bf16.mxu0 0
      %4006 = vmatmul.mubr.bf16.gmra.mxu0 %v3752
      %v4007 = vpop.f32.mrf.mxu0
      %v4008 = vadd.f32 0.0, %v4007
      %v4009 = vpop.f32.mrf.mxu0
      %v4010 = vpop.f32.mrf.mxu0
      %v4011 = vadd.f32 0.0, %v4010
      %v4012 = vpop.f32.mrf.mxu0
      %4013 = vmatprep.mubr.bf16.mxu0 0
      %4014 = vmatmul.mubr.bf16.gmra.mxu0 %v3755
      %v4015 = vpop.f32.mrf.mxu0
      %v4016 = vadd.f32 0.0, %v4015
      %v4017 = vpop.f32.mrf.mxu0
      %v4018 = vpop.f32.mrf.mxu0
      %v4019 = vadd.f32 0.0, %v4018
      %v4020 = vpop.f32.mrf.mxu0
      %4021 = vmatprep.mubr.bf16.mxu0 0
      %4022 = vmatmul.mubr.bf16.gmra.mxu0 %v3758
      %v4023 = vpop.f32.mrf.mxu0
      %v4024 = vadd.f32 0.0, %v4023
      %v4025 = vpop.f32.mrf.mxu0
      %v4026 = vpop.f32.mrf.mxu0
      %v4027 = vadd.f32 0.0, %v4026
      %v4028 = vpop.f32.mrf.mxu0
      %4029 = vmatprep.mubr.bf16.mxu0 0
      %4030 = vmatmul.mubr.bf16.gmra.mxu0 %v3761
      %v4031 = vpop.f32.mrf.mxu0
      %v4032 = vadd.f32 0.0, %v4031
      %v4033 = vpop.f32.mrf.mxu0
      %v4034 = vpop.f32.mrf.mxu0
      %v4035 = vadd.f32 0.0, %v4034
      %v4036 = vpop.f32.mrf.mxu0
      %4037 = vmatprep.mubr.bf16.mxu0 0
      %4038 = vmatmul.mubr.bf16.gmra.mxu0 %v3764
      %v4039 = vpop.f32.mrf.mxu0
      %v4040 = vadd.f32 0.0, %v4039
      %v4041 = vpop.f32.mrf.mxu0
      %v4042 = vpop.f32.mrf.mxu0
      %v4043 = vadd.f32 0.0, %v4042
      %v4044 = vpop.f32.mrf.mxu0
      %4045 = vmatprep.mubr.bf16.mxu0 0
      %4046 = vmatmul.mubr.bf16.gmra.mxu0 %v3767
      %v4047 = vpop.f32.mrf.mxu0
      %v4048 = vadd.f32 0.0, %v4047
      %v4049 = vpop.f32.mrf.mxu0
      %v4050 = vpop.f32.mrf.mxu0
      %v4051 = vadd.f32 0.0, %v4050
      %v4052 = vpop.f32.mrf.mxu0
      %4053 = vmatprep.mubr.bf16.mxu0 0
      %4054 = vmatmul.mubr.bf16.gmra.mxu0 %v3770
      %v4055 = vpop.f32.mrf.mxu0
      %v4056 = vadd.f32 0.0, %v4055
      %v4057 = vpop.f32.mrf.mxu0
      %v4058 = vpop.f32.mrf.mxu0
      %v4059 = vadd.f32 0.0, %v4058
      %v4060 = vpop.f32.mrf.mxu0
      %4061 = vmatprep.mubr.bf16.mxu0 0
      %4062 = vmatmul.mubr.bf16.gmra.mxu0 %v3773
      %v4063 = vpop.f32.mrf.mxu0
      %v4064 = vadd.f32 0.0, %v4063
      %v4065 = vpop.f32.mrf.mxu0
      %v4066 = vpop.f32.mrf.mxu0
      %v4067 = vadd.f32 0.0, %v4066
      %v4068 = vpop.f32.mrf.mxu0
      %4069 = vmatprep.mubr.bf16.mxu0 0
      %4070 = vmatmul.mubr.bf16.gmra.mxu0 %v3776
      %v4071 = vpop.f32.mrf.mxu0
      %v4072 = vadd.f32 0.0, %v4071
      %v4073 = vpop.f32.mrf.mxu0
      %v4074 = vpop.f32.mrf.mxu0
      %v4075 = vadd.f32 0.0, %v4074
      %v4076 = vpop.f32.mrf.mxu0
      %4077 = vmatprep.mubr.bf16.mxu0 0
      %4078 = vmatmul.mubr.bf16.gmra.mxu0 %v3779
      %v4079 = vpop.f32.mrf.mxu0
      %v4080 = vadd.f32 0.0, %v4079
      %v4081 = vpop.f32.mrf.mxu0
      %v4082 = vpop.f32.mrf.mxu0
      %v4083 = vadd.f32 0.0, %v4082
      %v4084 = vpop.f32.mrf.mxu0
      %4085 = vdwg.mxu0
      %4150 = vrot.lane.b32.xlu0 %v3824, 96
      %v4151 = vpop.permute.xlu0 %4150
      %4152 = vrot.lane.b32.xlu0 %v3827, 96
      %v4153 = vpop.permute.xlu0 %4152
      %4154 = vrot.lane.b32.xlu0 %v3832, 96
      %v4155 = vpop.permute.xlu0 %4154
      %4156 = vrot.lane.b32.xlu0 %v3835, 96
      %v4157 = vpop.permute.xlu0 %4156
      %4158 = vrot.lane.b32.xlu0 %v3840, 96
      %v4159 = vpop.permute.xlu0 %4158
      %4160 = vrot.lane.b32.xlu0 %v3843, 96
      %v4161 = vpop.permute.xlu0 %4160
      %4162 = vrot.lane.b32.xlu0 %v3848, 96
      %v4163 = vpop.permute.xlu0 %4162
      %4164 = vrot.lane.b32.xlu0 %v3851, 96
      %v4165 = vpop.permute.xlu0 %4164
      %4166 = vrot.lane.b32.xlu0 %v3856, 96
      %v4167 = vpop.permute.xlu0 %4166
      %4168 = vrot.lane.b32.xlu0 %v3859, 96
      %v4169 = vpop.permute.xlu0 %4168
      %4170 = vrot.lane.b32.xlu0 %v3864, 96
      %v4171 = vpop.permute.xlu0 %4170
      %4172 = vrot.lane.b32.xlu0 %v3867, 96
      %v4173 = vpop.permute.xlu0 %4172
      %4174 = vrot.lane.b32.xlu0 %v3872, 96
      %v4175 = vpop.permute.xlu0 %4174
      %4176 = vrot.lane.b32.xlu0 %v3875, 96
      %v4177 = vpop.permute.xlu0 %4176
      %4178 = vrot.lane.b32.xlu0 %v3880, 96
      %v4179 = vpop.permute.xlu0 %4178
      %4180 = vrot.lane.b32.xlu0 %v3883, 96
      %v4181 = vpop.permute.xlu0 %4180
      %4182 = vrot.lane.b32.xlu0 %v3888, 96
      %v4183 = vpop.permute.xlu0 %4182
      %4184 = vrot.lane.b32.xlu0 %v3891, 96
      %v4185 = vpop.permute.xlu0 %4184
      %4186 = vrot.lane.b32.xlu0 %v3896, 96
      %v4187 = vpop.permute.xlu0 %4186
      %4188 = vrot.lane.b32.xlu0 %v3899, 96
      %v4189 = vpop.permute.xlu0 %4188
      %4190 = vrot.lane.b32.xlu0 %v3904, 96
      %v4191 = vpop.permute.xlu0 %4190
      %4192 = vrot.lane.b32.xlu0 %v3907, 96
      %v4193 = vpop.permute.xlu0 %4192
      %4194 = vrot.lane.b32.xlu0 %v3912, 96
      %v4195 = vpop.permute.xlu0 %4194
      %4196 = vrot.lane.b32.xlu0 %v3915, 96
      %v4197 = vpop.permute.xlu0 %4196
      %4198 = vrot.lane.b32.xlu0 %v3920, 96
      %v4199 = vpop.permute.xlu0 %4198
      %4200 = vrot.lane.b32.xlu0 %v3923, 96
      %v4201 = vpop.permute.xlu0 %4200
      %4202 = vrot.lane.b32.xlu0 %v3928, 96
      %v4203 = vpop.permute.xlu0 %4202
      %4204 = vrot.lane.b32.xlu0 %v3931, 96
      %v4205 = vpop.permute.xlu0 %4204
      %4206 = vrot.lane.b32.xlu0 %v3936, 96
      %v4207 = vpop.permute.xlu0 %4206
      %4208 = vrot.lane.b32.xlu0 %v3939, 96
      %v4209 = vpop.permute.xlu0 %4208
      %4210 = vrot.lane.b32.xlu0 %v3944, 96
      %v4211 = vpop.permute.xlu0 %4210
      %4212 = vrot.lane.b32.xlu0 %v3947, 96
      %v4213 = vpop.permute.xlu0 %4212
      %4214 = vrot.lane.b32.xlu0 %v3952, 96
      %v4215 = vpop.permute.xlu0 %4214
      %4216 = vrot.lane.b32.xlu0 %v3955, 96
      %v4217 = vpop.permute.xlu0 %4216
      %4218 = vrot.lane.b32.xlu0 %v3960, 96
      %v4219 = vpop.permute.xlu0 %4218
      %4220 = vrot.lane.b32.xlu0 %v3963, 96
      %v4221 = vpop.permute.xlu0 %4220
      %4222 = vrot.lane.b32.xlu0 %v3968, 96
      %v4223 = vpop.permute.xlu0 %4222
      %4224 = vrot.lane.b32.xlu0 %v3971, 96
      %v4225 = vpop.permute.xlu0 %4224
      %4226 = vrot.lane.b32.xlu0 %v3976, 96
      %v4227 = vpop.permute.xlu0 %4226
      %4228 = vrot.lane.b32.xlu0 %v3979, 96
      %v4229 = vpop.permute.xlu0 %4228
      %4230 = vrot.lane.b32.xlu0 %v3984, 96
      %v4231 = vpop.permute.xlu0 %4230
      %4232 = vrot.lane.b32.xlu0 %v3987, 96
      %v4233 = vpop.permute.xlu0 %4232
      %4234 = vrot.lane.b32.xlu0 %v3992, 96
      %v4235 = vpop.permute.xlu0 %4234
      %4236 = vrot.lane.b32.xlu0 %v3995, 96
      %v4237 = vpop.permute.xlu0 %4236
      %4238 = vrot.lane.b32.xlu0 %v4000, 96
      %v4239 = vpop.permute.xlu0 %4238
      %4240 = vrot.lane.b32.xlu0 %v4003, 96
      %v4241 = vpop.permute.xlu0 %4240
      %4242 = vrot.lane.b32.xlu0 %v4008, 96
      %v4243 = vpop.permute.xlu0 %4242
      %4244 = vrot.lane.b32.xlu0 %v4011, 96
      %v4245 = vpop.permute.xlu0 %4244
      %4246 = vrot.lane.b32.xlu0 %v4016, 96
      %v4247 = vpop.permute.xlu0 %4246
      %4248 = vrot.lane.b32.xlu0 %v4019, 96
      %v4249 = vpop.permute.xlu0 %4248
      %4250 = vrot.lane.b32.xlu0 %v4024, 96
      %v4251 = vpop.permute.xlu0 %4250
      %4252 = vrot.lane.b32.xlu0 %v4027, 96
      %v4253 = vpop.permute.xlu0 %4252
      %4254 = vrot.lane.b32.xlu0 %v4032, 96
      %v4255 = vpop.permute.xlu0 %4254
      %4256 = vrot.lane.b32.xlu0 %v4035, 96
      %v4257 = vpop.permute.xlu0 %4256
      %4258 = vrot.lane.b32.xlu0 %v4040, 96
      %v4259 = vpop.permute.xlu0 %4258
      %4260 = vrot.lane.b32.xlu0 %v4043, 96
      %v4261 = vpop.permute.xlu0 %4260
      %4262 = vrot.lane.b32.xlu0 %v4048, 96
      %v4263 = vpop.permute.xlu0 %4262
      %4264 = vrot.lane.b32.xlu0 %v4051, 96
      %v4265 = vpop.permute.xlu0 %4264
      %4266 = vrot.lane.b32.xlu0 %v4056, 96
      %v4267 = vpop.permute.xlu0 %4266
      %4268 = vrot.lane.b32.xlu0 %v4059, 96
      %v4269 = vpop.permute.xlu0 %4268
      %4270 = vrot.lane.b32.xlu0 %v4064, 96
      %v4271 = vpop.permute.xlu0 %4270
      %4272 = vrot.lane.b32.xlu0 %v4067, 96
      %v4273 = vpop.permute.xlu0 %4272
      %4274 = vrot.lane.b32.xlu0 %v4072, 96
      %v4275 = vpop.permute.xlu0 %4274
      %4276 = vrot.lane.b32.xlu0 %v4075, 96
      %v4277 = vpop.permute.xlu0 %4276
      %v4342 = vadd.f32 %v3816, %v4151
      %v4343 = vadd.f32 %v3819, %v4153
      %v4344 = vadd.f32 %v3824, %v4155
      %v4345 = vadd.f32 %v3827, %v4157
      %v4346 = vadd.f32 %v3832, %v4159
      %v4347 = vadd.f32 %v3835, %v4161
      %v4348 = vadd.f32 %v3840, %v4163
      %v4349 = vadd.f32 %v3843, %v4165
      %v4350 = vadd.f32 %v3848, %v4167
      %v4351 = vadd.f32 %v3851, %v4169
      %v4352 = vadd.f32 %v3856, %v4171
      %v4353 = vadd.f32 %v3859, %v4173
      %v4354 = vadd.f32 %v3864, %v4175
      %v4355 = vadd.f32 %v3867, %v4177
      %v4356 = vadd.f32 %v3872, %v4179
      %v4357 = vadd.f32 %v3875, %v4181
      %v4358 = vadd.f32 %v3880, %v4183
      %v4359 = vadd.f32 %v3883, %v4185
      %v4360 = vadd.f32 %v3888, %v4187
      %v4361 = vadd.f32 %v3891, %v4189
      %v4362 = vadd.f32 %v3896, %v4191
      %v4363 = vadd.f32 %v3899, %v4193
      %v4364 = vadd.f32 %v3904, %v4195
      %v4365 = vadd.f32 %v3907, %v4197
      %v4366 = vadd.f32 %v3912, %v4199
      %v4367 = vadd.f32 %v3915, %v4201
      %v4368 = vadd.f32 %v3920, %v4203
      %v4369 = vadd.f32 %v3923, %v4205
      %v4370 = vadd.f32 %v3928, %v4207
      %v4371 = vadd.f32 %v3931, %v4209
      %v4372 = vadd.f32 %v3936, %v4211
      %v4373 = vadd.f32 %v3939, %v4213
      %v4374 = vadd.f32 %v3944, %v4215
      %v4375 = vadd.f32 %v3947, %v4217
      %v4376 = vadd.f32 %v3952, %v4219
      %v4377 = vadd.f32 %v3955, %v4221
      %v4378 = vadd.f32 %v3960, %v4223
      %v4379 = vadd.f32 %v3963, %v4225
      %v4380 = vadd.f32 %v3968, %v4227
      %v4381 = vadd.f32 %v3971, %v4229
      %v4382 = vadd.f32 %v3976, %v4231
      %v4383 = vadd.f32 %v3979, %v4233
      %v4384 = vadd.f32 %v3984, %v4235
      %v4385 = vadd.f32 %v3987, %v4237
      %v4386 = vadd.f32 %v3992, %v4239
      %v4387 = vadd.f32 %v3995, %v4241
      %v4388 = vadd.f32 %v4000, %v4243
      %v4389 = vadd.f32 %v4003, %v4245
      %v4390 = vadd.f32 %v4008, %v4247
      %v4391 = vadd.f32 %v4011, %v4249
      %v4392 = vadd.f32 %v4016, %v4251
      %v4393 = vadd.f32 %v4019, %v4253
      %v4394 = vadd.f32 %v4024, %v4255
      %v4395 = vadd.f32 %v4027, %v4257
      %v4396 = vadd.f32 %v4032, %v4259
      %v4397 = vadd.f32 %v4035, %v4261
      %v4398 = vadd.f32 %v4040, %v4263
      %v4399 = vadd.f32 %v4043, %v4265
      %v4400 = vadd.f32 %v4048, %v4267
      %v4401 = vadd.f32 %v4051, %v4269
      %v4402 = vadd.f32 %v4056, %v4271
      %v4403 = vadd.f32 %v4059, %v4273
      %v4404 = vadd.f32 %v4064, %v4275
      %v4405 = vadd.f32 %v4067, %v4277
      %4408 = vrot.lane.b32.xlu0 %v3832, 64
      %v4409 = vpop.permute.xlu0 %4408
      %4410 = vrot.lane.b32.xlu0 %v3835, 64
      %v4411 = vpop.permute.xlu0 %4410
      %4412 = vrot.lane.b32.xlu0 %v3840, 64
      %v4413 = vpop.permute.xlu0 %4412
      %4414 = vrot.lane.b32.xlu0 %v3843, 64
      %v4415 = vpop.permute.xlu0 %4414
      %4416 = vrot.lane.b32.xlu0 %v3848, 64
      %v4417 = vpop.permute.xlu0 %4416
      %4418 = vrot.lane.b32.xlu0 %v3851, 64
      %v4419 = vpop.permute.xlu0 %4418
      %4420 = vrot.lane.b32.xlu0 %v3856, 64
      %v4421 = vpop.permute.xlu0 %4420
      %4422 = vrot.lane.b32.xlu0 %v3859, 64
      %v4423 = vpop.permute.xlu0 %4422
      %4424 = vrot.lane.b32.xlu0 %v3864, 64
      %v4425 = vpop.permute.xlu0 %4424
      %4426 = vrot.lane.b32.xlu0 %v3867, 64
      %v4427 = vpop.permute.xlu0 %4426
      %4428 = vrot.lane.b32.xlu0 %v3872, 64
      %v4429 = vpop.permute.xlu0 %4428
      %4430 = vrot.lane.b32.xlu0 %v3875, 64
      %v4431 = vpop.permute.xlu0 %4430
      %4432 = vrot.lane.b32.xlu0 %v3880, 64
      %v4433 = vpop.permute.xlu0 %4432
      %4434 = vrot.lane.b32.xlu0 %v3883, 64
      %v4435 = vpop.permute.xlu0 %4434
      %4436 = vrot.lane.b32.xlu0 %v3888, 64
      %v4437 = vpop.permute.xlu0 %4436
      %4438 = vrot.lane.b32.xlu0 %v3891, 64
      %v4439 = vpop.permute.xlu0 %4438
      %4440 = vrot.lane.b32.xlu0 %v3896, 64
      %v4441 = vpop.permute.xlu0 %4440
      %4442 = vrot.lane.b32.xlu0 %v3899, 64
      %v4443 = vpop.permute.xlu0 %4442
      %4444 = vrot.lane.b32.xlu0 %v3904, 64
      %v4445 = vpop.permute.xlu0 %4444
      %4446 = vrot.lane.b32.xlu0 %v3907, 64
      %v4447 = vpop.permute.xlu0 %4446
      %4448 = vrot.lane.b32.xlu0 %v3912, 64
      %v4449 = vpop.permute.xlu0 %4448
      %4450 = vrot.lane.b32.xlu0 %v3915, 64
      %v4451 = vpop.permute.xlu0 %4450
      %4452 = vrot.lane.b32.xlu0 %v3920, 64
      %v4453 = vpop.permute.xlu0 %4452
      %4454 = vrot.lane.b32.xlu0 %v3923, 64
      %v4455 = vpop.permute.xlu0 %4454
      %4456 = vrot.lane.b32.xlu0 %v3928, 64
      %v4457 = vpop.permute.xlu0 %4456
      %4458 = vrot.lane.b32.xlu0 %v3931, 64
      %v4459 = vpop.permute.xlu0 %4458
      %4460 = vrot.lane.b32.xlu0 %v3936, 64
      %v4461 = vpop.permute.xlu0 %4460
      %4462 = vrot.lane.b32.xlu0 %v3939, 64
      %v4463 = vpop.permute.xlu0 %4462
      %4464 = vrot.lane.b32.xlu0 %v3944, 64
      %v4465 = vpop.permute.xlu0 %4464
      %4466 = vrot.lane.b32.xlu0 %v3947, 64
      %v4467 = vpop.permute.xlu0 %4466
      %4468 = vrot.lane.b32.xlu0 %v3952, 64
      %v4469 = vpop.permute.xlu0 %4468
      %4470 = vrot.lane.b32.xlu0 %v3955, 64
      %v4471 = vpop.permute.xlu0 %4470
      %4472 = vrot.lane.b32.xlu0 %v3960, 64
      %v4473 = vpop.permute.xlu0 %4472
      %4474 = vrot.lane.b32.xlu0 %v3963, 64
      %v4475 = vpop.permute.xlu0 %4474
      %4476 = vrot.lane.b32.xlu0 %v3968, 64
      %v4477 = vpop.permute.xlu0 %4476
      %4478 = vrot.lane.b32.xlu0 %v3971, 64
      %v4479 = vpop.permute.xlu0 %4478
      %4480 = vrot.lane.b32.xlu0 %v3976, 64
      %v4481 = vpop.permute.xlu0 %4480
      %4482 = vrot.lane.b32.xlu0 %v3979, 64
      %v4483 = vpop.permute.xlu0 %4482
      %4484 = vrot.lane.b32.xlu0 %v3984, 64
      %v4485 = vpop.permute.xlu0 %4484
      %4486 = vrot.lane.b32.xlu0 %v3987, 64
      %v4487 = vpop.permute.xlu0 %4486
      %4488 = vrot.lane.b32.xlu0 %v3992, 64
      %v4489 = vpop.permute.xlu0 %4488
      %4490 = vrot.lane.b32.xlu0 %v3995, 64
      %v4491 = vpop.permute.xlu0 %4490
      %4492 = vrot.lane.b32.xlu0 %v4000, 64
      %v4493 = vpop.permute.xlu0 %4492
      %4494 = vrot.lane.b32.xlu0 %v4003, 64
      %v4495 = vpop.permute.xlu0 %4494
      %4496 = vrot.lane.b32.xlu0 %v4008, 64
      %v4497 = vpop.permute.xlu0 %4496
      %4498 = vrot.lane.b32.xlu0 %v4011, 64
      %v4499 = vpop.permute.xlu0 %4498
      %4500 = vrot.lane.b32.xlu0 %v4016, 64
      %v4501 = vpop.permute.xlu0 %4500
      %4502 = vrot.lane.b32.xlu0 %v4019, 64
      %v4503 = vpop.permute.xlu0 %4502
      %4504 = vrot.lane.b32.xlu0 %v4024, 64
      %v4505 = vpop.permute.xlu0 %4504
      %4506 = vrot.lane.b32.xlu0 %v4027, 64
      %v4507 = vpop.permute.xlu0 %4506
      %4508 = vrot.lane.b32.xlu0 %v4032, 64
      %v4509 = vpop.permute.xlu0 %4508
      %4510 = vrot.lane.b32.xlu0 %v4035, 64
      %v4511 = vpop.permute.xlu0 %4510
      %4512 = vrot.lane.b32.xlu0 %v4040, 64
      %v4513 = vpop.permute.xlu0 %4512
      %4514 = vrot.lane.b32.xlu0 %v4043, 64
      %v4515 = vpop.permute.xlu0 %4514
      %4516 = vrot.lane.b32.xlu0 %v4048, 64
      %v4517 = vpop.permute.xlu0 %4516
      %4518 = vrot.lane.b32.xlu0 %v4051, 64
      %v4519 = vpop.permute.xlu0 %4518
      %4520 = vrot.lane.b32.xlu0 %v4056, 64
      %v4521 = vpop.permute.xlu0 %4520
      %4522 = vrot.lane.b32.xlu0 %v4059, 64
      %v4523 = vpop.permute.xlu0 %4522
      %4524 = vrot.lane.b32.xlu0 %v4064, 64
      %v4525 = vpop.permute.xlu0 %4524
      %4526 = vrot.lane.b32.xlu0 %v4067, 64
      %v4527 = vpop.permute.xlu0 %4526
      %4528 = vrot.lane.b32.xlu0 %v4072, 64
      %v4529 = vpop.permute.xlu0 %4528
      %4530 = vrot.lane.b32.xlu0 %v4075, 64
      %v4531 = vpop.permute.xlu0 %4530
      %4532 = vrot.lane.b32.xlu0 %v4080, 64
      %v4533 = vpop.permute.xlu0 %4532
      %4534 = vrot.lane.b32.xlu0 %v4083, 64
      %v4535 = vpop.permute.xlu0 %4534
      %v4600 = vadd.f32 %v4342, %v4409
      %v4601 = vadd.f32 %v4343, %v4411
      %v4602 = vadd.f32 %v4344, %v4413
      %v4603 = vadd.f32 %v4345, %v4415
      %v4604 = vadd.f32 %v4346, %v4417
      %v4605 = vadd.f32 %v4347, %v4419
      %v4606 = vadd.f32 %v4348, %v4421
      %v4607 = vadd.f32 %v4349, %v4423
      %v4608 = vadd.f32 %v4350, %v4425
      %v4609 = vadd.f32 %v4351, %v4427
      %v4610 = vadd.f32 %v4352, %v4429
      %v4611 = vadd.f32 %v4353, %v4431
      %v4612 = vadd.f32 %v4354, %v4433
      %v4613 = vadd.f32 %v4355, %v4435
      %v4614 = vadd.f32 %v4356, %v4437
      %v4615 = vadd.f32 %v4357, %v4439
      %v4616 = vadd.f32 %v4358, %v4441
      %v4617 = vadd.f32 %v4359, %v4443
      %v4618 = vadd.f32 %v4360, %v4445
      %v4619 = vadd.f32 %v4361, %v4447
      %v4620 = vadd.f32 %v4362, %v4449
      %v4621 = vadd.f32 %v4363, %v4451
      %v4622 = vadd.f32 %v4364, %v4453
      %v4623 = vadd.f32 %v4365, %v4455
      %v4624 = vadd.f32 %v4366, %v4457
      %v4625 = vadd.f32 %v4367, %v4459
      %v4626 = vadd.f32 %v4368, %v4461
      %v4627 = vadd.f32 %v4369, %v4463
      %v4628 = vadd.f32 %v4370, %v4465
      %v4629 = vadd.f32 %v4371, %v4467
      %v4630 = vadd.f32 %v4372, %v4469
      %v4631 = vadd.f32 %v4373, %v4471
      %v4632 = vadd.f32 %v4374, %v4473
      %v4633 = vadd.f32 %v4375, %v4475
      %v4634 = vadd.f32 %v4376, %v4477
      %v4635 = vadd.f32 %v4377, %v4479
      %v4636 = vadd.f32 %v4378, %v4481
      %v4637 = vadd.f32 %v4379, %v4483
      %v4638 = vadd.f32 %v4380, %v4485
      %v4639 = vadd.f32 %v4381, %v4487
      %v4640 = vadd.f32 %v4382, %v4489
      %v4641 = vadd.f32 %v4383, %v4491
      %v4642 = vadd.f32 %v4384, %v4493
      %v4643 = vadd.f32 %v4385, %v4495
      %v4644 = vadd.f32 %v4386, %v4497
      %v4645 = vadd.f32 %v4387, %v4499
      %v4646 = vadd.f32 %v4388, %v4501
      %v4647 = vadd.f32 %v4389, %v4503
      %v4648 = vadd.f32 %v4390, %v4505
      %v4649 = vadd.f32 %v4391, %v4507
      %v4650 = vadd.f32 %v4392, %v4509
      %v4651 = vadd.f32 %v4393, %v4511
      %v4652 = vadd.f32 %v4394, %v4513
      %v4653 = vadd.f32 %v4395, %v4515
      %v4654 = vadd.f32 %v4396, %v4517
      %v4655 = vadd.f32 %v4397, %v4519
      %v4656 = vadd.f32 %v4398, %v4521
      %v4657 = vadd.f32 %v4399, %v4523
      %v4658 = vadd.f32 %v4400, %v4525
      %v4659 = vadd.f32 %v4401, %v4527
      %v4660 = vadd.f32 %v4402, %v4529
      %v4661 = vadd.f32 %v4403, %v4531
      %v4662 = vadd.f32 %v4404, %v4533
      %v4663 = vadd.f32 %v4405, %v4535
      %v4664 = vld [vmem:[%s4] sm:$0x1]
      %v4666 = vlaneseq
      %v4667 = vshrl.u32 %v4666, 7
      %v4668 = vsub.s32 0, %v4667
      %v4669 = vrot.slane %v4664, %v4668
      %v4671 = vadd.f32 %v4600, %v4669
      %v4672 = vadd.f32 %v4601, %v4669
      %v4673 = vadd.f32 %v4602, %v4669
      %v4674 = vadd.f32 %v4603, %v4669
      %v4675 = vadd.f32 %v4604, %v4669
      %v4676 = vadd.f32 %v4605, %v4669
      %v4677 = vadd.f32 %v4606, %v4669
      %v4678 = vadd.f32 %v4607, %v4669
      %v4679 = vadd.f32 %v4608, %v4669
      %v4680 = vadd.f32 %v4609, %v4669
      %v4681 = vadd.f32 %v4610, %v4669
      %v4682 = vadd.f32 %v4611, %v4669
      %v4683 = vadd.f32 %v4612, %v4669
      %v4684 = vadd.f32 %v4613, %v4669
      %v4685 = vadd.f32 %v4614, %v4669
      %v4686 = vadd.f32 %v4615, %v4669
      %v4687 = vadd.f32 %v4616, %v4669
      %v4688 = vadd.f32 %v4617, %v4669
      %v4689 = vadd.f32 %v4618, %v4669
      %v4690 = vadd.f32 %v4619, %v4669
      %v4691 = vadd.f32 %v4620, %v4669
      %v4692 = vadd.f32 %v4621, %v4669
      %v4693 = vadd.f32 %v4622, %v4669
      %v4694 = vadd.f32 %v4623, %v4669
      %v4695 = vadd.f32 %v4624, %v4669
      %v4696 = vadd.f32 %v4625, %v4669
      %v4697 = vadd.f32 %v4626, %v4669
      %v4698 = vadd.f32 %v4627, %v4669
      %v4699 = vadd.f32 %v4628, %v4669
      %v4700 = vadd.f32 %v4629, %v4669
      %v4701 = vadd.f32 %v4630, %v4669
      %v4702 = vadd.f32 %v4631, %v4669
      %v4703 = vadd.f32 %v4632, %v4669
      %v4704 = vadd.f32 %v4633, %v4669
      %v4705 = vadd.f32 %v4634, %v4669
      %v4706 = vadd.f32 %v4635, %v4669
      %v4707 = vadd.f32 %v4636, %v4669
      %v4708 = vadd.f32 %v4637, %v4669
      %v4709 = vadd.f32 %v4638, %v4669
      %v4710 = vadd.f32 %v4639, %v4669
      %v4711 = vadd.f32 %v4640, %v4669
      %v4712 = vadd.f32 %v4641, %v4669
      %v4713 = vadd.f32 %v4642, %v4669
      %v4714 = vadd.f32 %v4643, %v4669
      %v4715 = vadd.f32 %v4644, %v4669
      %v4716 = vadd.f32 %v4645, %v4669
      %v4717 = vadd.f32 %v4646, %v4669
      %v4718 = vadd.f32 %v4647, %v4669
      %v4719 = vadd.f32 %v4648, %v4669
      %v4720 = vadd.f32 %v4649, %v4669
      %v4721 = vadd.f32 %v4650, %v4669
      %v4722 = vadd.f32 %v4651, %v4669
      %v4723 = vadd.f32 %v4652, %v4669
      %v4724 = vadd.f32 %v4653, %v4669
      %v4725 = vadd.f32 %v4654, %v4669
      %v4726 = vadd.f32 %v4655, %v4669
      %v4727 = vadd.f32 %v4656, %v4669
      %v4728 = vadd.f32 %v4657, %v4669
      %v4729 = vadd.f32 %v4658, %v4669
      %v4730 = vadd.f32 %v4659, %v4669
      %v4731 = vadd.f32 %v4660, %v4669
      %v4732 = vadd.f32 %v4661, %v4669
      %v4733 = vadd.f32 %v4662, %v4669
      %v4734 = vadd.f32 %v4663, %v4669
      %v4735 = vmax.f32 %v4671, 0.0
      %v4736 = vmax.f32 %v4672, 0.0
      %v4737 = vmax.f32 %v4673, 0.0
      %v4738 = vmax.f32 %v4674, 0.0
      %v4739 = vmax.f32 %v4675, 0.0
      %v4740 = vmax.f32 %v4676, 0.0
      %v4741 = vmax.f32 %v4677, 0.0
      %v4742 = vmax.f32 %v4678, 0.0
      %v4743 = vmax.f32 %v4679, 0.0
      %v4744 = vmax.f32 %v4680, 0.0
      %v4745 = vmax.f32 %v4681, 0.0
      %v4746 = vmax.f32 %v4682, 0.0
      %v4747 = vmax.f32 %v4683, 0.0
      %v4748 = vmax.f32 %v4684, 0.0
      %v4749 = vmax.f32 %v4685, 0.0
      %v4750 = vmax.f32 %v4686, 0.0
      %v4751 = vmax.f32 %v4687, 0.0
      %v4752 = vmax.f32 %v4688, 0.0
      %v4753 = vmax.f32 %v4689, 0.0
      %v4754 = vmax.f32 %v4690, 0.0
      %v4755 = vmax.f32 %v4691, 0.0
      %v4756 = vmax.f32 %v4692, 0.0
      %v4757 = vmax.f32 %v4693, 0.0
      %v4758 = vmax.f32 %v4694, 0.0
      %v4759 = vmax.f32 %v4695, 0.0
      %v4760 = vmax.f32 %v4696, 0.0
      %v4761 = vmax.f32 %v4697, 0.0
      %v4762 = vmax.f32 %v4698, 0.0
      %v4763 = vmax.f32 %v4699, 0.0
      %v4764 = vmax.f32 %v4700, 0.0
      %v4765 = vmax.f32 %v4701, 0.0
      %v4766 = vmax.f32 %v4702, 0.0
      %v4767 = vmax.f32 %v4703, 0.0
      %v4768 = vmax.f32 %v4704, 0.0
      %v4769 = vmax.f32 %v4705, 0.0
      %v4770 = vmax.f32 %v4706, 0.0
      %v4771 = vmax.f32 %v4707, 0.0
      %v4772 = vmax.f32 %v4708, 0.0
      %v4773 = vmax.f32 %v4709, 0.0
      %v4774 = vmax.f32 %v4710, 0.0
      %v4775 = vmax.f32 %v4711, 0.0
      %v4776 = vmax.f32 %v4712, 0.0
      %v4777 = vmax.f32 %v4713, 0.0
      %v4778 = vmax.f32 %v4714, 0.0
      %v4779 = vmax.f32 %v4715, 0.0
      %v4780 = vmax.f32 %v4716, 0.0
      %v4781 = vmax.f32 %v4717, 0.0
      %v4782 = vmax.f32 %v4718, 0.0
      %v4783 = vmax.f32 %v4719, 0.0
      %v4784 = vmax.f32 %v4720, 0.0
      %v4785 = vmax.f32 %v4721, 0.0
      %v4786 = vmax.f32 %v4722, 0.0
      %v4787 = vmax.f32 %v4723, 0.0
      %v4788 = vmax.f32 %v4724, 0.0
      %v4789 = vmax.f32 %v4725, 0.0
      %v4790 = vmax.f32 %v4726, 0.0
      %v4791 = vmax.f32 %v4727, 0.0
      %v4792 = vmax.f32 %v4728, 0.0
      %v4793 = vmax.f32 %v4729, 0.0
      %v4794 = vmax.f32 %v4730, 0.0
      %v4795 = vmax.f32 %v4731, 0.0
      %v4796 = vmax.f32 %v4732, 0.0
      %v4797 = vmax.f32 %v4733, 0.0
      %v4798 = vmax.f32 %v4734, 0.0
      %v4799 = vmax.f32 %v4735, %v4737
      %v4800 = vmax.f32 %v4736, %v4738
      %v4801 = vmax.f32 %v4739, %v4741
      %v4802 = vmax.f32 %v4740, %v4742
      %v4803 = vmax.f32 %v4743, %v4745
      %v4804 = vmax.f32 %v4744, %v4746
      %v4805 = vmax.f32 %v4747, %v4749
      %v4806 = vmax.f32 %v4748, %v4750
      %v4807 = vmax.f32 %v4751, %v4753
      %v4808 = vmax.f32 %v4752, %v4754
      %v4809 = vmax.f32 %v4755, %v4757
      %v4810 = vmax.f32 %v4756, %v4758
      %v4811 = vmax.f32 %v4759, %v4761
      %v4812 = vmax.f32 %v4760, %v4762
      %v4813 = vmax.f32 %v4763, %v4765
      %v4814 = vmax.f32 %v4764, %v4766
      %v4815 = vmax.f32 %v4767, %v4769
      %v4816 = vmax.f32 %v4768, %v4770
      %v4817 = vmax.f32 %v4771, %v4773
      %v4818 = vmax.f32 %v4772, %v4774
      %v4819 = vmax.f32 %v4775, %v4777
      %v4820 = vmax.f32 %v4776, %v4778
      %v4821 = vmax.f32 %v4779, %v4781
      %v4822 = vmax.f32 %v4780, %v4782
      %v4823 = vmax.f32 %v4783, %v4785
      %v4824 = vmax.f32 %v4784, %v4786
      %v4825 = vmax.f32 %v4787, %v4789
      %v4826 = vmax.f32 %v4788, %v4790
      %v4827 = vmax.f32 %v4791, %v4793
      %v4828 = vmax.f32 %v4792, %v4794
      %v4829 = vmax.f32 %v4795, %v4797
      %v4830 = vmax.f32 %v4796, %v4798
      %v4831 = vpack.c.bf16 %v4800, %v4799
      %v4832 = vpack.c.bf16 %v4802, %v4801
      %v4833 = vpack.c.bf16 %v4804, %v4803
      %v4834 = vpack.c.bf16 %v4806, %v4805
      %v4835 = vpack.c.bf16 %v4808, %v4807
      %v4836 = vpack.c.bf16 %v4810, %v4809
      %v4837 = vpack.c.bf16 %v4812, %v4811
      %v4838 = vpack.c.bf16 %v4814, %v4813
      %v4839 = vpack.c.bf16 %v4816, %v4815
      %v4840 = vpack.c.bf16 %v4818, %v4817
      %v4841 = vpack.c.bf16 %v4820, %v4819
      %v4842 = vpack.c.bf16 %v4822, %v4821
      %v4843 = vpack.c.bf16 %v4824, %v4823
      %v4844 = vpack.c.bf16 %v4826, %v4825
      %v4845 = vpack.c.bf16 %v4828, %v4827
      %v4846 = vpack.c.bf16 %v4830, %v4829
      %v4863 = vunpack.c.l.b16 %v4831
      %v4864 = vunpack.c.h.b16 %v4831
      %v4865 = vunpack.c.l.b16 %v4832
      %v4866 = vunpack.c.h.b16 %v4832
      %v4867 = vunpack.c.l.b16 %v4833
      %v4868 = vunpack.c.h.b16 %v4833
      %v4869 = vunpack.c.l.b16 %v4834
      %v4870 = vunpack.c.h.b16 %v4834
      %v4871 = vunpack.c.l.b16 %v4835
      %v4872 = vunpack.c.h.b16 %v4835
      %v4873 = vunpack.c.l.b16 %v4836
      %v4874 = vunpack.c.h.b16 %v4836
      %v4875 = vunpack.c.l.b16 %v4837
      %v4876 = vunpack.c.h.b16 %v4837
      %v4877 = vunpack.c.l.b16 %v4838
      %v4878 = vunpack.c.h.b16 %v4838
      %v4879 = vunpack.c.l.b16 %v4839
      %v4880 = vunpack.c.h.b16 %v4839
      %v4881 = vunpack.c.l.b16 %v4840
      %v4882 = vunpack.c.h.b16 %v4840
      %v4883 = vunpack.c.l.b16 %v4841
      %v4884 = vunpack.c.h.b16 %v4841
      %v4885 = vunpack.c.l.b16 %v4842
      %v4886 = vunpack.c.h.b16 %v4842
      %v4887 = vunpack.c.l.b16 %v4843
      %v4888 = vunpack.c.h.b16 %v4843
      %v4889 = vunpack.c.l.b16 %v4844
      %v4890 = vunpack.c.h.b16 %v4844
      %v4891 = vunpack.c.l.b16 %v4845
      %v4892 = vunpack.c.h.b16 %v4845
      %v4893 = vunpack.c.l.b16 %v4846
      %v4894 = vunpack.c.h.b16 %v4846
      %v4895 = vpack.c.b16 %v4863, %v4863
      %v4896 = vpack.c.b16 %v4864, %v4864
      %v4897 = vpack.c.b16 %v4865, %v4865
      %v4898 = vpack.c.b16 %v4866, %v4866
      %v4899 = vpack.c.b16 %v4867, %v4867
      %v4900 = vpack.c.b16 %v4868, %v4868
      %v4901 = vpack.c.b16 %v4869, %v4869
      %v4902 = vpack.c.b16 %v4870, %v4870
      %v4903 = vpack.c.b16 %v4871, %v4871
      %v4904 = vpack.c.b16 %v4872, %v4872
      %v4905 = vpack.c.b16 %v4873, %v4873
      %v4906 = vpack.c.b16 %v4874, %v4874
      %v4907 = vpack.c.b16 %v4875, %v4875
      %v4908 = vpack.c.b16 %v4876, %v4876
      %v4909 = vpack.c.b16 %v4877, %v4877
      %v4910 = vpack.c.b16 %v4878, %v4878
      %v4911 = vpack.c.b16 %v4879, %v4879
      %v4912 = vpack.c.b16 %v4880, %v4880
      %v4913 = vpack.c.b16 %v4881, %v4881
      %v4914 = vpack.c.b16 %v4882, %v4882
      %v4915 = vpack.c.b16 %v4883, %v4883
      %v4916 = vpack.c.b16 %v4884, %v4884
      %v4917 = vpack.c.b16 %v4885, %v4885
      %v4918 = vpack.c.b16 %v4886, %v4886
      %v4919 = vpack.c.b16 %v4887, %v4887
      %v4920 = vpack.c.b16 %v4888, %v4888
      %v4921 = vpack.c.b16 %v4889, %v4889
      %v4922 = vpack.c.b16 %v4890, %v4890
      %v4923 = vpack.c.b16 %v4891, %v4891
      %v4924 = vpack.c.b16 %v4892, %v4892
      %v4925 = vpack.c.b16 %v4893, %v4893
      %v4926 = vpack.c.b16 %v4894, %v4894
      %s4959 = scalar_lea.vmem [#allocation3], 8
      %4960 = vst.msk [vmem:[%s4959] sm:$0xf] %vm3354, %v4895
      %4961 = vst.msk [vmem:[%s4959 + $0x4] sm:$0xf] %vm3354, %v4896
      %4962 = vst.msk [vmem:[%s4959 + $0x8] sm:$0xf] %vm3354, %v4897
      %4963 = vst.msk [vmem:[%s4959 + $0xc] sm:$0xf] %vm3354, %v4898
      %4964 = vst.msk [vmem:[%s4959 + $0x10] sm:$0xf] %vm3354, %v4899
      %4965 = vst.msk [vmem:[%s4959 + $0x14] sm:$0xf] %vm3354, %v4900
      %4966 = vst.msk [vmem:[%s4959 + $0x18] sm:$0xf] %vm3354, %v4901
      %4967 = vst.msk [vmem:[%s4959 + $0x1c] sm:$0xf] %vm3354, %v4902
      %4968 = vst.msk [vmem:[%s4959 + $0x20] sm:$0xf] %vm3354, %v4903
      %4969 = vst.msk [vmem:[%s4959 + $0x24] sm:$0xf] %vm3354, %v4904
      %4970 = vst.msk [vmem:[%s4959 + $0x28] sm:$0xf] %vm3354, %v4905
      %4971 = vst.msk [vmem:[%s4959 + $0x2c] sm:$0xf] %vm3354, %v4906
      %4972 = vst.msk [vmem:[%s4959 + $0x30] sm:$0xf] %vm3354, %v4907
      %4973 = vst.msk [vmem:[%s4959 + $0x34] sm:$0xf] %vm3354, %v4908
      %4974 = vst.msk [vmem:[%s4959 + $0x38] sm:$0xf] %vm3354, %v4909
      %4975 = vst.msk [vmem:[%s4959 + $0x3c] sm:$0xf] %vm3354, %v4910
      %4976 = vst.msk [vmem:[%s4959 + $0x40] sm:$0xf] %vm3354, %v4911
      %4977 = vst.msk [vmem:[%s4959 + $0x44] sm:$0xf] %vm3354, %v4912
      %4978 = vst.msk [vmem:[%s4959 + $0x48] sm:$0xf] %vm3354, %v4913
      %4979 = vst.msk [vmem:[%s4959 + $0x4c] sm:$0xf] %vm3354, %v4914
      %4980 = vst.msk [vmem:[%s4959 + $0x50] sm:$0xf] %vm3354, %v4915
      %4981 = vst.msk [vmem:[%s4959 + $0x54] sm:$0xf] %vm3354, %v4916
      %4982 = vst.msk [vmem:[%s4959 + $0x58] sm:$0xf] %vm3354, %v4917
      %4983 = vst.msk [vmem:[%s4959 + $0x5c] sm:$0xf] %vm3354, %v4918
      %4984 = vst.msk [vmem:[%s4959 + $0x60] sm:$0xf] %vm3354, %v4919
      %4985 = vst.msk [vmem:[%s4959 + $0x64] sm:$0xf] %vm3354, %v4920
      %4986 = vst.msk [vmem:[%s4959 + $0x68] sm:$0xf] %vm3354, %v4921
      %4987 = vst.msk [vmem:[%s4959 + $0x6c] sm:$0xf] %vm3354, %v4922
      %4988 = vst.msk [vmem:[%s4959 + $0x70] sm:$0xf] %vm3354, %v4923
      %4989 = vst.msk [vmem:[%s4959 + $0x74] sm:$0xf] %vm3354, %v4924
      %4990 = vst.msk [vmem:[%s4959 + $0x78] sm:$0xf] %vm3354, %v4925
      %4991 = vst.msk [vmem:[%s4959 + $0x7c] sm:$0xf] %vm3354, %v4926
      %4992 = vst.msk [vmem:[#allocation3] sm:$0xf] %vm3354, 0
      %4993 = vst.msk [vmem:[#allocation3 + $0x4] sm:$0xf] %vm3354, 0
      %s4994 = scalar_lea.vmem [#allocation3], 136
      %4995 = vst.msk [vmem:[%s4994] sm:$0xf] %vm3354, 0
      %4996 = vst.msk [vmem:[%s4994 + $0x4] sm:$0xf] %vm3354, 0
      %v4997 = vld [vmem:[#allocation3] sm:$0xf]
      %v4998 = vld [vmem:[#allocation3 + $0x4] sm:$0xf]
      %v4999 = vld [vmem:[#allocation3 + $0x8] sm:$0xf]
      %v5000 = vld [vmem:[#allocation3 + $0xc] sm:$0xf]
      %v5001 = vld [vmem:[#allocation3 + $0x10] sm:$0xf]
      %v5002 = vld [vmem:[#allocation3 + $0x14] sm:$0xf]
      %v5003 = vld [vmem:[#allocation3 + $0x18] sm:$0xf]
      %v5004 = vld [vmem:[#allocation3 + $0x1c] sm:$0xf]
      %v5005 = vld [vmem:[#allocation3 + $0x20] sm:$0xf]
      %v5006 = vld [vmem:[#allocation3 + $0x24] sm:$0xf]
      %v5007 = vld [vmem:[#allocation3 + $0x28] sm:$0xf]
      %v5008 = vld [vmem:[#allocation3 + $0x2c] sm:$0xf]
      %v5009 = vld [vmem:[#allocation3 + $0x30] sm:$0xf]
      %v5010 = vld [vmem:[#allocation3 + $0x34] sm:$0xf]
      %v5011 = vld [vmem:[#allocation3 + $0x38] sm:$0xf]
      %v5012 = vld [vmem:[#allocation3 + $0x3c] sm:$0xf]
      %v5013 = vld [vmem:[#allocation3 + $0x40] sm:$0xf]
      %v5014 = vld [vmem:[#allocation3 + $0x44] sm:$0xf]
      %v5015 = vld [vmem:[#allocation3 + $0x48] sm:$0xf]
      %v5016 = vld [vmem:[#allocation3 + $0x4c] sm:$0xf]
      %v5017 = vld [vmem:[#allocation3 + $0x50] sm:$0xf]
      %v5018 = vld [vmem:[#allocation3 + $0x54] sm:$0xf]
      %v5019 = vld [vmem:[#allocation3 + $0x58] sm:$0xf]
      %v5020 = vld [vmem:[#allocation3 + $0x5c] sm:$0xf]
      %v5021 = vld [vmem:[#allocation3 + $0x60] sm:$0xf]
      %v5022 = vld [vmem:[#allocation3 + $0x64] sm:$0xf]
      %v5023 = vld [vmem:[#allocation3 + $0x68] sm:$0xf]
      %v5024 = vld [vmem:[#allocation3 + $0x6c] sm:$0xf]
      %v5025 = vld [vmem:[#allocation3 + $0x70] sm:$0xf]
      %v5026 = vld [vmem:[#allocation3 + $0x74] sm:$0xf]
      %v5027 = vld [vmem:[#allocation3 + $0x78] sm:$0xf]
      %v5028 = vld [vmem:[#allocation3 + $0x7c] sm:$0xf]
      %v5029 = vld [vmem:[#allocation3 + $0x80] sm:$0xf]
      %v5030 = vld [vmem:[#allocation3 + $0x84] sm:$0xf]
      %v5031 = vld [vmem:[#allocation3 + $0x88] sm:$0xf]
      %v5032 = vld [vmem:[#allocation3 + $0x8c] sm:$0xf]
      %v5033 = vld [vmem:[%s5] sm:$0xf]
      %v5034 = vld [vmem:[%s5 + $0x4] sm:$0xf]
      %v5035 = vld [vmem:[%s5 + $0x8] sm:$0xf]
      %v5036 = vld [vmem:[%s5 + $0xc] sm:$0xf]
      %v5073 = vunpack.c.l.b16 %v4997
      %v5074 = vunpack.c.l.b16 %v4998
      %v5075 = vunpack.c.l.b16 %v4999
      %v5076 = vunpack.c.l.b16 %v5000
      %v5077 = vunpack.c.l.b16 %v5001
      %v5078 = vunpack.c.l.b16 %v5002
      %v5079 = vunpack.c.l.b16 %v5003
      %v5080 = vunpack.c.l.b16 %v5004
      %v5081 = vunpack.c.l.b16 %v5005
      %v5082 = vunpack.c.l.b16 %v5006
      %v5083 = vunpack.c.l.b16 %v5007
      %v5084 = vunpack.c.l.b16 %v5008
      %v5085 = vunpack.c.l.b16 %v5009
      %v5086 = vunpack.c.l.b16 %v5010
      %v5087 = vunpack.c.l.b16 %v5011
      %v5088 = vunpack.c.l.b16 %v5012
      %v5089 = vunpack.c.l.b16 %v5013
      %v5090 = vunpack.c.l.b16 %v5014
      %v5091 = vunpack.c.l.b16 %v5015
      %v5092 = vunpack.c.l.b16 %v5016
      %v5093 = vunpack.c.l.b16 %v5017
      %v5094 = vunpack.c.l.b16 %v5018
      %v5095 = vunpack.c.l.b16 %v5019
      %v5096 = vunpack.c.l.b16 %v5020
      %v5097 = vunpack.c.l.b16 %v5021
      %v5098 = vunpack.c.l.b16 %v5022
      %v5099 = vunpack.c.l.b16 %v5023
      %v5100 = vunpack.c.l.b16 %v5024
      %v5101 = vunpack.c.l.b16 %v5025
      %v5102 = vunpack.c.l.b16 %v5026
      %v5103 = vunpack.c.l.b16 %v5027
      %v5104 = vunpack.c.l.b16 %v5028
      %v5105 = vunpack.c.l.b16 %v5029
      %v5106 = vunpack.c.l.b16 %v5030
      %v5107 = vunpack.c.l.b16 %v5031
      %v5108 = vunpack.c.l.b16 %v5032
      %v5109 = vpack.c.b16 %v5074, %v5073
      %v5110 = vpack.c.b16 %v5076, %v5075
      %v5111 = vpack.c.b16 %v5078, %v5077
      %v5112 = vpack.c.b16 %v5080, %v5079
      %v5113 = vpack.c.b16 %v5082, %v5081
      %v5114 = vpack.c.b16 %v5084, %v5083
      %v5115 = vpack.c.b16 %v5086, %v5085
      %v5116 = vpack.c.b16 %v5088, %v5087
      %v5117 = vpack.c.b16 %v5090, %v5089
      %v5118 = vpack.c.b16 %v5092, %v5091
      %v5119 = vpack.c.b16 %v5094, %v5093
      %v5120 = vpack.c.b16 %v5096, %v5095
      %v5121 = vpack.c.b16 %v5098, %v5097
      %v5122 = vpack.c.b16 %v5100, %v5099
      %v5123 = vpack.c.b16 %v5102, %v5101
      %v5124 = vpack.c.b16 %v5104, %v5103
      %v5125 = vpack.c.b16 %v5106, %v5105
      %v5126 = vpack.c.b16 %v5108, %v5107
      %v5131 = vunpack.c.l.b16 %v5033
      %v5132 = vunpack.c.l.b16 %v5034
      %v5133 = vunpack.c.l.b16 %v5035
      %v5134 = vunpack.c.l.b16 %v5036
      %v5135 = vpack.c.b16 %v5132, %v5131
      %v5136 = vpack.c.b16 %v5134, %v5133
      %v5140 = vsel %vm3678, %v5109, 0
      %v5143 = vsel %vm3678, %v5110, 0
      %v5146 = vsel %vm3678, %v5111, 0
      %v5149 = vsel %vm3678, %v5112, 0
      %v5152 = vsel %vm3678, %v5113, 0
      %v5155 = vsel %vm3678, %v5114, 0
      %v5158 = vsel %vm3678, %v5115, 0
      %v5161 = vsel %vm3678, %v5116, 0
      %v5164 = vsel %vm3678, %v5117, 0
      %v5167 = vsel %vm3678, %v5118, 0
      %v5170 = vsel %vm3678, %v5119, 0
      %v5173 = vsel %vm3678, %v5120, 0
      %v5176 = vsel %vm3678, %v5121, 0
      %v5179 = vsel %vm3678, %v5122, 0
      %v5182 = vsel %vm3678, %v5123, 0
      %v5185 = vsel %vm3678, %v5124, 0
      %v5188 = vsel %vm3678, %v5125, 0
      %v5191 = vsel %vm3678, %v5126, 0
      %5193 = vmatprep.subr.bf16.mxu0 0
      %5194 = vmatpush1.bf16.msra.mxu0 0
      %5195 = vmatprep.subr.bf16.mxu0 0
      %5196 = vmatpush1.bf16.msra.mxu0 0
      %5197 = vmatprep.subr.bf16.mxu0 0
      %5198 = vmatpush1.bf16.msra.mxu0 0
      %5199 = vmatprep.subr.bf16.mxu0 0
      %5200 = vmatpush1.bf16.msra.mxu0 0
      %5201 = vmatprep.subr.bf16.mxu0 0
      %5202 = vmatpush1.bf16.msra.mxu0 0
      %5203 = vmatprep.subr.bf16.mxu0 0
      %5204 = vmatpush1.bf16.msra.mxu0 0
      %5205 = vmatprep.subr.bf16.mxu0 0
      %5206 = vmatpush1.bf16.msra.mxu0 %v5136
      %5207 = vmatprep.subr.bf16.mxu0 0
      %5208 = vmatpush1.bf16.msra.mxu0 %v5135
      %5209 = vmatprep.subr.bf16.mxu0 0
      %5210 = vmatpush2.bf16.msra.mxu0 0
      %5211 = vmatprep.subr.bf16.mxu0 0
      %5212 = vmatpush2.bf16.msra.mxu0 0
      %5213 = vmatprep.subr.bf16.mxu0 0
      %5214 = vmatpush2.bf16.msra.mxu0 0
      %5215 = vmatprep.subr.bf16.mxu0 0
      %5216 = vmatpush2.bf16.msra.mxu0 0
      %5217 = vmatprep.subr.bf16.mxu0 0
      %5218 = vmatpush2.bf16.msra.mxu0 0
      %5219 = vmatprep.subr.bf16.mxu0 0
      %5220 = vmatpush2.bf16.msra.mxu0 0
      %5221 = vmatprep.subr.bf16.mxu0 0
      %5222 = vmatpush2.bf16.msra.mxu0 0
      %5223 = vmatprep.subr.bf16.mxu0 0
      %5224 = vmatpush2.bf16.msra.mxu0 0
      %5225 = vmatprep.mubr.bf16.mxu0 0
      %5226 = vmatmul.mubr.bf16.gmra.mxu0 %v5140
      %v5227 = vpop.f32.mrf.mxu0
      %v5228 = vadd.f32 0.0, %v5227
      %v5229 = vpop.f32.mrf.mxu0
      %v5230 = vpop.f32.mrf.mxu0
      %v5231 = vadd.f32 0.0, %v5230
      %v5232 = vpop.f32.mrf.mxu0
      %5233 = vmatprep.mubr.bf16.mxu0 0
      %5234 = vmatmul.mubr.bf16.gmra.mxu0 %v5143
      %v5235 = vpop.f32.mrf.mxu0
      %v5236 = vadd.f32 0.0, %v5235
      %v5237 = vpop.f32.mrf.mxu0
      %v5238 = vpop.f32.mrf.mxu0
      %v5239 = vadd.f32 0.0, %v5238
      %v5240 = vpop.f32.mrf.mxu0
      %5241 = vmatprep.mubr.bf16.mxu0 0
      %5242 = vmatmul.mubr.bf16.gmra.mxu0 %v5146
      %v5243 = vpop.f32.mrf.mxu0
      %v5244 = vadd.f32 0.0, %v5243
      %v5245 = vpop.f32.mrf.mxu0
      %v5246 = vpop.f32.mrf.mxu0
      %v5247 = vadd.f32 0.0, %v5246
      %v5248 = vpop.f32.mrf.mxu0
      %5249 = vmatprep.mubr.bf16.mxu0 0
      %5250 = vmatmul.mubr.bf16.gmra.mxu0 %v5149
      %v5251 = vpop.f32.mrf.mxu0
      %v5252 = vadd.f32 0.0, %v5251
      %v5253 = vpop.f32.mrf.mxu0
      %v5254 = vpop.f32.mrf.mxu0
      %v5255 = vadd.f32 0.0, %v5254
      %v5256 = vpop.f32.mrf.mxu0
      %5257 = vmatprep.mubr.bf16.mxu0 0
      %5258 = vmatmul.mubr.bf16.gmra.mxu0 %v5152
      %v5259 = vpop.f32.mrf.mxu0
      %v5260 = vadd.f32 0.0, %v5259
      %v5261 = vpop.f32.mrf.mxu0
      %v5262 = vpop.f32.mrf.mxu0
      %v5263 = vadd.f32 0.0, %v5262
      %v5264 = vpop.f32.mrf.mxu0
      %5265 = vmatprep.mubr.bf16.mxu0 0
      %5266 = vmatmul.mubr.bf16.gmra.mxu0 %v5155
      %v5267 = vpop.f32.mrf.mxu0
      %v5268 = vadd.f32 0.0, %v5267
      %v5269 = vpop.f32.mrf.mxu0
      %v5270 = vpop.f32.mrf.mxu0
      %v5271 = vadd.f32 0.0, %v5270
      %v5272 = vpop.f32.mrf.mxu0
      %5273 = vmatprep.mubr.bf16.mxu0 0
      %5274 = vmatmul.mubr.bf16.gmra.mxu0 %v5158
      %v5275 = vpop.f32.mrf.mxu0
      %v5276 = vadd.f32 0.0, %v5275
      %v5277 = vpop.f32.mrf.mxu0
      %v5278 = vpop.f32.mrf.mxu0
      %v5279 = vadd.f32 0.0, %v5278
      %v5280 = vpop.f32.mrf.mxu0
      %5281 = vmatprep.mubr.bf16.mxu0 0
      %5282 = vmatmul.mubr.bf16.gmra.mxu0 %v5161
      %v5283 = vpop.f32.mrf.mxu0
      %v5284 = vadd.f32 0.0, %v5283
      %v5285 = vpop.f32.mrf.mxu0
      %v5286 = vpop.f32.mrf.mxu0
      %v5287 = vadd.f32 0.0, %v5286
      %v5288 = vpop.f32.mrf.mxu0
      %5289 = vmatprep.mubr.bf16.mxu0 0
      %5290 = vmatmul.mubr.bf16.gmra.mxu0 %v5164
      %v5291 = vpop.f32.mrf.mxu0
      %v5292 = vadd.f32 0.0, %v5291
      %v5293 = vpop.f32.mrf.mxu0
      %v5294 = vpop.f32.mrf.mxu0
      %v5295 = vadd.f32 0.0, %v5294
      %v5296 = vpop.f32.mrf.mxu0
      %5297 = vmatprep.mubr.bf16.mxu0 0
      %5298 = vmatmul.mubr.bf16.gmra.mxu0 %v5167
      %v5299 = vpop.f32.mrf.mxu0
      %v5300 = vadd.f32 0.0, %v5299
      %v5301 = vpop.f32.mrf.mxu0
      %v5302 = vpop.f32.mrf.mxu0
      %v5303 = vadd.f32 0.0, %v5302
      %v5304 = vpop.f32.mrf.mxu0
      %5305 = vmatprep.mubr.bf16.mxu0 0
      %5306 = vmatmul.mubr.bf16.gmra.mxu0 %v5170
      %v5307 = vpop.f32.mrf.mxu0
      %v5308 = vadd.f32 0.0, %v5307
      %v5309 = vpop.f32.mrf.mxu0
      %v5310 = vpop.f32.mrf.mxu0
      %v5311 = vadd.f32 0.0, %v5310
      %v5312 = vpop.f32.mrf.mxu0
      %5313 = vmatprep.mubr.bf16.mxu0 0
      %5314 = vmatmul.mubr.bf16.gmra.mxu0 %v5173
      %v5315 = vpop.f32.mrf.mxu0
      %v5316 = vadd.f32 0.0, %v5315
      %v5317 = vpop.f32.mrf.mxu0
      %v5318 = vpop.f32.mrf.mxu0
      %v5319 = vadd.f32 0.0, %v5318
      %v5320 = vpop.f32.mrf.mxu0
      %5321 = vmatprep.mubr.bf16.mxu0 0
      %5322 = vmatmul.mubr.bf16.gmra.mxu0 %v5176
      %v5323 = vpop.f32.mrf.mxu0
      %v5324 = vadd.f32 0.0, %v5323
      %v5325 = vpop.f32.mrf.mxu0
      %v5326 = vpop.f32.mrf.mxu0
      %v5327 = vadd.f32 0.0, %v5326
      %v5328 = vpop.f32.mrf.mxu0
      %5329 = vmatprep.mubr.bf16.mxu0 0
      %5330 = vmatmul.mubr.bf16.gmra.mxu0 %v5179
      %v5331 = vpop.f32.mrf.mxu0
      %v5332 = vadd.f32 0.0, %v5331
      %v5333 = vpop.f32.mrf.mxu0
      %v5334 = vpop.f32.mrf.mxu0
      %v5335 = vadd.f32 0.0, %v5334
      %v5336 = vpop.f32.mrf.mxu0
      %5337 = vmatprep.mubr.bf16.mxu0 0
      %5338 = vmatmul.mubr.bf16.gmra.mxu0 %v5182
      %v5339 = vpop.f32.mrf.mxu0
      %v5340 = vadd.f32 0.0, %v5339
      %v5341 = vpop.f32.mrf.mxu0
      %v5342 = vpop.f32.mrf.mxu0
      %v5343 = vadd.f32 0.0, %v5342
      %v5344 = vpop.f32.mrf.mxu0
      %5345 = vmatprep.mubr.bf16.mxu0 0
      %5346 = vmatmul.mubr.bf16.gmra.mxu0 %v5185
      %v5347 = vpop.f32.mrf.mxu0
      %v5348 = vadd.f32 0.0, %v5347
      %v5349 = vpop.f32.mrf.mxu0
      %v5350 = vpop.f32.mrf.mxu0
      %v5351 = vadd.f32 0.0, %v5350
      %v5352 = vpop.f32.mrf.mxu0
      %5353 = vmatprep.mubr.bf16.mxu0 0
      %5354 = vmatmul.mubr.bf16.gmra.mxu0 %v5188
      %v5355 = vpop.f32.mrf.mxu0
      %v5356 = vadd.f32 0.0, %v5355
      %v5357 = vpop.f32.mrf.mxu0
      %v5358 = vpop.f32.mrf.mxu0
      %v5359 = vadd.f32 0.0, %v5358
      %v5360 = vpop.f32.mrf.mxu0
      %5361 = vmatprep.mubr.bf16.mxu0 0
      %5362 = vmatmul.mubr.bf16.gmra.mxu0 %v5191
      %v5363 = vpop.f32.mrf.mxu0
      %v5364 = vadd.f32 0.0, %v5363
      %v5365 = vpop.f32.mrf.mxu0
      %v5366 = vpop.f32.mrf.mxu0
      %v5367 = vadd.f32 0.0, %v5366
      %v5368 = vpop.f32.mrf.mxu0
      %5369 = vdwg.mxu0
      %5402 = vrot.lane.b32.xlu0 %v5236, 96
      %v5403 = vpop.permute.xlu0 %5402
      %5404 = vrot.lane.b32.xlu0 %v5239, 96
      %v5405 = vpop.permute.xlu0 %5404
      %5406 = vrot.lane.b32.xlu0 %v5244, 96
      %v5407 = vpop.permute.xlu0 %5406
      %5408 = vrot.lane.b32.xlu0 %v5247, 96
      %v5409 = vpop.permute.xlu0 %5408
      %5410 = vrot.lane.b32.xlu0 %v5252, 96
      %v5411 = vpop.permute.xlu0 %5410
      %5412 = vrot.lane.b32.xlu0 %v5255, 96
      %v5413 = vpop.permute.xlu0 %5412
      %5414 = vrot.lane.b32.xlu0 %v5260, 96
      %v5415 = vpop.permute.xlu0 %5414
      %5416 = vrot.lane.b32.xlu0 %v5263, 96
      %v5417 = vpop.permute.xlu0 %5416
      %5418 = vrot.lane.b32.xlu0 %v5268, 96
      %v5419 = vpop.permute.xlu0 %5418
      %5420 = vrot.lane.b32.xlu0 %v5271, 96
      %v5421 = vpop.permute.xlu0 %5420
      %5422 = vrot.lane.b32.xlu0 %v5276, 96
      %v5423 = vpop.permute.xlu0 %5422
      %5424 = vrot.lane.b32.xlu0 %v5279, 96
      %v5425 = vpop.permute.xlu0 %5424
      %5426 = vrot.lane.b32.xlu0 %v5284, 96
      %v5427 = vpop.permute.xlu0 %5426
      %5428 = vrot.lane.b32.xlu0 %v5287, 96
      %v5429 = vpop.permute.xlu0 %5428
      %5430 = vrot.lane.b32.xlu0 %v5292, 96
      %v5431 = vpop.permute.xlu0 %5430
      %5432 = vrot.lane.b32.xlu0 %v5295, 96
      %v5433 = vpop.permute.xlu0 %5432
      %5434 = vrot.lane.b32.xlu0 %v5300, 96
      %v5435 = vpop.permute.xlu0 %5434
      %5436 = vrot.lane.b32.xlu0 %v5303, 96
      %v5437 = vpop.permute.xlu0 %5436
      %5438 = vrot.lane.b32.xlu0 %v5308, 96
      %v5439 = vpop.permute.xlu0 %5438
      %5440 = vrot.lane.b32.xlu0 %v5311, 96
      %v5441 = vpop.permute.xlu0 %5440
      %5442 = vrot.lane.b32.xlu0 %v5316, 96
      %v5443 = vpop.permute.xlu0 %5442
      %5444 = vrot.lane.b32.xlu0 %v5319, 96
      %v5445 = vpop.permute.xlu0 %5444
      %5446 = vrot.lane.b32.xlu0 %v5324, 96
      %v5447 = vpop.permute.xlu0 %5446
      %5448 = vrot.lane.b32.xlu0 %v5327, 96
      %v5449 = vpop.permute.xlu0 %5448
      %5450 = vrot.lane.b32.xlu0 %v5332, 96
      %v5451 = vpop.permute.xlu0 %5450
      %5452 = vrot.lane.b32.xlu0 %v5335, 96
      %v5453 = vpop.permute.xlu0 %5452
      %5454 = vrot.lane.b32.xlu0 %v5340, 96
      %v5455 = vpop.permute.xlu0 %5454
      %5456 = vrot.lane.b32.xlu0 %v5343, 96
      %v5457 = vpop.permute.xlu0 %5456
      %5458 = vrot.lane.b32.xlu0 %v5348, 96
      %v5459 = vpop.permute.xlu0 %5458
      %5460 = vrot.lane.b32.xlu0 %v5351, 96
      %v5461 = vpop.permute.xlu0 %5460
      %5462 = vrot.lane.b32.xlu0 %v5356, 96
      %v5463 = vpop.permute.xlu0 %5462
      %5464 = vrot.lane.b32.xlu0 %v5359, 96
      %v5465 = vpop.permute.xlu0 %5464
      %v5498 = vadd.f32 %v5228, %v5403
      %v5499 = vadd.f32 %v5231, %v5405
      %v5500 = vadd.f32 %v5236, %v5407
      %v5501 = vadd.f32 %v5239, %v5409
      %v5502 = vadd.f32 %v5244, %v5411
      %v5503 = vadd.f32 %v5247, %v5413
      %v5504 = vadd.f32 %v5252, %v5415
      %v5505 = vadd.f32 %v5255, %v5417
      %v5506 = vadd.f32 %v5260, %v5419
      %v5507 = vadd.f32 %v5263, %v5421
      %v5508 = vadd.f32 %v5268, %v5423
      %v5509 = vadd.f32 %v5271, %v5425
      %v5510 = vadd.f32 %v5276, %v5427
      %v5511 = vadd.f32 %v5279, %v5429
      %v5512 = vadd.f32 %v5284, %v5431
      %v5513 = vadd.f32 %v5287, %v5433
      %v5514 = vadd.f32 %v5292, %v5435
      %v5515 = vadd.f32 %v5295, %v5437
      %v5516 = vadd.f32 %v5300, %v5439
      %v5517 = vadd.f32 %v5303, %v5441
      %v5518 = vadd.f32 %v5308, %v5443
      %v5519 = vadd.f32 %v5311, %v5445
      %v5520 = vadd.f32 %v5316, %v5447
      %v5521 = vadd.f32 %v5319, %v5449
      %v5522 = vadd.f32 %v5324, %v5451
      %v5523 = vadd.f32 %v5327, %v5453
      %v5524 = vadd.f32 %v5332, %v5455
      %v5525 = vadd.f32 %v5335, %v5457
      %v5526 = vadd.f32 %v5340, %v5459
      %v5527 = vadd.f32 %v5343, %v5461
      %v5528 = vadd.f32 %v5348, %v5463
      %v5529 = vadd.f32 %v5351, %v5465
      %5532 = vrot.lane.b32.xlu0 %v5244, 64
      %v5533 = vpop.permute.xlu0 %5532
      %5534 = vrot.lane.b32.xlu0 %v5247, 64
      %v5535 = vpop.permute.xlu0 %5534
      %5536 = vrot.lane.b32.xlu0 %v5252, 64
      %v5537 = vpop.permute.xlu0 %5536
      %5538 = vrot.lane.b32.xlu0 %v5255, 64
      %v5539 = vpop.permute.xlu0 %5538
      %5540 = vrot.lane.b32.xlu0 %v5260, 64
      %v5541 = vpop.permute.xlu0 %5540
      %5542 = vrot.lane.b32.xlu0 %v5263, 64
      %v5543 = vpop.permute.xlu0 %5542
      %5544 = vrot.lane.b32.xlu0 %v5268, 64
      %v5545 = vpop.permute.xlu0 %5544
      %5546 = vrot.lane.b32.xlu0 %v5271, 64
      %v5547 = vpop.permute.xlu0 %5546
      %5548 = vrot.lane.b32.xlu0 %v5276, 64
      %v5549 = vpop.permute.xlu0 %5548
      %5550 = vrot.lane.b32.xlu0 %v5279, 64
      %v5551 = vpop.permute.xlu0 %5550
      %5552 = vrot.lane.b32.xlu0 %v5284, 64
      %v5553 = vpop.permute.xlu0 %5552
      %5554 = vrot.lane.b32.xlu0 %v5287, 64
      %v5555 = vpop.permute.xlu0 %5554
      %5556 = vrot.lane.b32.xlu0 %v5292, 64
      %v5557 = vpop.permute.xlu0 %5556
      %5558 = vrot.lane.b32.xlu0 %v5295, 64
      %v5559 = vpop.permute.xlu0 %5558
      %5560 = vrot.lane.b32.xlu0 %v5300, 64
      %v5561 = vpop.permute.xlu0 %5560
      %5562 = vrot.lane.b32.xlu0 %v5303, 64
      %v5563 = vpop.permute.xlu0 %5562
      %5564 = vrot.lane.b32.xlu0 %v5308, 64
      %v5565 = vpop.permute.xlu0 %5564
      %5566 = vrot.lane.b32.xlu0 %v5311, 64
      %v5567 = vpop.permute.xlu0 %5566
      %5568 = vrot.lane.b32.xlu0 %v5316, 64
      %v5569 = vpop.permute.xlu0 %5568
      %5570 = vrot.lane.b32.xlu0 %v5319, 64
      %v5571 = vpop.permute.xlu0 %5570
      %5572 = vrot.lane.b32.xlu0 %v5324, 64
      %v5573 = vpop.permute.xlu0 %5572
      %5574 = vrot.lane.b32.xlu0 %v5327, 64
      %v5575 = vpop.permute.xlu0 %5574
      %5576 = vrot.lane.b32.xlu0 %v5332, 64
      %v5577 = vpop.permute.xlu0 %5576
      %5578 = vrot.lane.b32.xlu0 %v5335, 64
      %v5579 = vpop.permute.xlu0 %5578
      %5580 = vrot.lane.b32.xlu0 %v5340, 64
      %v5581 = vpop.permute.xlu0 %5580
      %5582 = vrot.lane.b32.xlu0 %v5343, 64
      %v5583 = vpop.permute.xlu0 %5582
      %5584 = vrot.lane.b32.xlu0 %v5348, 64
      %v5585 = vpop.permute.xlu0 %5584
      %5586 = vrot.lane.b32.xlu0 %v5351, 64
      %v5587 = vpop.permute.xlu0 %5586
      %5588 = vrot.lane.b32.xlu0 %v5356, 64
      %v5589 = vpop.permute.xlu0 %5588
      %5590 = vrot.lane.b32.xlu0 %v5359, 64
      %v5591 = vpop.permute.xlu0 %5590
      %5592 = vrot.lane.b32.xlu0 %v5364, 64
      %v5593 = vpop.permute.xlu0 %5592
      %5594 = vrot.lane.b32.xlu0 %v5367, 64
      %v5595 = vpop.permute.xlu0 %5594
      %v5628 = vadd.f32 %v5498, %v5533
      %v5629 = vadd.f32 %v5499, %v5535
      %v5630 = vadd.f32 %v5500, %v5537
      %v5631 = vadd.f32 %v5501, %v5539
      %v5632 = vadd.f32 %v5502, %v5541
      %v5633 = vadd.f32 %v5503, %v5543
      %v5634 = vadd.f32 %v5504, %v5545
      %v5635 = vadd.f32 %v5505, %v5547
      %v5636 = vadd.f32 %v5506, %v5549
      %v5637 = vadd.f32 %v5507, %v5551
      %v5638 = vadd.f32 %v5508, %v5553
      %v5639 = vadd.f32 %v5509, %v5555
      %v5640 = vadd.f32 %v5510, %v5557
      %v5641 = vadd.f32 %v5511, %v5559
      %v5642 = vadd.f32 %v5512, %v5561
      %v5643 = vadd.f32 %v5513, %v5563
      %v5644 = vadd.f32 %v5514, %v5565
      %v5645 = vadd.f32 %v5515, %v5567
      %v5646 = vadd.f32 %v5516, %v5569
      %v5647 = vadd.f32 %v5517, %v5571
      %v5648 = vadd.f32 %v5518, %v5573
      %v5649 = vadd.f32 %v5519, %v5575
      %v5650 = vadd.f32 %v5520, %v5577
      %v5651 = vadd.f32 %v5521, %v5579
      %v5652 = vadd.f32 %v5522, %v5581
      %v5653 = vadd.f32 %v5523, %v5583
      %v5654 = vadd.f32 %v5524, %v5585
      %v5655 = vadd.f32 %v5525, %v5587
      %v5656 = vadd.f32 %v5526, %v5589
      %v5657 = vadd.f32 %v5527, %v5591
      %v5658 = vadd.f32 %v5528, %v5593
      %v5659 = vadd.f32 %v5529, %v5595
      %v5660 = vld [vmem:[%s6] sm:$0x1]
      %v5662 = vlaneseq
      %v5663 = vshrl.u32 %v5662, 7
      %v5664 = vsub.s32 0, %v5663
      %v5665 = vrot.slane %v5660, %v5664
      %v5667 = vadd.f32 %v5628, %v5665
      %v5668 = vadd.f32 %v5629, %v5665
      %v5669 = vadd.f32 %v5630, %v5665
      %v5670 = vadd.f32 %v5631, %v5665
      %v5671 = vadd.f32 %v5632, %v5665
      %v5672 = vadd.f32 %v5633, %v5665
      %v5673 = vadd.f32 %v5634, %v5665
      %v5674 = vadd.f32 %v5635, %v5665
      %v5675 = vadd.f32 %v5636, %v5665
      %v5676 = vadd.f32 %v5637, %v5665
      %v5677 = vadd.f32 %v5638, %v5665
      %v5678 = vadd.f32 %v5639, %v5665
      %v5679 = vadd.f32 %v5640, %v5665
      %v5680 = vadd.f32 %v5641, %v5665
      %v5681 = vadd.f32 %v5642, %v5665
      %v5682 = vadd.f32 %v5643, %v5665
      %v5683 = vadd.f32 %v5644, %v5665
      %v5684 = vadd.f32 %v5645, %v5665
      %v5685 = vadd.f32 %v5646, %v5665
      %v5686 = vadd.f32 %v5647, %v5665
      %v5687 = vadd.f32 %v5648, %v5665
      %v5688 = vadd.f32 %v5649, %v5665
      %v5689 = vadd.f32 %v5650, %v5665
      %v5690 = vadd.f32 %v5651, %v5665
      %v5691 = vadd.f32 %v5652, %v5665
      %v5692 = vadd.f32 %v5653, %v5665
      %v5693 = vadd.f32 %v5654, %v5665
      %v5694 = vadd.f32 %v5655, %v5665
      %v5695 = vadd.f32 %v5656, %v5665
      %v5696 = vadd.f32 %v5657, %v5665
      %v5697 = vadd.f32 %v5658, %v5665
      %v5698 = vadd.f32 %v5659, %v5665
      %v5699 = vmax.f32 %v5667, 0.0
      %v5700 = vmax.f32 %v5668, 0.0
      %v5701 = vmax.f32 %v5669, 0.0
      %v5702 = vmax.f32 %v5670, 0.0
      %v5703 = vmax.f32 %v5671, 0.0
      %v5704 = vmax.f32 %v5672, 0.0
      %v5705 = vmax.f32 %v5673, 0.0
      %v5706 = vmax.f32 %v5674, 0.0
      %v5707 = vmax.f32 %v5675, 0.0
      %v5708 = vmax.f32 %v5676, 0.0
      %v5709 = vmax.f32 %v5677, 0.0
      %v5710 = vmax.f32 %v5678, 0.0
      %v5711 = vmax.f32 %v5679, 0.0
      %v5712 = vmax.f32 %v5680, 0.0
      %v5713 = vmax.f32 %v5681, 0.0
      %v5714 = vmax.f32 %v5682, 0.0
      %v5715 = vmax.f32 %v5683, 0.0
      %v5716 = vmax.f32 %v5684, 0.0
      %v5717 = vmax.f32 %v5685, 0.0
      %v5718 = vmax.f32 %v5686, 0.0
      %v5719 = vmax.f32 %v5687, 0.0
      %v5720 = vmax.f32 %v5688, 0.0
      %v5721 = vmax.f32 %v5689, 0.0
      %v5722 = vmax.f32 %v5690, 0.0
      %v5723 = vmax.f32 %v5691, 0.0
      %v5724 = vmax.f32 %v5692, 0.0
      %v5725 = vmax.f32 %v5693, 0.0
      %v5726 = vmax.f32 %v5694, 0.0
      %v5727 = vmax.f32 %v5695, 0.0
      %v5728 = vmax.f32 %v5696, 0.0
      %v5729 = vmax.f32 %v5697, 0.0
      %v5730 = vmax.f32 %v5698, 0.0
      %v5731 = vmax.f32 %v5699, %v5701
      %v5732 = vmax.f32 %v5700, %v5702
      %v5733 = vmax.f32 %v5703, %v5705
      %v5734 = vmax.f32 %v5704, %v5706
      %v5735 = vmax.f32 %v5707, %v5709
      %v5736 = vmax.f32 %v5708, %v5710
      %v5737 = vmax.f32 %v5711, %v5713
      %v5738 = vmax.f32 %v5712, %v5714
      %v5739 = vmax.f32 %v5715, %v5717
      %v5740 = vmax.f32 %v5716, %v5718
      %v5741 = vmax.f32 %v5719, %v5721
      %v5742 = vmax.f32 %v5720, %v5722
      %v5743 = vmax.f32 %v5723, %v5725
      %v5744 = vmax.f32 %v5724, %v5726
      %v5745 = vmax.f32 %v5727, %v5729
      %v5746 = vmax.f32 %v5728, %v5730
      %v5747 = vpack.c.bf16 %v5732, %v5731
      %v5748 = vpack.c.bf16 %v5734, %v5733
      %v5749 = vpack.c.bf16 %v5736, %v5735
      %v5750 = vpack.c.bf16 %v5738, %v5737
      %v5751 = vpack.c.bf16 %v5740, %v5739
      %v5752 = vpack.c.bf16 %v5742, %v5741
      %v5753 = vpack.c.bf16 %v5744, %v5743
      %v5754 = vpack.c.bf16 %v5746, %v5745
      %v5763 = vunpack.c.l.b16 %v5747
      %v5764 = vunpack.c.h.b16 %v5747
      %v5765 = vunpack.c.l.b16 %v5748
      %v5766 = vunpack.c.h.b16 %v5748
      %v5767 = vunpack.c.l.b16 %v5749
      %v5768 = vunpack.c.h.b16 %v5749
      %v5769 = vunpack.c.l.b16 %v5750
      %v5770 = vunpack.c.h.b16 %v5750
      %v5771 = vunpack.c.l.b16 %v5751
      %v5772 = vunpack.c.h.b16 %v5751
      %v5773 = vunpack.c.l.b16 %v5752
      %v5774 = vunpack.c.h.b16 %v5752
      %v5775 = vunpack.c.l.b16 %v5753
      %v5776 = vunpack.c.h.b16 %v5753
      %v5777 = vunpack.c.l.b16 %v5754
      %v5778 = vunpack.c.h.b16 %v5754
      %v5779 = vpack.c.b16 %v5763, %v5763
      %v5780 = vpack.c.b16 %v5764, %v5764
      %v5781 = vpack.c.b16 %v5765, %v5765
      %v5782 = vpack.c.b16 %v5766, %v5766
      %v5783 = vpack.c.b16 %v5767, %v5767
      %v5784 = vpack.c.b16 %v5768, %v5768
      %v5785 = vpack.c.b16 %v5769, %v5769
      %v5786 = vpack.c.b16 %v5770, %v5770
      %v5787 = vpack.c.b16 %v5771, %v5771
      %v5788 = vpack.c.b16 %v5772, %v5772
      %v5789 = vpack.c.b16 %v5773, %v5773
      %v5790 = vpack.c.b16 %v5774, %v5774
      %v5791 = vpack.c.b16 %v5775, %v5775
      %v5792 = vpack.c.b16 %v5776, %v5776
      %v5793 = vpack.c.b16 %v5777, %v5777
      %v5794 = vpack.c.b16 %v5778, %v5778
      %s5811 = scalar_lea.vmem [#allocation4], 8
      %5812 = vst.msk [vmem:[%s5811] sm:$0xf] %vm3354, %v5779
      %5813 = vst.msk [vmem:[%s5811 + $0x4] sm:$0xf] %vm3354, %v5780
      %5814 = vst.msk [vmem:[%s5811 + $0x8] sm:$0xf] %vm3354, %v5781
      %5815 = vst.msk [vmem:[%s5811 + $0xc] sm:$0xf] %vm3354, %v5782
      %5816 = vst.msk [vmem:[%s5811 + $0x10] sm:$0xf] %vm3354, %v5783
      %5817 = vst.msk [vmem:[%s5811 + $0x14] sm:$0xf] %vm3354, %v5784
      %5818 = vst.msk [vmem:[%s5811 + $0x18] sm:$0xf] %vm3354, %v5785
      %5819 = vst.msk [vmem:[%s5811 + $0x1c] sm:$0xf] %vm3354, %v5786
      %5820 = vst.msk [vmem:[%s5811 + $0x20] sm:$0xf] %vm3354, %v5787
      %5821 = vst.msk [vmem:[%s5811 + $0x24] sm:$0xf] %vm3354, %v5788
      %5822 = vst.msk [vmem:[%s5811 + $0x28] sm:$0xf] %vm3354, %v5789
      %5823 = vst.msk [vmem:[%s5811 + $0x2c] sm:$0xf] %vm3354, %v5790
      %5824 = vst.msk [vmem:[%s5811 + $0x30] sm:$0xf] %vm3354, %v5791
      %5825 = vst.msk [vmem:[%s5811 + $0x34] sm:$0xf] %vm3354, %v5792
      %5826 = vst.msk [vmem:[%s5811 + $0x38] sm:$0xf] %vm3354, %v5793
      %5827 = vst.msk [vmem:[%s5811 + $0x3c] sm:$0xf] %vm3354, %v5794
      %5828 = vst.msk [vmem:[#allocation4] sm:$0xf] %vm3354, 0
      %5829 = vst.msk [vmem:[#allocation4 + $0x4] sm:$0xf] %vm3354, 0
      %s5830 = scalar_lea.vmem [#allocation4], 72
      %5831 = vst.msk [vmem:[%s5830] sm:$0xf] %vm3354, 0
      %5832 = vst.msk [vmem:[%s5830 + $0x4] sm:$0xf] %vm3354, 0
      %v5833 = vld [vmem:[#allocation4] sm:$0xf]
      %v5834 = vld [vmem:[#allocation4 + $0x4] sm:$0xf]
      %v5835 = vld [vmem:[#allocation4 + $0x8] sm:$0xf]
      %v5836 = vld [vmem:[#allocation4 + $0xc] sm:$0xf]
      %v5837 = vld [vmem:[#allocation4 + $0x10] sm:$0xf]
      %v5838 = vld [vmem:[#allocation4 + $0x14] sm:$0xf]
      %v5839 = vld [vmem:[#allocation4 + $0x18] sm:$0xf]
      %v5840 = vld [vmem:[#allocation4 + $0x1c] sm:$0xf]
      %v5841 = vld [vmem:[#allocation4 + $0x20] sm:$0xf]
      %v5842 = vld [vmem:[#allocation4 + $0x24] sm:$0xf]
      %v5843 = vld [vmem:[#allocation4 + $0x28] sm:$0xf]
      %v5844 = vld [vmem:[#allocation4 + $0x2c] sm:$0xf]
      %v5845 = vld [vmem:[#allocation4 + $0x30] sm:$0xf]
      %v5846 = vld [vmem:[#allocation4 + $0x34] sm:$0xf]
      %v5847 = vld [vmem:[#allocation4 + $0x38] sm:$0xf]
      %v5848 = vld [vmem:[#allocation4 + $0x3c] sm:$0xf]
      %v5849 = vld [vmem:[#allocation4 + $0x40] sm:$0xf]
      %v5850 = vld [vmem:[#allocation4 + $0x44] sm:$0xf]
      %v5851 = vld [vmem:[#allocation4 + $0x48] sm:$0xf]
      %v5852 = vld [vmem:[#allocation4 + $0x4c] sm:$0xf]
      %v5853 = vld [vmem:[%s7] sm:$0xf]
      %v5854 = vld [vmem:[%s7 + $0x4] sm:$0xf]
      %v5855 = vld [vmem:[%s7 + $0x8] sm:$0xf]
      %v5856 = vld [vmem:[%s7 + $0xc] sm:$0xf]
      %v5877 = vunpack.c.l.b16 %v5833
      %v5878 = vunpack.c.l.b16 %v5834
      %v5879 = vunpack.c.l.b16 %v5835
      %v5880 = vunpack.c.l.b16 %v5836
      %v5881 = vunpack.c.l.b16 %v5837
      %v5882 = vunpack.c.l.b16 %v5838
      %v5883 = vunpack.c.l.b16 %v5839
      %v5884 = vunpack.c.l.b16 %v5840
      %v5885 = vunpack.c.l.b16 %v5841
      %v5886 = vunpack.c.l.b16 %v5842
      %v5887 = vunpack.c.l.b16 %v5843
      %v5888 = vunpack.c.l.b16 %v5844
      %v5889 = vunpack.c.l.b16 %v5845
      %v5890 = vunpack.c.l.b16 %v5846
      %v5891 = vunpack.c.l.b16 %v5847
      %v5892 = vunpack.c.l.b16 %v5848
      %v5893 = vunpack.c.l.b16 %v5849
      %v5894 = vunpack.c.l.b16 %v5850
      %v5895 = vunpack.c.l.b16 %v5851
      %v5896 = vunpack.c.l.b16 %v5852
      %v5897 = vpack.c.b16 %v5878, %v5877
      %v5898 = vpack.c.b16 %v5880, %v5879
      %v5899 = vpack.c.b16 %v5882, %v5881
      %v5900 = vpack.c.b16 %v5884, %v5883
      %v5901 = vpack.c.b16 %v5886, %v5885
      %v5902 = vpack.c.b16 %v5888, %v5887
      %v5903 = vpack.c.b16 %v5890, %v5889
      %v5904 = vpack.c.b16 %v5892, %v5891
      %v5905 = vpack.c.b16 %v5894, %v5893
      %v5906 = vpack.c.b16 %v5896, %v5895
      %v5911 = vunpack.c.l.b16 %v5853
      %v5912 = vunpack.c.l.b16 %v5854
      %v5913 = vunpack.c.l.b16 %v5855
      %v5914 = vunpack.c.l.b16 %v5856
      %v5915 = vpack.c.b16 %v5912, %v5911
      %v5916 = vpack.c.b16 %v5914, %v5913
      %v5920 = vsel %vm3678, %v5897, 0
      %v5923 = vsel %vm3678, %v5898, 0
      %v5926 = vsel %vm3678, %v5899, 0
      %v5929 = vsel %vm3678, %v5900, 0
      %v5932 = vsel %vm3678, %v5901, 0
      %v5935 = vsel %vm3678, %v5902, 0
      %v5938 = vsel %vm3678, %v5903, 0
      %v5941 = vsel %vm3678, %v5904, 0
      %v5944 = vsel %vm3678, %v5905, 0
      %v5947 = vsel %vm3678, %v5906, 0
      %5949 = vmatprep.subr.bf16.mxu0 0
      %5950 = vmatpush1.bf16.msra.mxu0 0
      %5951 = vmatprep.subr.bf16.mxu0 0
      %5952 = vmatpush1.bf16.msra.mxu0 0
      %5953 = vmatprep.subr.bf16.mxu0 0
      %5954 = vmatpush1.bf16.msra.mxu0 0
      %5955 = vmatprep.subr.bf16.mxu0 0
      %5956 = vmatpush1.bf16.msra.mxu0 0
      %5957 = vmatprep.subr.bf16.mxu0 0
      %5958 = vmatpush1.bf16.msra.mxu0 0
      %5959 = vmatprep.subr.bf16.mxu0 0
      %5960 = vmatpush1.bf16.msra.mxu0 0
      %5961 = vmatprep.subr.bf16.mxu0 0
      %5962 = vmatpush1.bf16.msra.mxu0 %v5916
      %5963 = vmatprep.subr.bf16.mxu0 0
      %5964 = vmatpush1.bf16.msra.mxu0 %v5915
      %5965 = vmatprep.subr.bf16.mxu0 0
      %5966 = vmatpush2.bf16.msra.mxu0 0
      %5967 = vmatprep.subr.bf16.mxu0 0
      %5968 = vmatpush2.bf16.msra.mxu0 0
      %5969 = vmatprep.subr.bf16.mxu0 0
      %5970 = vmatpush2.bf16.msra.mxu0 0
      %5971 = vmatprep.subr.bf16.mxu0 0
      %5972 = vmatpush2.bf16.msra.mxu0 0
      %5973 = vmatprep.subr.bf16.mxu0 0
      %5974 = vmatpush2.bf16.msra.mxu0 0
      %5975 = vmatprep.subr.bf16.mxu0 0
      %5976 = vmatpush2.bf16.msra.mxu0 0
      %5977 = vmatprep.subr.bf16.mxu0 0
      %5978 = vmatpush2.bf16.msra.mxu0 0
      %5979 = vmatprep.subr.bf16.mxu0 0
      %5980 = vmatpush2.bf16.msra.mxu0 0
      %5981 = vmatprep.mubr.bf16.mxu0 0
      %5982 = vmatmul.mubr.bf16.gmra.mxu0 %v5920
      %v5983 = vpop.f32.mrf.mxu0
      %v5984 = vadd.f32 0.0, %v5983
      %v5985 = vpop.f32.mrf.mxu0
      %v5986 = vpop.f32.mrf.mxu0
      %v5987 = vadd.f32 0.0, %v5986
      %v5988 = vpop.f32.mrf.mxu0
      %5989 = vmatprep.mubr.bf16.mxu0 0
      %5990 = vmatmul.mubr.bf16.gmra.mxu0 %v5923
      %v5991 = vpop.f32.mrf.mxu0
      %v5992 = vadd.f32 0.0, %v5991
      %v5993 = vpop.f32.mrf.mxu0
      %v5994 = vpop.f32.mrf.mxu0
      %v5995 = vadd.f32 0.0, %v5994
      %v5996 = vpop.f32.mrf.mxu0
      %5997 = vmatprep.mubr.bf16.mxu0 0
      %5998 = vmatmul.mubr.bf16.gmra.mxu0 %v5926
      %v5999 = vpop.f32.mrf.mxu0
      %v6000 = vadd.f32 0.0, %v5999
      %v6001 = vpop.f32.mrf.mxu0
      %v6002 = vpop.f32.mrf.mxu0
      %v6003 = vadd.f32 0.0, %v6002
      %v6004 = vpop.f32.mrf.mxu0
      %6005 = vmatprep.mubr.bf16.mxu0 0
      %6006 = vmatmul.mubr.bf16.gmra.mxu0 %v5929
      %v6007 = vpop.f32.mrf.mxu0
      %v6008 = vadd.f32 0.0, %v6007
      %v6009 = vpop.f32.mrf.mxu0
      %v6010 = vpop.f32.mrf.mxu0
      %v6011 = vadd.f32 0.0, %v6010
      %v6012 = vpop.f32.mrf.mxu0
      %6013 = vmatprep.mubr.bf16.mxu0 0
      %6014 = vmatmul.mubr.bf16.gmra.mxu0 %v5932
      %v6015 = vpop.f32.mrf.mxu0
      %v6016 = vadd.f32 0.0, %v6015
      %v6017 = vpop.f32.mrf.mxu0
      %v6018 = vpop.f32.mrf.mxu0
      %v6019 = vadd.f32 0.0, %v6018
      %v6020 = vpop.f32.mrf.mxu0
      %6021 = vmatprep.mubr.bf16.mxu0 0
      %6022 = vmatmul.mubr.bf16.gmra.mxu0 %v5935
      %v6023 = vpop.f32.mrf.mxu0
      %v6024 = vadd.f32 0.0, %v6023
      %v6025 = vpop.f32.mrf.mxu0
      %v6026 = vpop.f32.mrf.mxu0
      %v6027 = vadd.f32 0.0, %v6026
      %v6028 = vpop.f32.mrf.mxu0
      %6029 = vmatprep.mubr.bf16.mxu0 0
      %6030 = vmatmul.mubr.bf16.gmra.mxu0 %v5938
      %v6031 = vpop.f32.mrf.mxu0
      %v6032 = vadd.f32 0.0, %v6031
      %v6033 = vpop.f32.mrf.mxu0
      %v6034 = vpop.f32.mrf.mxu0
      %v6035 = vadd.f32 0.0, %v6034
      %v6036 = vpop.f32.mrf.mxu0
      %6037 = vmatprep.mubr.bf16.mxu0 0
      %6038 = vmatmul.mubr.bf16.gmra.mxu0 %v5941
      %v6039 = vpop.f32.mrf.mxu0
      %v6040 = vadd.f32 0.0, %v6039
      %v6041 = vpop.f32.mrf.mxu0
      %v6042 = vpop.f32.mrf.mxu0
      %v6043 = vadd.f32 0.0, %v6042
      %v6044 = vpop.f32.mrf.mxu0
      %6045 = vmatprep.mubr.bf16.mxu0 0
      %6046 = vmatmul.mubr.bf16.gmra.mxu0 %v5944
      %v6047 = vpop.f32.mrf.mxu0
      %v6048 = vadd.f32 0.0, %v6047
      %v6049 = vpop.f32.mrf.mxu0
      %v6050 = vpop.f32.mrf.mxu0
      %v6051 = vadd.f32 0.0, %v6050
      %v6052 = vpop.f32.mrf.mxu0
      %6053 = vmatprep.mubr.bf16.mxu0 0
      %6054 = vmatmul.mubr.bf16.gmra.mxu0 %v5947
      %v6055 = vpop.f32.mrf.mxu0
      %v6056 = vadd.f32 0.0, %v6055
      %v6057 = vpop.f32.mrf.mxu0
      %v6058 = vpop.f32.mrf.mxu0
      %v6059 = vadd.f32 0.0, %v6058
      %v6060 = vpop.f32.mrf.mxu0
      %6061 = vdwg.mxu0
      %6078 = vrot.lane.b32.xlu0 %v5992, 96
      %v6079 = vpop.permute.xlu0 %6078
      %6080 = vrot.lane.b32.xlu0 %v5995, 96
      %v6081 = vpop.permute.xlu0 %6080
      %6082 = vrot.lane.b32.xlu0 %v6000, 96
      %v6083 = vpop.permute.xlu0 %6082
      %6084 = vrot.lane.b32.xlu0 %v6003, 96
      %v6085 = vpop.permute.xlu0 %6084
      %6086 = vrot.lane.b32.xlu0 %v6008, 96
      %v6087 = vpop.permute.xlu0 %6086
      %6088 = vrot.lane.b32.xlu0 %v6011, 96
      %v6089 = vpop.permute.xlu0 %6088
      %6090 = vrot.lane.b32.xlu0 %v6016, 96
      %v6091 = vpop.permute.xlu0 %6090
      %6092 = vrot.lane.b32.xlu0 %v6019, 96
      %v6093 = vpop.permute.xlu0 %6092
      %6094 = vrot.lane.b32.xlu0 %v6024, 96
      %v6095 = vpop.permute.xlu0 %6094
      %6096 = vrot.lane.b32.xlu0 %v6027, 96
      %v6097 = vpop.permute.xlu0 %6096
      %6098 = vrot.lane.b32.xlu0 %v6032, 96
      %v6099 = vpop.permute.xlu0 %6098
      %6100 = vrot.lane.b32.xlu0 %v6035, 96
      %v6101 = vpop.permute.xlu0 %6100
      %6102 = vrot.lane.b32.xlu0 %v6040, 96
      %v6103 = vpop.permute.xlu0 %6102
      %6104 = vrot.lane.b32.xlu0 %v6043, 96
      %v6105 = vpop.permute.xlu0 %6104
      %6106 = vrot.lane.b32.xlu0 %v6048, 96
      %v6107 = vpop.permute.xlu0 %6106
      %6108 = vrot.lane.b32.xlu0 %v6051, 96
      %v6109 = vpop.permute.xlu0 %6108
      %v6126 = vadd.f32 %v5984, %v6079
      %v6127 = vadd.f32 %v5987, %v6081
      %v6128 = vadd.f32 %v5992, %v6083
      %v6129 = vadd.f32 %v5995, %v6085
      %v6130 = vadd.f32 %v6000, %v6087
      %v6131 = vadd.f32 %v6003, %v6089
      %v6132 = vadd.f32 %v6008, %v6091
      %v6133 = vadd.f32 %v6011, %v6093
      %v6134 = vadd.f32 %v6016, %v6095
      %v6135 = vadd.f32 %v6019, %v6097
      %v6136 = vadd.f32 %v6024, %v6099
      %v6137 = vadd.f32 %v6027, %v6101
      %v6138 = vadd.f32 %v6032, %v6103
      %v6139 = vadd.f32 %v6035, %v6105
      %v6140 = vadd.f32 %v6040, %v6107
      %v6141 = vadd.f32 %v6043, %v6109
      %6144 = vrot.lane.b32.xlu0 %v6000, 64
      %v6145 = vpop.permute.xlu0 %6144
      %6146 = vrot.lane.b32.xlu0 %v6003, 64
      %v6147 = vpop.permute.xlu0 %6146
      %6148 = vrot.lane.b32.xlu0 %v6008, 64
      %v6149 = vpop.permute.xlu0 %6148
      %6150 = vrot.lane.b32.xlu0 %v6011, 64
      %v6151 = vpop.permute.xlu0 %6150
      %6152 = vrot.lane.b32.xlu0 %v6016, 64
      %v6153 = vpop.permute.xlu0 %6152
      %6154 = vrot.lane.b32.xlu0 %v6019, 64
      %v6155 = vpop.permute.xlu0 %6154
      %6156 = vrot.lane.b32.xlu0 %v6024, 64
      %v6157 = vpop.permute.xlu0 %6156
      %6158 = vrot.lane.b32.xlu0 %v6027, 64
      %v6159 = vpop.permute.xlu0 %6158
      %6160 = vrot.lane.b32.xlu0 %v6032, 64
      %v6161 = vpop.permute.xlu0 %6160
      %6162 = vrot.lane.b32.xlu0 %v6035, 64
      %v6163 = vpop.permute.xlu0 %6162
      %6164 = vrot.lane.b32.xlu0 %v6040, 64
      %v6165 = vpop.permute.xlu0 %6164
      %6166 = vrot.lane.b32.xlu0 %v6043, 64
      %v6167 = vpop.permute.xlu0 %6166
      %6168 = vrot.lane.b32.xlu0 %v6048, 64
      %v6169 = vpop.permute.xlu0 %6168
      %6170 = vrot.lane.b32.xlu0 %v6051, 64
      %v6171 = vpop.permute.xlu0 %6170
      %6172 = vrot.lane.b32.xlu0 %v6056, 64
      %v6173 = vpop.permute.xlu0 %6172
      %6174 = vrot.lane.b32.xlu0 %v6059, 64
      %v6175 = vpop.permute.xlu0 %6174
      %v6192 = vadd.f32 %v6126, %v6145
      %v6193 = vadd.f32 %v6127, %v6147
      %v6194 = vadd.f32 %v6128, %v6149
      %v6195 = vadd.f32 %v6129, %v6151
      %v6196 = vadd.f32 %v6130, %v6153
      %v6197 = vadd.f32 %v6131, %v6155
      %v6198 = vadd.f32 %v6132, %v6157
      %v6199 = vadd.f32 %v6133, %v6159
      %v6200 = vadd.f32 %v6134, %v6161
      %v6201 = vadd.f32 %v6135, %v6163
      %v6202 = vadd.f32 %v6136, %v6165
      %v6203 = vadd.f32 %v6137, %v6167
      %v6204 = vadd.f32 %v6138, %v6169
      %v6205 = vadd.f32 %v6139, %v6171
      %v6206 = vadd.f32 %v6140, %v6173
      %v6207 = vadd.f32 %v6141, %v6175
      %v6208 = vld [vmem:[%s8] sm:$0x1]
      %v6210 = vlaneseq
      %v6211 = vshrl.u32 %v6210, 7
      %v6212 = vsub.s32 0, %v6211
      %v6213 = vrot.slane %v6208, %v6212
      %v6215 = vadd.f32 %v6192, %v6213
      %v6216 = vadd.f32 %v6193, %v6213
      %v6217 = vadd.f32 %v6194, %v6213
      %v6218 = vadd.f32 %v6195, %v6213
      %v6219 = vadd.f32 %v6196, %v6213
      %v6220 = vadd.f32 %v6197, %v6213
      %v6221 = vadd.f32 %v6198, %v6213
      %v6222 = vadd.f32 %v6199, %v6213
      %v6223 = vadd.f32 %v6200, %v6213
      %v6224 = vadd.f32 %v6201, %v6213
      %v6225 = vadd.f32 %v6202, %v6213
      %v6226 = vadd.f32 %v6203, %v6213
      %v6227 = vadd.f32 %v6204, %v6213
      %v6228 = vadd.f32 %v6205, %v6213
      %v6229 = vadd.f32 %v6206, %v6213
      %v6230 = vadd.f32 %v6207, %v6213
      %v6231 = vmax.f32 %v6215, 0.0
      %v6232 = vmax.f32 %v6216, 0.0
      %v6233 = vmax.f32 %v6217, 0.0
      %v6234 = vmax.f32 %v6218, 0.0
      %v6235 = vmax.f32 %v6219, 0.0
      %v6236 = vmax.f32 %v6220, 0.0
      %v6237 = vmax.f32 %v6221, 0.0
      %v6238 = vmax.f32 %v6222, 0.0
      %v6239 = vmax.f32 %v6223, 0.0
      %v6240 = vmax.f32 %v6224, 0.0
      %v6241 = vmax.f32 %v6225, 0.0
      %v6242 = vmax.f32 %v6226, 0.0
      %v6243 = vmax.f32 %v6227, 0.0
      %v6244 = vmax.f32 %v6228, 0.0
      %v6245 = vmax.f32 %v6229, 0.0
      %v6246 = vmax.f32 %v6230, 0.0
      %v6247 = vmax.f32 %v6231, %v6233
      %v6248 = vmax.f32 %v6232, %v6234
      %v6249 = vmax.f32 %v6235, %v6237
      %v6250 = vmax.f32 %v6236, %v6238
      %v6251 = vmax.f32 %v6239, %v6241
      %v6252 = vmax.f32 %v6240, %v6242
      %v6253 = vmax.f32 %v6243, %v6245
      %v6254 = vmax.f32 %v6244, %v6246
      %6257 = vrot.lane.b32.xlu0 %v6249, 32
      %v6258 = vpop.permute.xlu0 %6257
      %6259 = vrot.lane.b32.xlu0 %v6250, 32
      %v6260 = vpop.permute.xlu0 %6259
      %6265 = vrot.lane.b32.xlu0 %v6251, 64
      %v6266 = vpop.permute.xlu0 %6265
      %6267 = vrot.lane.b32.xlu0 %v6252, 64
      %v6268 = vpop.permute.xlu0 %6267
      %6273 = vrot.lane.b32.xlu0 %v6253, 96
      %v6274 = vpop.permute.xlu0 %6273
      %6275 = vrot.lane.b32.xlu0 %v6254, 96
      %v6276 = vpop.permute.xlu0 %6275
      %v6279 = vsel %vm3678, %v6247, %v6258
      %v6280 = vsel %vm3678, %v6248, %v6260
      %vm6281 = vcmask 523264
      %v6282 = vsel %vm6281, %v6279, %v6266
      %v6283 = vsel %vm6281, %v6280, %v6268
      %vm6284 = vcmask 785408
      %v6285 = vsel %vm6284, %v6282, %v6274
      %v6286 = vsel %vm6284, %v6283, %v6276
      %v6287 = vpack.c.bf16 %v6286, %v6285
      %v6288 = vld [vmem:[%s9] sm:$0xf]
      %v6289 = vld [vmem:[%s9 + $0x4] sm:$0xf]
      %v6290 = vld [vmem:[%s9 + $0x8] sm:$0xf]
      %v6291 = vld [vmem:[%s9 + $0xc] sm:$0xf]
      %v6292 = vld [vmem:[%s9 + $0x10] sm:$0xf]
      %v6293 = vld [vmem:[%s9 + $0x14] sm:$0xf]
      %v6294 = vld [vmem:[%s9 + $0x18] sm:$0xf]
      %v6295 = vld [vmem:[%s9 + $0x1c] sm:$0xf]
      %v6296 = vld [vmem:[%s9 + $0x20] sm:$0xf]
      %v6297 = vld [vmem:[%s9 + $0x24] sm:$0xf]
      %v6298 = vld [vmem:[%s9 + $0x28] sm:$0xf]
      %v6299 = vld [vmem:[%s9 + $0x2c] sm:$0xf]
      %v6300 = vld [vmem:[%s9 + $0x30] sm:$0xf]
      %v6301 = vld [vmem:[%s9 + $0x34] sm:$0xf]
      %v6302 = vld [vmem:[%s9 + $0x38] sm:$0xf]
      %v6303 = vld [vmem:[%s9 + $0x3c] sm:$0xf]
      %v6304 = vld [vmem:[%s10] sm:$0x1]
      %v6306 = vlaneseq
      %v6307 = vshrl.u32 %v6306, 7
      %v6308 = vsub.s32 0, %v6307
      %v6309 = vrot.slane %v6304, %v6308
      %v6327 = vunpack.c.l.b16 %v6288
      %v6328 = vunpack.c.l.b16 %v6289
      %v6329 = vunpack.c.l.b16 %v6290
      %v6330 = vunpack.c.l.b16 %v6291
      %v6331 = vunpack.c.l.b16 %v6292
      %v6332 = vunpack.c.l.b16 %v6293
      %v6333 = vunpack.c.l.b16 %v6294
      %v6334 = vunpack.c.l.b16 %v6295
      %v6335 = vunpack.c.l.b16 %v6296
      %v6336 = vunpack.c.l.b16 %v6297
      %v6337 = vunpack.c.l.b16 %v6298
      %v6338 = vunpack.c.l.b16 %v6299
      %v6339 = vunpack.c.l.b16 %v6300
      %v6340 = vunpack.c.l.b16 %v6301
      %v6341 = vunpack.c.l.b16 %v6302
      %v6342 = vunpack.c.l.b16 %v6303
      %v6343 = vpack.c.b16 %v6328, %v6327
      %v6344 = vpack.c.b16 %v6330, %v6329
      %v6345 = vpack.c.b16 %v6332, %v6331
      %v6346 = vpack.c.b16 %v6334, %v6333
      %v6347 = vpack.c.b16 %v6336, %v6335
      %v6348 = vpack.c.b16 %v6338, %v6337
      %v6349 = vpack.c.b16 %v6340, %v6339
      %v6350 = vpack.c.b16 %v6342, %v6341
      %6359 = vmatprep.subr.bf16.mxu0 0
      %6360 = vmatpush1.bf16.msra.mxu0 %v6350
      %6361 = vmatprep.subr.bf16.mxu0 0
      %6362 = vmatpush1.bf16.msra.mxu0 %v6349
      %6363 = vmatprep.subr.bf16.mxu0 0
      %6364 = vmatpush1.bf16.msra.mxu0 %v6348
      %6365 = vmatprep.subr.bf16.mxu0 0
      %6366 = vmatpush1.bf16.msra.mxu0 %v6347
      %6367 = vmatprep.subr.bf16.mxu0 0
      %6368 = vmatpush1.bf16.msra.mxu0 %v6346
      %6369 = vmatprep.subr.bf16.mxu0 0
      %6370 = vmatpush1.bf16.msra.mxu0 %v6345
      %6371 = vmatprep.subr.bf16.mxu0 0
      %6372 = vmatpush1.bf16.msra.mxu0 %v6344
      %6373 = vmatprep.subr.bf16.mxu0 0
      %6374 = vmatpush1.bf16.msra.mxu0 %v6343
      %6375 = vmatprep.subr.bf16.mxu0 0
      %6376 = vmatpush2.bf16.msra.mxu0 0
      %6377 = vmatprep.subr.bf16.mxu0 0
      %6378 = vmatpush2.bf16.msra.mxu0 0
      %6379 = vmatprep.subr.bf16.mxu0 0
      %6380 = vmatpush2.bf16.msra.mxu0 0
      %6381 = vmatprep.subr.bf16.mxu0 0
      %6382 = vmatpush2.bf16.msra.mxu0 0
      %6383 = vmatprep.subr.bf16.mxu0 0
      %6384 = vmatpush2.bf16.msra.mxu0 0
      %6385 = vmatprep.subr.bf16.mxu0 0
      %6386 = vmatpush2.bf16.msra.mxu0 0
      %6387 = vmatprep.subr.bf16.mxu0 0
      %6388 = vmatpush2.bf16.msra.mxu0 0
      %6389 = vmatprep.subr.bf16.mxu0 0
      %6390 = vmatpush2.bf16.msra.mxu0 0
      %6391 = vmatprep.mubr.bf16.mxu0 0
      %6392 = vmatmul.mubr.bf16.gmra.mxu0 %v6287
      %v6393 = vpop.f32.mrf.mxu0
      %v6394 = vadd.f32 %v6309, %v6393
      %v6395 = vpop.f32.mrf.mxu0
      %v6396 = vpop.f32.mrf.mxu0
      %v6397 = vadd.f32 %v6309, %v6396
      %v6398 = vpop.f32.mrf.mxu0
      %6399 = vdwg.mxu0
      %vm6400 = vcmask 64512
      %6401 = vst.msk [vmem:[%s386] sm:$0xff] %vm6400, %v6394
      %6402 = vst.msk [vmem:[%s386 + $0x8] sm:$0xff] %vm6400, %v6397
      %s6403 = smul.u32 2, %s22
      %p6404 = scmp.lt.s32.totalorder %s6403, 3
      %s6405 = scalar_select %p6404, %s6403, 3
      %s6406 = smul.addr %s6405, 8
      %s6407 = scalar_lea.vmem %s11, %s6406
      // Predicated region
      $region65: #{tpu_custom_call.1} parent=63 // pred_check
        %p6408 = pneg %p276
      $region66: #{tpu_custom_call.1} parent=63 // pred_check_branch
        %6410 = sbr.rel (%p6408) target = $region68
      $region67: #{tpu_custom_call.1} parent=63 // pred_region
        %s6411 = smul.u32 2, %s22
      $region68: #{tpu_custom_call.1} parent=63 // pred_fallthru
        _
    $region64: #{tpu_custom_call.1} parent=5 // pred_fallthru
      _
    %p6412 = scmp.le.s32.totalorder 2, %s17
    // Predicated region
    $region69: #{tpu_custom_call.1} parent=5 // pred_check
      %p6413 = pneg %p6412
    $region70: #{tpu_custom_call.1} parent=5 // pred_check_branch
      %6415 = sbr.rel (%p6413) target = $region72
    $region71: #{tpu_custom_call.1} parent=5 // pred_region
      %s6416 = ssub.s32 %s17, 2
      // Predicated region
      $region73: #{tpu_custom_call.1} parent=71 // pred_check
        %p6417 = pneg %p282
      $region74: #{tpu_custom_call.1} parent=71 // pred_check_branch
        %6419 = sbr.rel (%p6417) target = $region76
      $region75: #{tpu_custom_call.1} parent=71 // pred_region
        %s6420 = smul.u32 2, %s23
        %p6421 = scmp.lt.s32.totalorder %s6420, 3
        %s6422 = scalar_select %p6421, %s6420, 3
        %s6423 = smul.addr %s6422, 8
        %s6424 = scalar_lea.vmem %s11, %s6423
      $region76: #{tpu_custom_call.1} parent=71 // pred_fallthru
        _
    $region72: #{tpu_custom_call.1} parent=5 // pred_fallthru
      _
  $region6: #{tpu_custom_call.1} parent=0 // loop_footer
    %s21 = sadd.s32 1, %s17
  $region7: #{tpu_custom_call.1} parent=0 // loop_footer_branch
    %16 = sbr.rel target = $region3
  $region8: #{tpu_custom_call.1} parent=0 // loop_exit
    _

</llo_original>
